<compile_context>
chip_gen: v7x
topology: tpu7x:2x2x1
jax: 0.10.0
libtpu: 0.0.40
codegen_flags: <defaults>
</compile_context>

<pallas_src>
import jax
import jax.numpy as jnp
from jax import lax
from jax.experimental import pallas as pl
from jax.experimental.pallas import tpu as pltpu


# ----------------------------- masks (glue, plain JAX) -----------------------------
def get_mask(in_features, out_features, in_flow_features, mask_type=None):
    if mask_type == 'input':
        in_degrees = jnp.arange(in_features) % in_flow_features
    else:
        in_degrees = jnp.arange(in_features) % (in_flow_features - 1)
    if mask_type == 'output':
        out_degrees = jnp.arange(out_features) % in_flow_features - 1
    else:
        out_degrees = jnp.arange(out_features) % (in_flow_features - 1)
    return (out_degrees[:, None] >= in_degrees[None, :]).astype(jnp.float32)


# ----------------------------- kernels -----------------------------
def made_forward_kernel(inp_ref, cond_ref, w1t_ref, b1_ref, wct_ref,
                        w2t_ref, b2_ref, w3mt_ref, b3m_ref, w3at_ref, b3a_ref,
                        x_out_ref, ld_out_ref, x_sc):
    B, D = inp_ref.shape

    # ---- hoisted loop invariants (computed once per batch tile) ----
    inp = inp_ref[...]
    w1t = w1t_ref[...]
    w2t = w2t_ref[...]
    b2 = b2_ref[...]
    w3mt = w3mt_ref[...]
    b3m = b3m_ref[...]
    w3at = w3at_ref[...]
    b3a = b3a_ref[...]
    # conditioning term + first-layer bias: invariant across the D-step loop
    cond_term = (jnp.dot(cond_ref[...], wct_ref[...],
                         preferred_element_type=jnp.float32) + b1_ref[...])
    col_iota = lax.broadcasted_iota(jnp.int32, (B, D), 1)

    def net(x):
        pre = jnp.dot(x, w1t, preferred_element_type=jnp.float32) + cond_term
        h = jnp.maximum(pre, 0.0)
        h2 = jnp.maximum(
            jnp.dot(h, w2t, preferred_element_type=jnp.float32) + b2, 0.0)
        m = jnp.dot(h2, w3mt, preferred_element_type=jnp.float32) + b3m
        a = jnp.dot(h2, w3at, preferred_element_type=jnp.float32) + b3a
        return m, a

    x_sc[...] = jnp.zeros_like(x_sc)

    def body(i, carry):
        m, a = net(x_sc[...])
        x_sc[...] = jnp.where(col_iota == i, inp * jnp.exp(a) + m, x_sc[...])
        return carry

    # D is a small static int: fully unroll for LLO scheduling visibility.
    lax.fori_loop(0, D - 1, body, 0, unroll=True)

    # Last column handled outside the loop: write straight to the output and
    # produce the log-det from this (final) `a` — no per-iteration `a` store.
    m, a = net(x_sc[...])
    x_out_ref[...] = jnp.where(col_iota == (D - 1), inp * jnp.exp(a) + m, x_sc[...])
    ld_out_ref[...] = jnp.sum(a, axis=-1, keepdims=True)


def made_inverse_kernel(xc_ref, w1ct_ref, b1_ref, w2t_ref, b2_ref,
                        w3mt_ref, b3m_ref, w3at_ref, b3a_ref,
                        u_out_ref, ld_out_ref):
    D = u_out_ref.shape[1]
    xc = xc_ref[...]                       # [x | cond] fused in the wrapper
    pre = jnp.dot(xc, w1ct_ref[...], preferred_element_type=jnp.float32) + b1_ref[...]
    h = jnp.maximum(pre, 0.0)
    h2 = jnp.maximum(
        jnp.dot(h, w2t_ref[...], preferred_element_type=jnp.float32) + b2_ref[...], 0.0)
    m = jnp.dot(h2, w3mt_ref[...], preferred_element_type=jnp.float32) + b3m_ref[...]
    a = jnp.dot(h2, w3at_ref[...], preferred_element_type=jnp.float32) + b3a_ref[...]
    x = xc[:, :D]
    u_out_ref[...] = (x - m) * jnp.exp(-a)
    ld_out_ref[...] = -jnp.sum(a, axis=-1, keepdims=True)


# ----------------------------- wrapper -----------------------------
def _pick_tile_b(B, max_tile=128):
    if B <= max_tile:
        return B
    t = (max_tile // 8) * 8
    while t >= 8:
        if B % t == 0:
            return t
        t -= 8
    return B


def conditioned_made(params, inp, cond, mode='forward', tile_b=None):
    B, D = inp.shape
    C = cond.shape[1]

    if tile_b is None:
        tile_b = _pick_tile_b(B)
    if B % tile_b != 0 or (tile_b != B and tile_b % 8 != 0):
        tile_b = B
    grid = (B // tile_b,)

    def act_spec(ncols):
        return pl.BlockSpec((tile_b, ncols), lambda b: (b, 0))

    def resident(arr):
        # Same block for every grid step -> stays VMEM-resident (no re-DMA).
        return pl.BlockSpec(arr.shape, lambda b: (0, 0))

    out_shape = (jax.ShapeDtypeStruct((B, D), jnp.float32),
                 jax.ShapeDtypeStruct((B, 1), jnp.float32))
    out_specs = (act_spec(D), act_spec(1))

    if mode == 'forward':
        args = (inp, cond, params['w1t'], params['b1'], params['wct'],
                params['w2t'], params['b2'],
                params['w3mt'], params['b3m'], params['w3at'], params['b3a'])
        in_specs = [act_spec(D), act_spec(C)] + [resident(a) for a in args[2:]]
        kernel = made_forward_kernel
        scratch = [pltpu.VMEM((tile_b, D), jnp.float32)]   # autoregressive state
    else:
        xc = jnp.concatenate([inp, cond], axis=1)                       # [x | cond]
        w1ct = jnp.concatenate([params['w1t'], params['wct']], axis=0)  # fused joiner
        args = (xc, w1ct, params['b1'], params['w2t'], params['b2'],
                params['w3mt'], params['b3m'], params['w3at'], params['b3a'])
        in_specs = [act_spec(D + C)] + [resident(a) for a in args[1:]]
        kernel = made_inverse_kernel
        scratch = []

    y, ld = pl.pallas_call(
        kernel,
        out_shape=out_shape,
        grid_spec=pltpu.PrefetchScalarGridSpec(
            num_scalar_prefetch=0,
            grid=grid,
            in_specs=in_specs,
            out_specs=out_specs,
            scratch_shapes=scratch),
        compiler_params=pltpu.CompilerParams(
            dimension_semantics=("parallel",)),
    )(*args)
    return y, ld[:, 0]


# ----------------------------- deterministic parameter init -----------------------------
def init_params(key, num_inputs, num_hidden, num_cond_inputs):
    D, H, C = num_inputs, num_hidden, num_cond_inputs
    ks = jax.random.split(key, 7)

    def lin(k, fan_in, shape):
        bound = 1.0 / jnp.sqrt(jnp.float32(fan_in))
        return jax.random.uniform(k, shape, jnp.float32, -bound, bound)

    input_mask = get_mask(D, H, D, mask_type='input')        # (H, D)
    hidden_mask = get_mask(H, H, D)                          # (H, H)
    output_mask = get_mask(H, 2 * D, D, mask_type='output')  # (2D, H)

    w1 = lin(ks[0], D, (H, D)) * input_mask       # joiner.linear (bias=True)
    b1 = lin(ks[1], D, (H,))
    wc = lin(ks[2], C, (H, C))                    # joiner.cond_linear (bias=False)
    w2 = lin(ks[3], H, (H, H)) * hidden_mask      # trunk[1].linear
    b2 = lin(ks[4], H, (H,))
    w3 = lin(ks[5], H, (2 * D, H)) * output_mask  # trunk[3].linear
    b3 = lin(ks[6], H, (2 * D,))

    # Split the output layer into m / a halves so the kernel never has to slice
    # out[:, :D] / out[:, D:] inside a vreg.
    w3m, w3a = w3[:D], w3[D:]
    b3m, b3a = b3[:D], b3[D:]

    return dict(w1t=w1.T, b1=b1[None, :], wct=wc.T,
                w2t=w2.T, b2=b2[None, :],
                w3mt=w3m.T, b3m=b3m[None, :],
                w3at=w3a.T, b3a=b3a[None, :])


# ----------------------------- pure-JAX reference (for checking) -----------------------------
def _ref_net(p, x, cond):
    h = jnp.maximum(x @ p['w1t'] + p['b1'] + cond @ p['wct'], 0.0)
    h2 = jnp.maximum(h @ p['w2t'] + p['b2'], 0.0)
    m = h2 @ p['w3mt'] + p['b3m']
    a = h2 @ p['w3at'] + p['b3a']
    return m, a


def _ref_forward(p, inp, cond):
    x = jnp.zeros_like(inp)
    a = None
    for i in range(inp.shape[1]):
        m, a = _ref_net(p, x, cond)
        x = x.at[:, i].set(inp[:, i] * jnp.exp(a[:, i]) + m[:, i])
    return x, a.sum(-1)


def _ref_inverse(p, inp, cond):
    m, a = _ref_net(p, inp, cond)
    return (inp - m) * jnp.exp(-a), -a.sum(-1)


# ----------------------------- main -----------------------------
if __name__ == "__main__":
    # batch, num_inputs, num_hidden, num_cond_inputs
    B, D, H, C = 64, 8, 32, 4
    TILE_B = 32   # -> grid of 2 batch tiles, weights resident across both

    key = jax.random.PRNGKey(0)
    kp, kx, kc = jax.random.split(key, 3)
    params = init_params(kp, D, H, C)
    inp = jax.random.normal(kx, (B, D), jnp.float32)
    cond = jax.random.normal(kc, (B, C), jnp.float32)

    # forward (autoregressive sampling) mode
    x_fwd, ld_fwd = conditioned_made(params, inp, cond, mode='forward', tile_b=TILE_B)
    jax.block_until_ready((x_fwd, ld_fwd))
    x_ref, ld_ref = _ref_forward(params, inp, cond)
    assert jnp.allclose(x_fwd, x_ref, atol=1e-4, rtol=1e-4), "forward x mismatch"
    assert jnp.allclose(ld_fwd, ld_ref, atol=1e-4, rtol=1e-4), "forward logdet mismatch"

    # inverse (density-evaluation) mode
    u_inv, ld_inv = conditioned_made(params, inp, cond, mode='inverse', tile_b=TILE_B)
    jax.block_until_ready((u_inv, ld_inv))
    u_ref, ldi_ref = _ref_inverse(params, inp, cond)
    assert jnp.allclose(u_inv, u_ref, atol=1e-4, rtol=1e-4), "inverse u mismatch"
    assert jnp.allclose(ld_inv, ldi_ref, atol=1e-4, rtol=1e-4), "inverse logdet mismatch"

    print("KERNEL_OK")
</pallas_src>

<mosaic_0001>
module attributes {stable_mosaic.version = 11 : i64} {
  func.func @made_forward_kernel(%arg0: i32, %arg1: memref<32x8xf32, #tpu.memory_space<vmem>>, %arg2: memref<32x4xf32, #tpu.memory_space<vmem>>, %arg3: memref<8x32xf32, #tpu.memory_space<vmem>>, %arg4: memref<1x32xf32, #tpu.memory_space<vmem>>, %arg5: memref<4x32xf32, #tpu.memory_space<vmem>>, %arg6: memref<32x32xf32, #tpu.memory_space<vmem>>, %arg7: memref<1x32xf32, #tpu.memory_space<vmem>>, %arg8: memref<32x8xf32, #tpu.memory_space<vmem>>, %arg9: memref<1x8xf32, #tpu.memory_space<vmem>>, %arg10: memref<32x8xf32, #tpu.memory_space<vmem>>, %arg11: memref<1x8xf32, #tpu.memory_space<vmem>>, %arg12: memref<32x8xf32, #tpu.memory_space<vmem>>, %arg13: memref<32x1xf32, #tpu.memory_space<vmem>>, %arg14: memref<32x8xf32, #tpu.memory_space<vmem>>) attributes {dimension_semantics = [#tpu.dimension_semantics<parallel>], iteration_bounds = array<i64: 2>, scalar_prefetch = 0 : i64, scratch_operands = 1 : i64, tpu.core_type = #tpu.core_type<tc>, window_params = [{transform_indices = @transform_0, window_bounds = array<i64: 32, 8>}, {transform_indices = @transform_1, window_bounds = array<i64: 32, 4>}, {pipeline_mode = #tpu.pipeline_mode<synchronous>, transform_indices = @transform_2, window_bounds = array<i64: 8, 32>}, {pipeline_mode = #tpu.pipeline_mode<synchronous>, transform_indices = @transform_3, window_bounds = array<i64: 1, 32>}, {pipeline_mode = #tpu.pipeline_mode<synchronous>, transform_indices = @transform_4, window_bounds = array<i64: 4, 32>}, {pipeline_mode = #tpu.pipeline_mode<synchronous>, transform_indices = @transform_5, window_bounds = array<i64: 32, 32>}, {pipeline_mode = #tpu.pipeline_mode<synchronous>, transform_indices = @transform_6, window_bounds = array<i64: 1, 32>}, {pipeline_mode = #tpu.pipeline_mode<synchronous>, transform_indices = @transform_7, window_bounds = array<i64: 32, 8>}, {pipeline_mode = #tpu.pipeline_mode<synchronous>, transform_indices = @transform_8, window_bounds = array<i64: 1, 8>}, {pipeline_mode = #tpu.pipeline_mode<synchronous>, transform_indices = @transform_9, window_bounds = array<i64: 32, 8>}, {pipeline_mode = #tpu.pipeline_mode<synchronous>, transform_indices = @transform_10, window_bounds = array<i64: 1, 8>}, {transform_indices = @transform_11, window_bounds = array<i64: 32, 8>}, {transform_indices = @transform_12, window_bounds = array<i64: 32, 1>}]} {
    %c0 = arith.constant 0 : index
    %c0_0 = arith.constant 0 : index
    %0 = vector.load %arg1[%c0, %c0_0] : memref<32x8xf32, #tpu.memory_space<vmem>>, vector<32x8xf32>
    %c0_1 = arith.constant 0 : index
    %c0_2 = arith.constant 0 : index
    %1 = vector.load %arg3[%c0_1, %c0_2] : memref<8x32xf32, #tpu.memory_space<vmem>>, vector<8x32xf32>
    %c0_3 = arith.constant 0 : index
    %c0_4 = arith.constant 0 : index
    %2 = vector.load %arg6[%c0_3, %c0_4] : memref<32x32xf32, #tpu.memory_space<vmem>>, vector<32x32xf32>
    %c0_5 = arith.constant 0 : index
    %c0_6 = arith.constant 0 : index
    %3 = vector.load %arg7[%c0_5, %c0_6] : memref<1x32xf32, #tpu.memory_space<vmem>>, vector<1x32xf32>
    %c0_7 = arith.constant 0 : index
    %c0_8 = arith.constant 0 : index
    %4 = vector.load %arg8[%c0_7, %c0_8] : memref<32x8xf32, #tpu.memory_space<vmem>>, vector<32x8xf32>
    %c0_9 = arith.constant 0 : index
    %c0_10 = arith.constant 0 : index
    %5 = vector.load %arg9[%c0_9, %c0_10] : memref<1x8xf32, #tpu.memory_space<vmem>>, vector<1x8xf32>
    %c0_11 = arith.constant 0 : index
    %c0_12 = arith.constant 0 : index
    %6 = vector.load %arg10[%c0_11, %c0_12] : memref<32x8xf32, #tpu.memory_space<vmem>>, vector<32x8xf32>
    %c0_13 = arith.constant 0 : index
    %c0_14 = arith.constant 0 : index
    %7 = vector.load %arg11[%c0_13, %c0_14] : memref<1x8xf32, #tpu.memory_space<vmem>>, vector<1x8xf32>
    %c0_15 = arith.constant 0 : index
    %c0_16 = arith.constant 0 : index
    %8 = vector.load %arg2[%c0_15, %c0_16] : memref<32x4xf32, #tpu.memory_space<vmem>>, vector<32x4xf32>
    %c0_17 = arith.constant 0 : index
    %c0_18 = arith.constant 0 : index
    %9 = vector.load %arg5[%c0_17, %c0_18] : memref<4x32xf32, #tpu.memory_space<vmem>>, vector<4x32xf32>
    %cst = arith.constant dense<0.000000e+00> : vector<32x32xf32>
    %10 = tpu.matmul %8, %9, %cst {dimension_numbers = #tpu.dot_dimension_numbers<[1], [0], [0], [1], [0, 0, 1, 1], [], []>} : vector<32x4xf32>, vector<4x32xf32>, vector<32x32xf32> -> vector<32x32xf32>
    %c0_19 = arith.constant 0 : index
    %c0_20 = arith.constant 0 : index
    %11 = vector.load %arg4[%c0_19, %c0_20] : memref<1x32xf32, #tpu.memory_space<vmem>>, vector<1x32xf32>
    %12 = vector.broadcast %11 : vector<1x32xf32> to vector<32x32xf32>
    %13 = arith.addf %10, %12 : vector<32x32xf32>
    %14 = tpu.iota {dimensions = array<i32: 1>} : vector<32x8xi32>
    %cst_21 = arith.constant 0.000000e+00 : f32
    %15 = vector.broadcast %cst_21 : f32 to vector<32x8xf32>
    %c0_22 = arith.constant 0 : index
    %c0_23 = arith.constant 0 : index
    %16 = vector.load %arg14[%c0_22, %c0_23] : memref<32x8xf32, #tpu.memory_space<vmem>>, vector<32x8xf32>
    tpu.vector_store %arg14[%c0_22, %c0_23], %15 {strides = array<i32>} : memref<32x8xf32, #tpu.memory_space<vmem>>, vector<32x8xf32>,
    %c0_i32 = arith.constant 0 : i32
    %c0_24 = arith.constant 0 : index
    %c0_25 = arith.constant 0 : index
    %17 = vector.load %arg14[%c0_24, %c0_25] : memref<32x8xf32, #tpu.memory_space<vmem>>, vector<32x8xf32>
    %cst_26 = arith.constant dense<0.000000e+00> : vector<32x32xf32>
    %18 = tpu.matmul %17, %1, %cst_26 {dimension_numbers = #tpu.dot_dimension_numbers<[1], [0], [0], [1], [0, 0, 1, 1], [], []>} : vector<32x8xf32>, vector<8x32xf32>, vector<32x32xf32> -> vector<32x32xf32>
    %19 = arith.addf %18, %13 : vector<32x32xf32>
    %cst_27 = arith.constant 0.000000e+00 : f32
    %20 = vector.broadcast %cst_27 : f32 to vector<32x32xf32>
    %21 = arith.maximumf %19, %20 : vector<32x32xf32>
    %cst_28 = arith.constant dense<0.000000e+00> : vector<32x32xf32>
    %22 = tpu.matmul %21, %2, %cst_28 {dimension_numbers = #tpu.dot_dimension_numbers<[1], [0], [0], [1], [0, 0, 1, 1], [], []>} : vector<32x32xf32>, vector<32x32xf32>, vector<32x32xf32> -> vector<32x32xf32>
    %23 = vector.broadcast %3 : vector<1x32xf32> to vector<32x32xf32>
    %24 = arith.addf %22, %23 : vector<32x32xf32>
    %cst_29 = arith.constant 0.000000e+00 : f32
    %25 = vector.broadcast %cst_29 : f32 to vector<32x32xf32>
    %26 = arith.maximumf %24, %25 : vector<32x32xf32>
    %cst_30 = arith.constant dense<0.000000e+00> : vector<32x8xf32>
    %27 = tpu.matmul %26, %4, %cst_30 {dimension_numbers = #tpu.dot_dimension_numbers<[1], [0], [0], [1], [0, 0, 1, 1], [], []>} : vector<32x32xf32>, vector<32x8xf32>, vector<32x8xf32> -> vector<32x8xf32>
    %28 = vector.broadcast %5 : vector<1x8xf32> to vector<32x8xf32>
    %29 = arith.addf %27, %28 : vector<32x8xf32>
    %cst_31 = arith.constant dense<0.000000e+00> : vector<32x8xf32>
    %30 = tpu.matmul %26, %6, %cst_31 {dimension_numbers = #tpu.dot_dimension_numbers<[1], [0], [0], [1], [0, 0, 1, 1], [], []>} : vector<32x32xf32>, vector<32x8xf32>, vector<32x8xf32> -> vector<32x8xf32>
    %31 = vector.broadcast %7 : vector<1x8xf32> to vector<32x8xf32>
    %32 = arith.addf %30, %31 : vector<32x8xf32>
    %33 = vector.broadcast %c0_i32 : i32 to vector<32x8xi32>
    %34 = arith.cmpi eq, %14, %33 : vector<32x8xi32>
    %35 = math.exp %32 : vector<32x8xf32>
    %36 = arith.mulf %0, %35 : vector<32x8xf32>
    %37 = arith.addf %36, %29 : vector<32x8xf32>
    %c0_32 = arith.constant 0 : index
    %c0_33 = arith.constant 0 : index
    %38 = vector.load %arg14[%c0_32, %c0_33] : memref<32x8xf32, #tpu.memory_space<vmem>>, vector<32x8xf32>
    %39 = arith.select %34, %37, %38 : vector<32x8xi1>, vector<32x8xf32>
    %c0_34 = arith.constant 0 : index
    %c0_35 = arith.constant 0 : index
    %40 = vector.load %arg14[%c0_34, %c0_35] : memref<32x8xf32, #tpu.memory_space<vmem>>, vector<32x8xf32>
    tpu.vector_store %arg14[%c0_34, %c0_35], %39 {strides = array<i32>} : memref<32x8xf32, #tpu.memory_space<vmem>>, vector<32x8xf32>,
    %c1_i32 = arith.constant 1 : i32
    %c0_36 = arith.constant 0 : index
    %c0_37 = arith.constant 0 : index
    %41 = vector.load %arg14[%c0_36, %c0_37] : memref<32x8xf32, #tpu.memory_space<vmem>>, vector<32x8xf32>
    %cst_38 = arith.constant dense<0.000000e+00> : vector<32x32xf32>
    %42 = tpu.matmul %41, %1, %cst_38 {dimension_numbers = #tpu.dot_dimension_numbers<[1], [0], [0], [1], [0, 0, 1, 1], [], []>} : vector<32x8xf32>, vector<8x32xf32>, vector<32x32xf32> -> vector<32x32xf32>
    %43 = arith.addf %42, %13 : vector<32x32xf32>
    %cst_39 = arith.constant 0.000000e+00 : f32
    %44 = vector.broadcast %cst_39 : f32 to vector<32x32xf32>
    %45 = arith.maximumf %43, %44 : vector<32x32xf32>
    %cst_40 = arith.constant dense<0.000000e+00> : vector<32x32xf32>
    %46 = tpu.matmul %45, %2, %cst_40 {dimension_numbers = #tpu.dot_dimension_numbers<[1], [0], [0], [1], [0, 0, 1, 1], [], []>} : vector<32x32xf32>, vector<32x32xf32>, vector<32x32xf32> -> vector<32x32xf32>
    %47 = vector.broadcast %3 : vector<1x32xf32> to vector<32x32xf32>
    %48 = arith.addf %46, %47 : vector<32x32xf32>
    %cst_41 = arith.constant 0.000000e+00 : f32
    %49 = vector.broadcast %cst_41 : f32 to vector<32x32xf32>
    %50 = arith.maximumf %48, %49 : vector<32x32xf32>
    %cst_42 = arith.constant dense<0.000000e+00> : vector<32x8xf32>
    %51 = tpu.matmul %50, %4, %cst_42 {dimension_numbers = #tpu.dot_dimension_numbers<[1], [0], [0], [1], [0, 0, 1, 1], [], []>} : vector<32x32xf32>, vector<32x8xf32>, vector<32x8xf32> -> vector<32x8xf32>
    %52 = vector.broadcast %5 : vector<1x8xf32> to vector<32x8xf32>
    %53 = arith.addf %51, %52 : vector<32x8xf32>
    %cst_43 = arith.constant dense<0.000000e+00> : vector<32x8xf32>
    %54 = tpu.matmul %50, %6, %cst_43 {dimension_numbers = #tpu.dot_dimension_numbers<[1], [0], [0], [1], [0, 0, 1, 1], [], []>} : vector<32x32xf32>, vector<32x8xf32>, vector<32x8xf32> -> vector<32x8xf32>
    %55 = vector.broadcast %7 : vector<1x8xf32> to vector<32x8xf32>
    %56 = arith.addf %54, %55 : vector<32x8xf32>
    %57 = vector.broadcast %c1_i32 : i32 to vector<32x8xi32>
    %58 = arith.cmpi eq, %14, %57 : vector<32x8xi32>
    %59 = math.exp %56 : vector<32x8xf32>
    %60 = arith.mulf %0, %59 : vector<32x8xf32>
    %61 = arith.addf %60, %53 : vector<32x8xf32>
    %c0_44 = arith.constant 0 : index
    %c0_45 = arith.constant 0 : index
    %62 = vector.load %arg14[%c0_44, %c0_45] : memref<32x8xf32, #tpu.memory_space<vmem>>, vector<32x8xf32>
    %63 = arith.select %58, %61, %62 : vector<32x8xi1>, vector<32x8xf32>
    %c0_46 = arith.constant 0 : index
    %c0_47 = arith.constant 0 : index
    %64 = vector.load %arg14[%c0_46, %c0_47] : memref<32x8xf32, #tpu.memory_space<vmem>>, vector<32x8xf32>
    tpu.vector_store %arg14[%c0_46, %c0_47], %63 {strides = array<i32>} : memref<32x8xf32, #tpu.memory_space<vmem>>, vector<32x8xf32>,
    %c2_i32 = arith.constant 2 : i32
    %c0_48 = arith.constant 0 : index
    %c0_49 = arith.constant 0 : index
    %65 = vector.load %arg14[%c0_48, %c0_49] : memref<32x8xf32, #tpu.memory_space<vmem>>, vector<32x8xf32>
    %cst_50 = arith.constant dense<0.000000e+00> : vector<32x32xf32>
    %66 = tpu.matmul %65, %1, %cst_50 {dimension_numbers = #tpu.dot_dimension_numbers<[1], [0], [0], [1], [0, 0, 1, 1], [], []>} : vector<32x8xf32>, vector<8x32xf32>, vector<32x32xf32> -> vector<32x32xf32>
    %67 = arith.addf %66, %13 : vector<32x32xf32>
    %cst_51 = arith.constant 0.000000e+00 : f32
    %68 = vector.broadcast %cst_51 : f32 to vector<32x32xf32>
    %69 = arith.maximumf %67, %68 : vector<32x32xf32>
    %cst_52 = arith.constant dense<0.000000e+00> : vector<32x32xf32>
    %70 = tpu.matmul %69, %2, %cst_52 {dimension_numbers = #tpu.dot_dimension_numbers<[1], [0], [0], [1], [0, 0, 1, 1], [], []>} : vector<32x32xf32>, vector<32x32xf32>, vector<32x32xf32> -> vector<32x32xf32>
    %71 = vector.broadcast %3 : vector<1x32xf32> to vector<32x32xf32>
    %72 = arith.addf %70, %71 : vector<32x32xf32>
    %cst_53 = arith.constant 0.000000e+00 : f32
    %73 = vector.broadcast %cst_53 : f32 to vector<32x32xf32>
    %74 = arith.maximumf %72, %73 : vector<32x32xf32>
    %cst_54 = arith.constant dense<0.000000e+00> : vector<32x8xf32>
    %75 = tpu.matmul %74, %4, %cst_54 {dimension_numbers = #tpu.dot_dimension_numbers<[1], [0], [0], [1], [0, 0, 1, 1], [], []>} : vector<32x32xf32>, vector<32x8xf32>, vector<32x8xf32> -> vector<32x8xf32>
    %76 = vector.broadcast %5 : vector<1x8xf32> to vector<32x8xf32>
    %77 = arith.addf %75, %76 : vector<32x8xf32>
    %cst_55 = arith.constant dense<0.000000e+00> : vector<32x8xf32>
    %78 = tpu.matmul %74, %6, %cst_55 {dimension_numbers = #tpu.dot_dimension_numbers<[1], [0], [0], [1], [0, 0, 1, 1], [], []>} : vector<32x32xf32>, vector<32x8xf32>, vector<32x8xf32> -> vector<32x8xf32>
    %79 = vector.broadcast %7 : vector<1x8xf32> to vector<32x8xf32>
    %80 = arith.addf %78, %79 : vector<32x8xf32>
    %81 = vector.broadcast %c2_i32 : i32 to vector<32x8xi32>
    %82 = arith.cmpi eq, %14, %81 : vector<32x8xi32>
    %83 = math.exp %80 : vector<32x8xf32>
    %84 = arith.mulf %0, %83 : vector<32x8xf32>
    %85 = arith.addf %84, %77 : vector<32x8xf32>
    %c0_56 = arith.constant 0 : index
    %c0_57 = arith.constant 0 : index
    %86 = vector.load %arg14[%c0_56, %c0_57] : memref<32x8xf32, #tpu.memory_space<vmem>>, vector<32x8xf32>
    %87 = arith.select %82, %85, %86 : vector<32x8xi1>, vector<32x8xf32>
    %c0_58 = arith.constant 0 : index
    %c0_59 = arith.constant 0 : index
    %88 = vector.load %arg14[%c0_58, %c0_59] : memref<32x8xf32, #tpu.memory_space<vmem>>, vector<32x8xf32>
    tpu.vector_store %arg14[%c0_58, %c0_59], %87 {strides = array<i32>} : memref<32x8xf32, #tpu.memory_space<vmem>>, vector<32x8xf32>,
    %c3_i32 = arith.constant 3 : i32
    %c0_60 = arith.constant 0 : index
    %c0_61 = arith.constant 0 : index
    %89 = vector.load %arg14[%c0_60, %c0_61] : memref<32x8xf32, #tpu.memory_space<vmem>>, vector<32x8xf32>
    %cst_62 = arith.constant dense<0.000000e+00> : vector<32x32xf32>
    %90 = tpu.matmul %89, %1, %cst_62 {dimension_numbers = #tpu.dot_dimension_numbers<[1], [0], [0], [1], [0, 0, 1, 1], [], []>} : vector<32x8xf32>, vector<8x32xf32>, vector<32x32xf32> -> vector<32x32xf32>
    %91 = arith.addf %90, %13 : vector<32x32xf32>
    %cst_63 = arith.constant 0.000000e+00 : f32
    %92 = vector.broadcast %cst_63 : f32 to vector<32x32xf32>
    %93 = arith.maximumf %91, %92 : vector<32x32xf32>
    %cst_64 = arith.constant dense<0.000000e+00> : vector<32x32xf32>
    %94 = tpu.matmul %93, %2, %cst_64 {dimension_numbers = #tpu.dot_dimension_numbers<[1], [0], [0], [1], [0, 0, 1, 1], [], []>} : vector<32x32xf32>, vector<32x32xf32>, vector<32x32xf32> -> vector<32x32xf32>
    %95 = vector.broadcast %3 : vector<1x32xf32> to vector<32x32xf32>
    %96 = arith.addf %94, %95 : vector<32x32xf32>
    %cst_65 = arith.constant 0.000000e+00 : f32
    %97 = vector.broadcast %cst_65 : f32 to vector<32x32xf32>
    %98 = arith.maximumf %96, %97 : vector<32x32xf32>
    %cst_66 = arith.constant dense<0.000000e+00> : vector<32x8xf32>
    %99 = tpu.matmul %98, %4, %cst_66 {dimension_numbers = #tpu.dot_dimension_numbers<[1], [0], [0], [1], [0, 0, 1, 1], [], []>} : vector<32x32xf32>, vector<32x8xf32>, vector<32x8xf32> -> vector<32x8xf32>
    %100 = vector.broadcast %5 : vector<1x8xf32> to vector<32x8xf32>
    %101 = arith.addf %99, %100 : vector<32x8xf32>
    %cst_67 = arith.constant dense<0.000000e+00> : vector<32x8xf32>
    %102 = tpu.matmul %98, %6, %cst_67 {dimension_numbers = #tpu.dot_dimension_numbers<[1], [0], [0], [1], [0, 0, 1, 1], [], []>} : vector<32x32xf32>, vector<32x8xf32>, vector<32x8xf32> -> vector<32x8xf32>
    %103 = vector.broadcast %7 : vector<1x8xf32> to vector<32x8xf32>
    %104 = arith.addf %102, %103 : vector<32x8xf32>
    %105 = vector.broadcast %c3_i32 : i32 to vector<32x8xi32>
    %106 = arith.cmpi eq, %14, %105 : vector<32x8xi32>
    %107 = math.exp %104 : vector<32x8xf32>
    %108 = arith.mulf %0, %107 : vector<32x8xf32>
    %109 = arith.addf %108, %101 : vector<32x8xf32>
    %c0_68 = arith.constant 0 : index
    %c0_69 = arith.constant 0 : index
    %110 = vector.load %arg14[%c0_68, %c0_69] : memref<32x8xf32, #tpu.memory_space<vmem>>, vector<32x8xf32>
    %111 = arith.select %106, %109, %110 : vector<32x8xi1>, vector<32x8xf32>
    %c0_70 = arith.constant 0 : index
    %c0_71 = arith.constant 0 : index
    %112 = vector.load %arg14[%c0_70, %c0_71] : memref<32x8xf32, #tpu.memory_space<vmem>>, vector<32x8xf32>
    tpu.vector_store %arg14[%c0_70, %c0_71], %111 {strides = array<i32>} : memref<32x8xf32, #tpu.memory_space<vmem>>, vector<32x8xf32>,
    %c4_i32 = arith.constant 4 : i32
    %c0_72 = arith.constant 0 : index
    %c0_73 = arith.constant 0 : index
    %113 = vector.load %arg14[%c0_72, %c0_73] : memref<32x8xf32, #tpu.memory_space<vmem>>, vector<32x8xf32>
    %cst_74 = arith.constant dense<0.000000e+00> : vector<32x32xf32>
    %114 = tpu.matmul %113, %1, %cst_74 {dimension_numbers = #tpu.dot_dimension_numbers<[1], [0], [0], [1], [0, 0, 1, 1], [], []>} : vector<32x8xf32>, vector<8x32xf32>, vector<32x32xf32> -> vector<32x32xf32>
    %115 = arith.addf %114, %13 : vector<32x32xf32>
    %cst_75 = arith.constant 0.000000e+00 : f32
    %116 = vector.broadcast %cst_75 : f32 to vector<32x32xf32>
    %117 = arith.maximumf %115, %116 : vector<32x32xf32>
    %cst_76 = arith.constant dense<0.000000e+00> : vector<32x32xf32>
    %118 = tpu.matmul %117, %2, %cst_76 {dimension_numbers = #tpu.dot_dimension_numbers<[1], [0], [0], [1], [0, 0, 1, 1], [], []>} : vector<32x32xf32>, vector<32x32xf32>, vector<32x32xf32> -> vector<32x32xf32>
    %119 = vector.broadcast %3 : vector<1x32xf32> to vector<32x32xf32>
    %120 = arith.addf %118, %119 : vector<32x32xf32>
    %cst_77 = arith.constant 0.000000e+00 : f32
    %121 = vector.broadcast %cst_77 : f32 to vector<32x32xf32>
    %122 = arith.maximumf %120, %121 : vector<32x32xf32>
    %cst_78 = arith.constant dense<0.000000e+00> : vector<32x8xf32>
    %123 = tpu.matmul %122, %4, %cst_78 {dimension_numbers = #tpu.dot_dimension_numbers<[1], [0], [0], [1], [0, 0, 1, 1], [], []>} : vector<32x32xf32>, vector<32x8xf32>, vector<32x8xf32> -> vector<32x8xf32>
    %124 = vector.broadcast %5 : vector<1x8xf32> to vector<32x8xf32>
    %125 = arith.addf %123, %124 : vector<32x8xf32>
    %cst_79 = arith.constant dense<0.000000e+00> : vector<32x8xf32>
    %126 = tpu.matmul %122, %6, %cst_79 {dimension_numbers = #tpu.dot_dimension_numbers<[1], [0], [0], [1], [0, 0, 1, 1], [], []>} : vector<32x32xf32>, vector<32x8xf32>, vector<32x8xf32> -> vector<32x8xf32>
    %127 = vector.broadcast %7 : vector<1x8xf32> to vector<32x8xf32>
    %128 = arith.addf %126, %127 : vector<32x8xf32>
    %129 = vector.broadcast %c4_i32 : i32 to vector<32x8xi32>
    %130 = arith.cmpi eq, %14, %129 : vector<32x8xi32>
    %131 = math.exp %128 : vector<32x8xf32>
    %132 = arith.mulf %0, %131 : vector<32x8xf32>
    %133 = arith.addf %132, %125 : vector<32x8xf32>
    %c0_80 = arith.constant 0 : index
    %c0_81 = arith.constant 0 : index
    %134 = vector.load %arg14[%c0_80, %c0_81] : memref<32x8xf32, #tpu.memory_space<vmem>>, vector<32x8xf32>
    %135 = arith.select %130, %133, %134 : vector<32x8xi1>, vector<32x8xf32>
    %c0_82 = arith.constant 0 : index
    %c0_83 = arith.constant 0 : index
    %136 = vector.load %arg14[%c0_82, %c0_83] : memref<32x8xf32, #tpu.memory_space<vmem>>, vector<32x8xf32>
    tpu.vector_store %arg14[%c0_82, %c0_83], %135 {strides = array<i32>} : memref<32x8xf32, #tpu.memory_space<vmem>>, vector<32x8xf32>,
    %c5_i32 = arith.constant 5 : i32
    %c0_84 = arith.constant 0 : index
    %c0_85 = arith.constant 0 : index
    %137 = vector.load %arg14[%c0_84, %c0_85] : memref<32x8xf32, #tpu.memory_space<vmem>>, vector<32x8xf32>
    %cst_86 = arith.constant dense<0.000000e+00> : vector<32x32xf32>
    %138 = tpu.matmul %137, %1, %cst_86 {dimension_numbers = #tpu.dot_dimension_numbers<[1], [0], [0], [1], [0, 0, 1, 1], [], []>} : vector<32x8xf32>, vector<8x32xf32>, vector<32x32xf32> -> vector<32x32xf32>
    %139 = arith.addf %138, %13 : vector<32x32xf32>
    %cst_87 = arith.constant 0.000000e+00 : f32
    %140 = vector.broadcast %cst_87 : f32 to vector<32x32xf32>
    %141 = arith.maximumf %139, %140 : vector<32x32xf32>
    %cst_88 = arith.constant dense<0.000000e+00> : vector<32x32xf32>
    %142 = tpu.matmul %141, %2, %cst_88 {dimension_numbers = #tpu.dot_dimension_numbers<[1], [0], [0], [1], [0, 0, 1, 1], [], []>} : vector<32x32xf32>, vector<32x32xf32>, vector<32x32xf32> -> vector<32x32xf32>
    %143 = vector.broadcast %3 : vector<1x32xf32> to vector<32x32xf32>
    %144 = arith.addf %142, %143 : vector<32x32xf32>
    %cst_89 = arith.constant 0.000000e+00 : f32
    %145 = vector.broadcast %cst_89 : f32 to vector<32x32xf32>
    %146 = arith.maximumf %144, %145 : vector<32x32xf32>
    %cst_90 = arith.constant dense<0.000000e+00> : vector<32x8xf32>
    %147 = tpu.matmul %146, %4, %cst_90 {dimension_numbers = #tpu.dot_dimension_numbers<[1], [0], [0], [1], [0, 0, 1, 1], [], []>} : vector<32x32xf32>, vector<32x8xf32>, vector<32x8xf32> -> vector<32x8xf32>
    %148 = vector.broadcast %5 : vector<1x8xf32> to vector<32x8xf32>
    %149 = arith.addf %147, %148 : vector<32x8xf32>
    %cst_91 = arith.constant dense<0.000000e+00> : vector<32x8xf32>
    %150 = tpu.matmul %146, %6, %cst_91 {dimension_numbers = #tpu.dot_dimension_numbers<[1], [0], [0], [1], [0, 0, 1, 1], [], []>} : vector<32x32xf32>, vector<32x8xf32>, vector<32x8xf32> -> vector<32x8xf32>
    %151 = vector.broadcast %7 : vector<1x8xf32> to vector<32x8xf32>
    %152 = arith.addf %150, %151 : vector<32x8xf32>
    %153 = vector.broadcast %c5_i32 : i32 to vector<32x8xi32>
    %154 = arith.cmpi eq, %14, %153 : vector<32x8xi32>
    %155 = math.exp %152 : vector<32x8xf32>
    %156 = arith.mulf %0, %155 : vector<32x8xf32>
    %157 = arith.addf %156, %149 : vector<32x8xf32>
    %c0_92 = arith.constant 0 : index
    %c0_93 = arith.constant 0 : index
    %158 = vector.load %arg14[%c0_92, %c0_93] : memref<32x8xf32, #tpu.memory_space<vmem>>, vector<32x8xf32>
    %159 = arith.select %154, %157, %158 : vector<32x8xi1>, vector<32x8xf32>
    %c0_94 = arith.constant 0 : index
    %c0_95 = arith.constant 0 : index
    %160 = vector.load %arg14[%c0_94, %c0_95] : memref<32x8xf32, #tpu.memory_space<vmem>>, vector<32x8xf32>
    tpu.vector_store %arg14[%c0_94, %c0_95], %159 {strides = array<i32>} : memref<32x8xf32, #tpu.memory_space<vmem>>, vector<32x8xf32>,
    %c6_i32 = arith.constant 6 : i32
    %c0_96 = arith.constant 0 : index
    %c0_97 = arith.constant 0 : index
    %161 = vector.load %arg14[%c0_96, %c0_97] : memref<32x8xf32, #tpu.memory_space<vmem>>, vector<32x8xf32>
    %cst_98 = arith.constant dense<0.000000e+00> : vector<32x32xf32>
    %162 = tpu.matmul %161, %1, %cst_98 {dimension_numbers = #tpu.dot_dimension_numbers<[1], [0], [0], [1], [0, 0, 1, 1], [], []>} : vector<32x8xf32>, vector<8x32xf32>, vector<32x32xf32> -> vector<32x32xf32>
    %163 = arith.addf %162, %13 : vector<32x32xf32>
    %cst_99 = arith.constant 0.000000e+00 : f32
    %164 = vector.broadcast %cst_99 : f32 to vector<32x32xf32>
    %165 = arith.maximumf %163, %164 : vector<32x32xf32>
    %cst_100 = arith.constant dense<0.000000e+00> : vector<32x32xf32>
    %166 = tpu.matmul %165, %2, %cst_100 {dimension_numbers = #tpu.dot_dimension_numbers<[1], [0], [0], [1], [0, 0, 1, 1], [], []>} : vector<32x32xf32>, vector<32x32xf32>, vector<32x32xf32> -> vector<32x32xf32>
    %167 = vector.broadcast %3 : vector<1x32xf32> to vector<32x32xf32>
    %168 = arith.addf %166, %167 : vector<32x32xf32>
    %cst_101 = arith.constant 0.000000e+00 : f32
    %169 = vector.broadcast %cst_101 : f32 to vector<32x32xf32>
    %170 = arith.maximumf %168, %169 : vector<32x32xf32>
    %cst_102 = arith.constant dense<0.000000e+00> : vector<32x8xf32>
    %171 = tpu.matmul %170, %4, %cst_102 {dimension_numbers = #tpu.dot_dimension_numbers<[1], [0], [0], [1], [0, 0, 1, 1], [], []>} : vector<32x32xf32>, vector<32x8xf32>, vector<32x8xf32> -> vector<32x8xf32>
    %172 = vector.broadcast %5 : vector<1x8xf32> to vector<32x8xf32>
    %173 = arith.addf %171, %172 : vector<32x8xf32>
    %cst_103 = arith.constant dense<0.000000e+00> : vector<32x8xf32>
    %174 = tpu.matmul %170, %6, %cst_103 {dimension_numbers = #tpu.dot_dimension_numbers<[1], [0], [0], [1], [0, 0, 1, 1], [], []>} : vector<32x32xf32>, vector<32x8xf32>, vector<32x8xf32> -> vector<32x8xf32>
    %175 = vector.broadcast %7 : vector<1x8xf32> to vector<32x8xf32>
    %176 = arith.addf %174, %175 : vector<32x8xf32>
    %177 = vector.broadcast %c6_i32 : i32 to vector<32x8xi32>
    %178 = arith.cmpi eq, %14, %177 : vector<32x8xi32>
    %179 = math.exp %176 : vector<32x8xf32>
    %180 = arith.mulf %0, %179 : vector<32x8xf32>
    %181 = arith.addf %180, %173 : vector<32x8xf32>
    %c0_104 = arith.constant 0 : index
    %c0_105 = arith.constant 0 : index
    %182 = vector.load %arg14[%c0_104, %c0_105] : memref<32x8xf32, #tpu.memory_space<vmem>>, vector<32x8xf32>
    %183 = arith.select %178, %181, %182 : vector<32x8xi1>, vector<32x8xf32>
    %c0_106 = arith.constant 0 : index
    %c0_107 = arith.constant 0 : index
    %184 = vector.load %arg14[%c0_106, %c0_107] : memref<32x8xf32, #tpu.memory_space<vmem>>, vector<32x8xf32>
    tpu.vector_store %arg14[%c0_106, %c0_107], %183 {strides = array<i32>} : memref<32x8xf32, #tpu.memory_space<vmem>>, vector<32x8xf32>,
    %c7_i32 = arith.constant 7 : i32
    %c0_108 = arith.constant 0 : index
    %c0_109 = arith.constant 0 : index
    %185 = vector.load %arg14[%c0_108, %c0_109] : memref<32x8xf32, #tpu.memory_space<vmem>>, vector<32x8xf32>
    %cst_110 = arith.constant dense<0.000000e+00> : vector<32x32xf32>
    %186 = tpu.matmul %185, %1, %cst_110 {dimension_numbers = #tpu.dot_dimension_numbers<[1], [0], [0], [1], [0, 0, 1, 1], [], []>} : vector<32x8xf32>, vector<8x32xf32>, vector<32x32xf32> -> vector<32x32xf32>
    %187 = arith.addf %186, %13 : vector<32x32xf32>
    %cst_111 = arith.constant 0.000000e+00 : f32
    %188 = vector.broadcast %cst_111 : f32 to vector<32x32xf32>
    %189 = arith.maximumf %187, %188 : vector<32x32xf32>
    %cst_112 = arith.constant dense<0.000000e+00> : vector<32x32xf32>
    %190 = tpu.matmul %189, %2, %cst_112 {dimension_numbers = #tpu.dot_dimension_numbers<[1], [0], [0], [1], [0, 0, 1, 1], [], []>} : vector<32x32xf32>, vector<32x32xf32>, vector<32x32xf32> -> vector<32x32xf32>
    %191 = vector.broadcast %3 : vector<1x32xf32> to vector<32x32xf32>
    %192 = arith.addf %190, %191 : vector<32x32xf32>
    %cst_113 = arith.constant 0.000000e+00 : f32
    %193 = vector.broadcast %cst_113 : f32 to vector<32x32xf32>
    %194 = arith.maximumf %192, %193 : vector<32x32xf32>
    %cst_114 = arith.constant dense<0.000000e+00> : vector<32x8xf32>
    %195 = tpu.matmul %194, %4, %cst_114 {dimension_numbers = #tpu.dot_dimension_numbers<[1], [0], [0], [1], [0, 0, 1, 1], [], []>} : vector<32x32xf32>, vector<32x8xf32>, vector<32x8xf32> -> vector<32x8xf32>
    %196 = vector.broadcast %5 : vector<1x8xf32> to vector<32x8xf32>
    %197 = arith.addf %195, %196 : vector<32x8xf32>
    %cst_115 = arith.constant dense<0.000000e+00> : vector<32x8xf32>
    %198 = tpu.matmul %194, %6, %cst_115 {dimension_numbers = #tpu.dot_dimension_numbers<[1], [0], [0], [1], [0, 0, 1, 1], [], []>} : vector<32x32xf32>, vector<32x8xf32>, vector<32x8xf32> -> vector<32x8xf32>
    %199 = vector.broadcast %7 : vector<1x8xf32> to vector<32x8xf32>
    %200 = arith.addf %198, %199 : vector<32x8xf32>
    %c7_i32_116 = arith.constant 7 : i32
    %201 = vector.broadcast %c7_i32_116 : i32 to vector<32x8xi32>
    %202 = arith.cmpi eq, %14, %201 : vector<32x8xi32>
    %203 = math.exp %200 : vector<32x8xf32>
    %204 = arith.mulf %0, %203 : vector<32x8xf32>
    %205 = arith.addf %204, %197 : vector<32x8xf32>
    %c0_117 = arith.constant 0 : index
    %c0_118 = arith.constant 0 : index
    %206 = vector.load %arg14[%c0_117, %c0_118] : memref<32x8xf32, #tpu.memory_space<vmem>>, vector<32x8xf32>
    %207 = arith.select %202, %205, %206 : vector<32x8xi1>, vector<32x8xf32>
    %c0_119 = arith.constant 0 : index
    %c0_120 = arith.constant 0 : index
    %208 = vector.load %arg12[%c0_119, %c0_120] : memref<32x8xf32, #tpu.memory_space<vmem>>, vector<32x8xf32>
    tpu.vector_store %arg12[%c0_119, %c0_120], %207 {strides = array<i32>} : memref<32x8xf32, #tpu.memory_space<vmem>>, vector<32x8xf32>,
    %cst_121 = arith.constant dense<0.000000e+00> : vector<32xf32>
    %209 = vector.multi_reduction <add>, %200, %cst_121 [1] : vector<32x8xf32> to vector<32xf32>
    %210 = vector.shape_cast %209 : vector<32xf32> to vector<32x1xf32>
    %c0_122 = arith.constant 0 : index
    %c0_123 = arith.constant 0 : index
    %211 = vector.load %arg13[%c0_122, %c0_123] : memref<32x1xf32, #tpu.memory_space<vmem>>, vector<32x1xf32>
    tpu.vector_store %arg13[%c0_122, %c0_123], %210 {strides = array<i32>} : memref<32x1xf32, #tpu.memory_space<vmem>>, vector<32x1xf32>,
    return
  }
  func.func @transform_0(%arg0: i32) -> (i32, i32) {
    %c0_i32 = arith.constant 0 : i32
    %c0_i32_0 = arith.constant 0 : i32
    return %arg0, %c0_i32 : i32, i32
  }
  func.func @transform_1(%arg0: i32) -> (i32, i32) {
    %c0_i32 = arith.constant 0 : i32
    %c0_i32_0 = arith.constant 0 : i32
    return %arg0, %c0_i32 : i32, i32
  }
  func.func @transform_2(%arg0: i32) -> (i32, i32) {
    %c0_i32 = arith.constant 0 : i32
    %c0_i32_0 = arith.constant 0 : i32
    %c0_i32_1 = arith.constant 0 : i32
    return %c0_i32, %c0_i32_0 : i32, i32
  }
  func.func @transform_3(%arg0: i32) -> (i32, i32) {
    %c0_i32 = arith.constant 0 : i32
    %c0_i32_0 = arith.constant 0 : i32
    %c0_i32_1 = arith.constant 0 : i32
    return %c0_i32, %c0_i32_0 : i32, i32
  }
  func.func @transform_4(%arg0: i32) -> (i32, i32) {
    %c0_i32 = arith.constant 0 : i32
    %c0_i32_0 = arith.constant 0 : i32
    %c0_i32_1 = arith.constant 0 : i32
    return %c0_i32, %c0_i32_0 : i32, i32
  }
  func.func @transform_5(%arg0: i32) -> (i32, i32) {
    %c0_i32 = arith.constant 0 : i32
    %c0_i32_0 = arith.constant 0 : i32
    %c0_i32_1 = arith.constant 0 : i32
    return %c0_i32, %c0_i32_0 : i32, i32
  }
  func.func @transform_6(%arg0: i32) -> (i32, i32) {
    %c0_i32 = arith.constant 0 : i32
    %c0_i32_0 = arith.constant 0 : i32
    %c0_i32_1 = arith.constant 0 : i32
    return %c0_i32, %c0_i32_0 : i32, i32
  }
  func.func @transform_7(%arg0: i32) -> (i32, i32) {
    %c0_i32 = arith.constant 0 : i32
    %c0_i32_0 = arith.constant 0 : i32
    %c0_i32_1 = arith.constant 0 : i32
    return %c0_i32, %c0_i32_0 : i32, i32
  }
  func.func @transform_8(%arg0: i32) -> (i32, i32) {
    %c0_i32 = arith.constant 0 : i32
    %c0_i32_0 = arith.constant 0 : i32
    %c0_i32_1 = arith.constant 0 : i32
    return %c0_i32, %c0_i32_0 : i32, i32
  }
  func.func @transform_9(%arg0: i32) -> (i32, i32) {
    %c0_i32 = arith.constant 0 : i32
    %c0_i32_0 = arith.constant 0 : i32
    %c0_i32_1 = arith.constant 0 : i32
    return %c0_i32, %c0_i32_0 : i32, i32
  }
  func.func @transform_10(%arg0: i32) -> (i32, i32) {
    %c0_i32 = arith.constant 0 : i32
    %c0_i32_0 = arith.constant 0 : i32
    %c0_i32_1 = arith.constant 0 : i32
    return %c0_i32, %c0_i32_0 : i32, i32
  }
  func.func @transform_11(%arg0: i32) -> (i32, i32) {
    %c0_i32 = arith.constant 0 : i32
    %c0_i32_0 = arith.constant 0 : i32
    return %arg0, %c0_i32 : i32, i32
  }
  func.func @transform_12(%arg0: i32) -> (i32, i32) {
    %c0_i32 = arith.constant 0 : i32
    %c0_i32_0 = arith.constant 0 : i32
    return %arg0, %c0_i32 : i32, i32
  }
}

</mosaic_0001>

<llo_original>
// kernel: tpu_custom_call.1
$region0: #{tpu_custom_call.1}
  #allocation0 [shape = 'u32[]', space=smem, size = 0x4, offset = 0x4, fixed_abs, tag = 'smem constant byte address 0x4 - core index']
  #allocation1 [shape = 'u32[144,128]{1,0:T(1,128)}', space=vmem, size = 0x12000, scoped, tag = 'internal scratch']
  #allocation2 [shape = 'f32[32,8]{1,0:T(8,128)}', space=vmem, size = 0x4000, scoped, tag = 'scratch operand']
  %s0 = inlined_call_operand.vmem [shape: f32[64,8], index: 0, kind: input, shape index: {}]
  %s1 = inlined_call_operand.vmem [shape: f32[64,4], index: 1, kind: input, shape index: {}]
  %s2 = inlined_call_operand.vmem [shape: f32[8,32], index: 2, kind: input, shape index: {}]
  %s3 = inlined_call_operand.vmem [shape: f32[1,32], index: 3, kind: input, shape index: {}]
  %s4 = inlined_call_operand.vmem [shape: f32[4,32], index: 4, kind: input, shape index: {}]
  %s5 = inlined_call_operand.vmem [shape: f32[32,32], index: 5, kind: input, shape index: {}]
  %s6 = inlined_call_operand.vmem [shape: f32[1,32], index: 6, kind: input, shape index: {}]
  %s7 = inlined_call_operand.vmem [shape: f32[32,8], index: 7, kind: input, shape index: {}]
  %s8 = inlined_call_operand.vmem [shape: f32[1,8], index: 8, kind: input, shape index: {}]
  %s9 = inlined_call_operand.vmem [shape: f32[32,8], index: 9, kind: input, shape index: {}]
  %s10 = inlined_call_operand.vmem [shape: f32[1,8], index: 10, kind: input, shape index: {}]
  %s11 = inlined_call_operand.vmem [shape: f32[64,8], index: 11, kind: output, shape index: {0}]
  %s12 = inlined_call_operand.vmem [shape: f32[64,1], index: 12, kind: output, shape index: {1}]
  %13 = xla_tuple %s11, %s12
  %s14 = sld [smem:[#allocation0]]
  $region85: #{tpu_custom_call.1} parent=0
    _
  %s16 = ssub.s32 1, %s14
  %s17 = scalar_select 0, %s16, %s14
  loop: start=0, step=1, limit=4
  $region2: #{tpu_custom_call.1} parent=0 // loop_pre_header
    _
  $region3: #{tpu_custom_call.1} parent=0 // loop_header
    %s19 = sphi 0, %s23
    %p20 = scmp.ge.s32.totalorder %s19, 4
    %s29 = sphi 0, %s31
    %s32 = sphi 0, %s29
    %s33 = sphi 0, %s32
    %s49 = sphi 0, %s33
    %s55 = sphi 0, %s57
    %s58 = sphi 0, %s55
    %s59 = sphi 0, %s58
    %s75 = sphi 0, %s59
    %s79 = sphi 0, %s79
    %s81 = sphi 0, %s79
    %s82 = sphi 0, %s81
    %s96 = sphi 0, %s82
    %s100 = sphi 0, %s100
    %s102 = sphi 0, %s100
    %s103 = sphi 0, %s102
    %s117 = sphi 0, %s103
    %s121 = sphi 0, %s121
    %s123 = sphi 0, %s121
    %s124 = sphi 0, %s123
    %s138 = sphi 0, %s124
    %s142 = sphi 0, %s142
    %s144 = sphi 0, %s142
    %s145 = sphi 0, %s144
    %s159 = sphi 0, %s145
    %s163 = sphi 0, %s163
    %s165 = sphi 0, %s163
    %s166 = sphi 0, %s165
    %s180 = sphi 0, %s166
    %s184 = sphi 0, %s184
    %s186 = sphi 0, %s184
    %s187 = sphi 0, %s186
    %s201 = sphi 0, %s187
    %s205 = sphi 0, %s205
    %s207 = sphi 0, %s205
    %s208 = sphi 0, %s207
    %s222 = sphi 0, %s208
    %s226 = sphi 0, %s226
    %s228 = sphi 0, %s226
    %s229 = sphi 0, %s228
    %s243 = sphi 0, %s229
    %s247 = sphi 0, %s247
    %s249 = sphi 0, %s247
    %s250 = sphi 0, %s249
    %s264 = sphi 0, %s250
    %s270 = sphi 0, %s272
    %s273 = sphi 0, %s270
    %s274 = sphi 0, %s273
    %s290 = sphi 0, %s274
    %s296 = sphi 0, %s298
    %s299 = sphi 0, %s296
    %s300 = sphi 0, %s299
    %s316 = sphi 0, %s300
  $region4: #{tpu_custom_call.1} parent=0 // loop_header_branch
    %22 = sbr.rel (%p20) target = $region8
  $region5: #{tpu_custom_call.1} parent=0 // loop_body
    %s24 = ssub.s32 %s19, 1
    %s25 = ssub.s32 %s19, 2
    %s26 = sadd.s32 %s19, 1
    %s27 = ssub.s32 %s19, %s26
    %p28 = scmp.eq.s32.totalorder %s27, 0
    %s30 = sadd.s32 %s29, 1
    %s31 = scalar_select %p28, %s29, %s30
    %p34 = pneg %p28
    %p35 = scmp.eq.s32.totalorder %s19, 1
    %p36 = por %p34, %p35
    %p37 = scmp.ne.s32.totalorder %s29, %s32
    %p38 = scmp.eq.s32.totalorder %s19, 0
    %p39 = por %p37, %p38
    %p40 = scmp.ne.s32.totalorder %s29, %s32
    %p41 = scmp.eq.s32.totalorder %s24, 1
    %p42 = por %p40, %p41
    %p43 = scmp.ne.s32.totalorder %s32, %s33
    %p44 = scmp.eq.s32.totalorder %s24, 0
    %p45 = por %p43, %p44
    %p46 = scmp.ne.s32.totalorder %s32, %s33
    %p47 = scmp.eq.s32.totalorder %s25, 1
    %p48 = por %p46, %p47
    %p50 = scmp.ne.s32.totalorder %s33, %s49
    %p51 = scmp.eq.s32.totalorder %s25, 0
    %p52 = por %p50, %p51
    %s53 = ssub.s32 %s19, %s26
    %p54 = scmp.eq.s32.totalorder %s53, 0
    %s56 = sadd.s32 %s55, 1
    %s57 = scalar_select %p54, %s55, %s56
    %p60 = pneg %p54
    %p61 = scmp.eq.s32.totalorder %s19, 1
    %p62 = por %p60, %p61
    %p63 = scmp.ne.s32.totalorder %s55, %s58
    %p64 = scmp.eq.s32.totalorder %s19, 0
    %p65 = por %p63, %p64
    %p66 = scmp.ne.s32.totalorder %s55, %s58
    %p67 = scmp.eq.s32.totalorder %s24, 1
    %p68 = por %p66, %p67
    %p69 = scmp.ne.s32.totalorder %s58, %s59
    %p70 = scmp.eq.s32.totalorder %s24, 0
    %p71 = por %p69, %p70
    %p72 = scmp.ne.s32.totalorder %s58, %s59
    %p73 = scmp.eq.s32.totalorder %s25, 1
    %p74 = por %p72, %p73
    %p76 = scmp.ne.s32.totalorder %s59, %s75
    %p77 = scmp.eq.s32.totalorder %s25, 0
    %p78 = por %p76, %p77
    %s80 = sadd.s32 %s79, 1
    %p83 = scmp.eq.s32.totalorder %s19, 1
    %p84 = scmp.ne.s32.totalorder %s79, %s81
    %p85 = scmp.eq.s32.totalorder %s19, 0
    %p86 = por %p84, %p85
    %p87 = scmp.ne.s32.totalorder %s79, %s81
    %p88 = scmp.eq.s32.totalorder %s24, 1
    %p89 = por %p87, %p88
    %p90 = scmp.ne.s32.totalorder %s81, %s82
    %p91 = scmp.eq.s32.totalorder %s24, 0
    %p92 = por %p90, %p91
    %p93 = scmp.ne.s32.totalorder %s81, %s82
    %p94 = scmp.eq.s32.totalorder %s25, 1
    %p95 = por %p93, %p94
    %p97 = scmp.ne.s32.totalorder %s82, %s96
    %p98 = scmp.eq.s32.totalorder %s25, 0
    %p99 = por %p97, %p98
    %s101 = sadd.s32 %s100, 1
    %p104 = scmp.eq.s32.totalorder %s19, 1
    %p105 = scmp.ne.s32.totalorder %s100, %s102
    %p106 = scmp.eq.s32.totalorder %s19, 0
    %p107 = por %p105, %p106
    %p108 = scmp.ne.s32.totalorder %s100, %s102
    %p109 = scmp.eq.s32.totalorder %s24, 1
    %p110 = por %p108, %p109
    %p111 = scmp.ne.s32.totalorder %s102, %s103
    %p112 = scmp.eq.s32.totalorder %s24, 0
    %p113 = por %p111, %p112
    %p114 = scmp.ne.s32.totalorder %s102, %s103
    %p115 = scmp.eq.s32.totalorder %s25, 1
    %p116 = por %p114, %p115
    %p118 = scmp.ne.s32.totalorder %s103, %s117
    %p119 = scmp.eq.s32.totalorder %s25, 0
    %p120 = por %p118, %p119
    %s122 = sadd.s32 %s121, 1
    %p125 = scmp.eq.s32.totalorder %s19, 1
    %p126 = scmp.ne.s32.totalorder %s121, %s123
    %p127 = scmp.eq.s32.totalorder %s19, 0
    %p128 = por %p126, %p127
    %p129 = scmp.ne.s32.totalorder %s121, %s123
    %p130 = scmp.eq.s32.totalorder %s24, 1
    %p131 = por %p129, %p130
    %p132 = scmp.ne.s32.totalorder %s123, %s124
    %p133 = scmp.eq.s32.totalorder %s24, 0
    %p134 = por %p132, %p133
    %p135 = scmp.ne.s32.totalorder %s123, %s124
    %p136 = scmp.eq.s32.totalorder %s25, 1
    %p137 = por %p135, %p136
    %p139 = scmp.ne.s32.totalorder %s124, %s138
    %p140 = scmp.eq.s32.totalorder %s25, 0
    %p141 = por %p139, %p140
    %s143 = sadd.s32 %s142, 1
    %p146 = scmp.eq.s32.totalorder %s19, 1
    %p147 = scmp.ne.s32.totalorder %s142, %s144
    %p148 = scmp.eq.s32.totalorder %s19, 0
    %p149 = por %p147, %p148
    %p150 = scmp.ne.s32.totalorder %s142, %s144
    %p151 = scmp.eq.s32.totalorder %s24, 1
    %p152 = por %p150, %p151
    %p153 = scmp.ne.s32.totalorder %s144, %s145
    %p154 = scmp.eq.s32.totalorder %s24, 0
    %p155 = por %p153, %p154
    %p156 = scmp.ne.s32.totalorder %s144, %s145
    %p157 = scmp.eq.s32.totalorder %s25, 1
    %p158 = por %p156, %p157
    %p160 = scmp.ne.s32.totalorder %s145, %s159
    %p161 = scmp.eq.s32.totalorder %s25, 0
    %p162 = por %p160, %p161
    %s164 = sadd.s32 %s163, 1
    %p167 = scmp.eq.s32.totalorder %s19, 1
    %p168 = scmp.ne.s32.totalorder %s163, %s165
    %p169 = scmp.eq.s32.totalorder %s19, 0
    %p170 = por %p168, %p169
    %p171 = scmp.ne.s32.totalorder %s163, %s165
    %p172 = scmp.eq.s32.totalorder %s24, 1
    %p173 = por %p171, %p172
    %p174 = scmp.ne.s32.totalorder %s165, %s166
    %p175 = scmp.eq.s32.totalorder %s24, 0
    %p176 = por %p174, %p175
    %p177 = scmp.ne.s32.totalorder %s165, %s166
    %p178 = scmp.eq.s32.totalorder %s25, 1
    %p179 = por %p177, %p178
    %p181 = scmp.ne.s32.totalorder %s166, %s180
    %p182 = scmp.eq.s32.totalorder %s25, 0
    %p183 = por %p181, %p182
    %s185 = sadd.s32 %s184, 1
    %p188 = scmp.eq.s32.totalorder %s19, 1
    %p189 = scmp.ne.s32.totalorder %s184, %s186
    %p190 = scmp.eq.s32.totalorder %s19, 0
    %p191 = por %p189, %p190
    %p192 = scmp.ne.s32.totalorder %s184, %s186
    %p193 = scmp.eq.s32.totalorder %s24, 1
    %p194 = por %p192, %p193
    %p195 = scmp.ne.s32.totalorder %s186, %s187
    %p196 = scmp.eq.s32.totalorder %s24, 0
    %p197 = por %p195, %p196
    %p198 = scmp.ne.s32.totalorder %s186, %s187
    %p199 = scmp.eq.s32.totalorder %s25, 1
    %p200 = por %p198, %p199
    %p202 = scmp.ne.s32.totalorder %s187, %s201
    %p203 = scmp.eq.s32.totalorder %s25, 0
    %p204 = por %p202, %p203
    %s206 = sadd.s32 %s205, 1
    %p209 = scmp.eq.s32.totalorder %s19, 1
    %p210 = scmp.ne.s32.totalorder %s205, %s207
    %p211 = scmp.eq.s32.totalorder %s19, 0
    %p212 = por %p210, %p211
    %p213 = scmp.ne.s32.totalorder %s205, %s207
    %p214 = scmp.eq.s32.totalorder %s24, 1
    %p215 = por %p213, %p214
    %p216 = scmp.ne.s32.totalorder %s207, %s208
    %p217 = scmp.eq.s32.totalorder %s24, 0
    %p218 = por %p216, %p217
    %p219 = scmp.ne.s32.totalorder %s207, %s208
    %p220 = scmp.eq.s32.totalorder %s25, 1
    %p221 = por %p219, %p220
    %p223 = scmp.ne.s32.totalorder %s208, %s222
    %p224 = scmp.eq.s32.totalorder %s25, 0
    %p225 = por %p223, %p224
    %s227 = sadd.s32 %s226, 1
    %p230 = scmp.eq.s32.totalorder %s19, 1
    %p231 = scmp.ne.s32.totalorder %s226, %s228
    %p232 = scmp.eq.s32.totalorder %s19, 0
    %p233 = por %p231, %p232
    %p234 = scmp.ne.s32.totalorder %s226, %s228
    %p235 = scmp.eq.s32.totalorder %s24, 1
    %p236 = por %p234, %p235
    %p237 = scmp.ne.s32.totalorder %s228, %s229
    %p238 = scmp.eq.s32.totalorder %s24, 0
    %p239 = por %p237, %p238
    %p240 = scmp.ne.s32.totalorder %s228, %s229
    %p241 = scmp.eq.s32.totalorder %s25, 1
    %p242 = por %p240, %p241
    %p244 = scmp.ne.s32.totalorder %s229, %s243
    %p245 = scmp.eq.s32.totalorder %s25, 0
    %p246 = por %p244, %p245
    %s248 = sadd.s32 %s247, 1
    %p251 = scmp.eq.s32.totalorder %s19, 1
    %p252 = scmp.ne.s32.totalorder %s247, %s249
    %p253 = scmp.eq.s32.totalorder %s19, 0
    %p254 = por %p252, %p253
    %p255 = scmp.ne.s32.totalorder %s247, %s249
    %p256 = scmp.eq.s32.totalorder %s24, 1
    %p257 = por %p255, %p256
    %p258 = scmp.ne.s32.totalorder %s249, %s250
    %p259 = scmp.eq.s32.totalorder %s24, 0
    %p260 = por %p258, %p259
    %p261 = scmp.ne.s32.totalorder %s249, %s250
    %p262 = scmp.eq.s32.totalorder %s25, 1
    %p263 = por %p261, %p262
    %p265 = scmp.ne.s32.totalorder %s250, %s264
    %p266 = scmp.eq.s32.totalorder %s25, 0
    %p267 = por %p265, %p266
    %s268 = ssub.s32 %s19, %s26
    %p269 = scmp.eq.s32.totalorder %s268, 0
    %s271 = sadd.s32 %s270, 1
    %s272 = scalar_select %p269, %s270, %s271
    %p275 = pneg %p269
    %p276 = scmp.eq.s32.totalorder %s19, 1
    %p277 = por %p275, %p276
    %p278 = scmp.ne.s32.totalorder %s270, %s273
    %p279 = scmp.eq.s32.totalorder %s19, 0
    %p280 = por %p278, %p279
    %p281 = scmp.ne.s32.totalorder %s270, %s273
    %p282 = scmp.eq.s32.totalorder %s24, 1
    %p283 = por %p281, %p282
    %p284 = scmp.ne.s32.totalorder %s273, %s274
    %p285 = scmp.eq.s32.totalorder %s24, 0
    %p286 = por %p284, %p285
    %p287 = scmp.ne.s32.totalorder %s273, %s274
    %p288 = scmp.eq.s32.totalorder %s25, 1
    %p289 = por %p287, %p288
    %p291 = scmp.ne.s32.totalorder %s274, %s290
    %p292 = scmp.eq.s32.totalorder %s25, 0
    %p293 = por %p291, %p292
    %s294 = ssub.s32 %s19, %s26
    %p295 = scmp.eq.s32.totalorder %s294, 0
    %s297 = sadd.s32 %s296, 1
    %s298 = scalar_select %p295, %s296, %s297
    %p301 = pneg %p295
    %p302 = scmp.eq.s32.totalorder %s19, 1
    %p303 = por %p301, %p302
    %p304 = scmp.ne.s32.totalorder %s296, %s299
    %p305 = scmp.eq.s32.totalorder %s19, 0
    %p306 = por %p304, %p305
    %p307 = scmp.ne.s32.totalorder %s296, %s299
    %p308 = scmp.eq.s32.totalorder %s24, 1
    %p309 = por %p307, %p308
    %p310 = scmp.ne.s32.totalorder %s299, %s300
    %p311 = scmp.eq.s32.totalorder %s24, 0
    %p312 = por %p310, %p311
    %p313 = scmp.ne.s32.totalorder %s299, %s300
    %p314 = scmp.eq.s32.totalorder %s25, 1
    %p315 = por %p313, %p314
    %p317 = scmp.ne.s32.totalorder %s300, %s316
    %p318 = scmp.eq.s32.totalorder %s25, 0
    %p319 = por %p317, %p318
    %p320 = scmp.le.s32.totalorder 1, %s19
    %p321 = scmp.lt.s32.totalorder %s19, 3
    %p322 = pnand %p320, %p321
    %p323 = pneg %p322
    // Predicated region
    $region9: #{tpu_custom_call.1} parent=5 // pred_check
      _
    $region10: #{tpu_custom_call.1} parent=5 // pred_check_branch
      %325 = sbr.rel (%p322) target = $region12
    $region11: #{tpu_custom_call.1} parent=5 // pred_region
      %s326 = ssub.s32 %s19, 1
      // Predicated region
      $region13: #{tpu_custom_call.1} parent=11 // pred_check
        %p327 = pneg %p92
      $region14: #{tpu_custom_call.1} parent=11 // pred_check_branch
        %329 = sbr.rel (%p327) target = $region16
      $region15: #{tpu_custom_call.1} parent=11 // pred_region
        _
      $region16: #{tpu_custom_call.1} parent=11 // pred_fallthru
        _
      // Predicated region
      $region17: #{tpu_custom_call.1} parent=11 // pred_check
        %p330 = pneg %p113
      $region18: #{tpu_custom_call.1} parent=11 // pred_check_branch
        %332 = sbr.rel (%p330) target = $region20
      $region19: #{tpu_custom_call.1} parent=11 // pred_region
        _
      $region20: #{tpu_custom_call.1} parent=11 // pred_fallthru
        _
      // Predicated region
      $region21: #{tpu_custom_call.1} parent=11 // pred_check
        %p333 = pneg %p134
      $region22: #{tpu_custom_call.1} parent=11 // pred_check_branch
        %335 = sbr.rel (%p333) target = $region24
      $region23: #{tpu_custom_call.1} parent=11 // pred_region
        _
      $region24: #{tpu_custom_call.1} parent=11 // pred_fallthru
        _
      // Predicated region
      $region25: #{tpu_custom_call.1} parent=11 // pred_check
        %p336 = pneg %p155
      $region26: #{tpu_custom_call.1} parent=11 // pred_check_branch
        %338 = sbr.rel (%p336) target = $region28
      $region27: #{tpu_custom_call.1} parent=11 // pred_region
        _
      $region28: #{tpu_custom_call.1} parent=11 // pred_fallthru
        _
      // Predicated region
      $region29: #{tpu_custom_call.1} parent=11 // pred_check
        %p339 = pneg %p176
      $region30: #{tpu_custom_call.1} parent=11 // pred_check_branch
        %341 = sbr.rel (%p339) target = $region32
      $region31: #{tpu_custom_call.1} parent=11 // pred_region
        _
      $region32: #{tpu_custom_call.1} parent=11 // pred_fallthru
        _
      // Predicated region
      $region33: #{tpu_custom_call.1} parent=11 // pred_check
        %p342 = pneg %p197
      $region34: #{tpu_custom_call.1} parent=11 // pred_check_branch
        %344 = sbr.rel (%p342) target = $region36
      $region35: #{tpu_custom_call.1} parent=11 // pred_region
        _
      $region36: #{tpu_custom_call.1} parent=11 // pred_fallthru
        _
      // Predicated region
      $region37: #{tpu_custom_call.1} parent=11 // pred_check
        %p345 = pneg %p218
      $region38: #{tpu_custom_call.1} parent=11 // pred_check_branch
        %347 = sbr.rel (%p345) target = $region40
      $region39: #{tpu_custom_call.1} parent=11 // pred_region
        _
      $region40: #{tpu_custom_call.1} parent=11 // pred_fallthru
        _
      // Predicated region
      $region41: #{tpu_custom_call.1} parent=11 // pred_check
        %p348 = pneg %p239
      $region42: #{tpu_custom_call.1} parent=11 // pred_check_branch
        %350 = sbr.rel (%p348) target = $region44
      $region43: #{tpu_custom_call.1} parent=11 // pred_region
        _
      $region44: #{tpu_custom_call.1} parent=11 // pred_fallthru
        _
      // Predicated region
      $region45: #{tpu_custom_call.1} parent=11 // pred_check
        %p351 = pneg %p260
      $region46: #{tpu_custom_call.1} parent=11 // pred_check_branch
        %353 = sbr.rel (%p351) target = $region48
      $region47: #{tpu_custom_call.1} parent=11 // pred_region
        _
      $region48: #{tpu_custom_call.1} parent=11 // pred_fallthru
        _
    $region12: #{tpu_custom_call.1} parent=5 // pred_fallthru
      _
    %p354 = scmp.lt.s32.totalorder %s19, 2
    // Predicated region
    $region49: #{tpu_custom_call.1} parent=5 // pred_check
      %p355 = pneg %p354
    $region50: #{tpu_custom_call.1} parent=5 // pred_check_branch
      %357 = sbr.rel (%p355) target = $region52
    $region51: #{tpu_custom_call.1} parent=5 // pred_region
      // Predicated region
      $region53: #{tpu_custom_call.1} parent=51 // pred_check
        %p358 = pneg %p39
      $region54: #{tpu_custom_call.1} parent=51 // pred_check_branch
        %360 = sbr.rel (%p358) target = $region56
      $region55: #{tpu_custom_call.1} parent=51 // pred_region
        %s361 = smul.u32 4, %s19
        %p362 = scmp.lt.s32.totalorder %s361, 7
        %s363 = scalar_select %p362, %s361, 7
        %s364 = smul.addr %s363, 8
        %s365 = scalar_lea.vmem %s0, %s364
        %s366 = smul.u32 4, %s19
      $region56: #{tpu_custom_call.1} parent=51 // pred_fallthru
        _
      // Predicated region
      $region57: #{tpu_custom_call.1} parent=51 // pred_check
        %p367 = pneg %p65
      $region58: #{tpu_custom_call.1} parent=51 // pred_check_branch
        %369 = sbr.rel (%p367) target = $region60
      $region59: #{tpu_custom_call.1} parent=51 // pred_region
        %s370 = smul.u32 4, %s19
        %p371 = scmp.lt.s32.totalorder %s370, 7
        %s372 = scalar_select %p371, %s370, 7
        %s373 = smul.addr %s372, 8
        %s374 = scalar_lea.vmem %s1, %s373
        %s375 = smul.u32 4, %s19
      $region60: #{tpu_custom_call.1} parent=51 // pred_fallthru
        _
    $region52: #{tpu_custom_call.1} parent=5 // pred_fallthru
      _
    %p376 = scmp.le.s32.totalorder 1, %s19
    %p377 = scmp.lt.s32.totalorder %s19, 3
    %p378 = pnand %p376, %p377
    %p379 = pneg %p378
    // Predicated region
    $region61: #{tpu_custom_call.1} parent=5 // pred_check
      _
    $region62: #{tpu_custom_call.1} parent=5 // pred_check_branch
      %381 = sbr.rel (%p378) target = $region64
    $region63: #{tpu_custom_call.1} parent=5 // pred_region
      %s382 = ssub.s32 %s19, 1
      %s383 = smul.u32 4, %s24
      %p384 = scmp.lt.s32.totalorder %s383, 7
      %s385 = scalar_select %p384, %s383, 7
      %s386 = smul.addr %s385, 8
      %s387 = scalar_lea.vmem %s0, %s386
      %p388 = pneg %p45
      %p389 = pneg %p42
      %s390 = smul.u32 4, %s24
      %p391 = scmp.lt.s32.totalorder %s390, 7
      %s392 = scalar_select %p391, %s390, 7
      %s393 = smul.addr %s392, 8
      %s394 = scalar_lea.vmem %s1, %s393
      %p395 = pneg %p71
      %p396 = pneg %p68
      %p397 = pneg %p92
      %p398 = pneg %p89
      %p399 = pneg %p113
      %p400 = pneg %p110
      %p401 = pneg %p134
      %p402 = pneg %p131
      %p403 = pneg %p155
      %p404 = pneg %p152
      %p405 = pneg %p176
      %p406 = pneg %p173
      %p407 = pneg %p197
      %p408 = pneg %p194
      %p409 = pneg %p218
      %p410 = pneg %p215
      %p411 = pneg %p239
      %p412 = pneg %p236
      %p413 = pneg %p260
      %p414 = pneg %p257
      %p415 = pneg %p286
      %p416 = pneg %p283
      %s417 = smul.u32 4, %s24
      %p418 = scmp.lt.s32.totalorder %s417, 7
      %s419 = scalar_select %p418, %s417, 7
      %s420 = smul.addr %s419, 8
      %s421 = scalar_lea.vmem %s11, %s420
      %p422 = pneg %p312
      %p423 = pneg %p309
      %s424 = smul.u32 4, %s24
      %p425 = scmp.lt.s32.totalorder %s424, 7
      %s426 = scalar_select %p425, %s424, 7
      %s427 = smul.addr %s426, 8
      %s428 = scalar_lea.vmem %s12, %s427
      %s429 = smul.u32 4, %s24
      %p430 = scmp.lt.s32.totalorder %s429, 7
      %s431 = scalar_select %p430, %s429, 7
      %s432 = smul.addr %s431, 8
      %s433 = scalar_lea.vmem %s0, %s432
      %s434 = smul.u32 4, %s24
      %s435 = smul.u32 4, %s24
      %p436 = scmp.lt.s32.totalorder %s435, 7
      %s437 = scalar_select %p436, %s435, 7
      %s438 = smul.addr %s437, 8
      %s439 = scalar_lea.vmem %s1, %s438
      %s440 = smul.u32 4, %s24
      %s441 = smul.u32 4, %s24
      %p442 = scmp.lt.s32.totalorder %s441, 7
      %s443 = scalar_select %p442, %s441, 7
      %s444 = smul.addr %s443, 8
      %s445 = scalar_lea.vmem %s11, %s444
      %s446 = smul.u32 4, %s24
      %s447 = smul.u32 4, %s24
      %p448 = scmp.lt.s32.totalorder %s447, 7
      %s449 = scalar_select %p448, %s447, 7
      %s450 = smul.addr %s449, 8
      %s451 = scalar_lea.vmem %s12, %s450
      %s452 = smul.u32 4, %s24
      %v453 = vld [vmem:[%s433] sm:$0xff]
      %v454 = vld [vmem:[%s433 + $0x8] sm:$0xff]
      %v455 = vld [vmem:[%s433 + $0x10] sm:$0xff]
      %v456 = vld [vmem:[%s433 + $0x18] sm:$0xff]
      %v457 = vld [vmem:[%s2] sm:$0xff]
      %v458 = vld [vmem:[%s5] sm:$0xff]
      %v459 = vld [vmem:[%s5 + $0x8] sm:$0xff]
      %v460 = vld [vmem:[%s5 + $0x10] sm:$0xff]
      %v461 = vld [vmem:[%s5 + $0x18] sm:$0xff]
      %v462 = vld [vmem:[%s6] sm:$0x1]
      %v463 = vld [vmem:[%s7] sm:$0xff]
      %v464 = vld [vmem:[%s7 + $0x8] sm:$0xff]
      %v465 = vld [vmem:[%s7 + $0x10] sm:$0xff]
      %v466 = vld [vmem:[%s7 + $0x18] sm:$0xff]
      %v467 = vld [vmem:[%s8] sm:$0x1]
      %v468 = vld [vmem:[%s9] sm:$0xff]
      %v469 = vld [vmem:[%s9 + $0x8] sm:$0xff]
      %v470 = vld [vmem:[%s9 + $0x10] sm:$0xff]
      %v471 = vld [vmem:[%s9 + $0x18] sm:$0xff]
      %v472 = vld [vmem:[%s10] sm:$0x1]
      %v473 = vld [vmem:[%s439] sm:$0xff]
      %v474 = vld [vmem:[%s439 + $0x8] sm:$0xff]
      %v475 = vld [vmem:[%s439 + $0x10] sm:$0xff]
      %v476 = vld [vmem:[%s439 + $0x18] sm:$0xff]
      %v477 = vld [vmem:[%s4] sm:$0xf]
      %v478 = vld [vmem:[%s3] sm:$0x1]
      %v480 = vlaneseq
      %v481 = vshrl.u32 %v480, 7
      %v482 = vsub.s32 0, %v481
      %v483 = vrot.slane %v478, %v482
      %vm485 = vcmask 31744
      %v487 = vsel %vm485, %v473, 0
      %v490 = vsel %vm485, %v474, 0
      %v493 = vsel %vm485, %v475, 0
      %v496 = vsel %vm485, %v476, 0
      %vm498 = vcmask 1043456
      %v500 = vsel %vm498, %v477, 0
      %502 = vmatprep.subr.mxu0 0.0
      %503 = vmatpush1.msra.mxu0 %v500
      %504 = vmatprep.subr.mxu0 0.0
      %505 = vmatpush1.msra.mxu0 0.0
      %506 = vmatprep.subr.mxu0 0.0
      %507 = vmatpush1.msra.mxu0 0.0
      %508 = vmatprep.subr.mxu0 0.0
      %509 = vmatpush1.msra.mxu0 0.0
      %510 = vmatprep.subr.mxu0 0.0
      %511 = vmatpush1.msra.mxu0 0.0
      %512 = vmatprep.subr.mxu0 0.0
      %513 = vmatpush1.msra.mxu0 0.0
      %514 = vmatprep.subr.mxu0 0.0
      %515 = vmatpush1.msra.mxu0 0.0
      %516 = vmatprep.subr.mxu0 0.0
      %517 = vmatpush1.msra.mxu0 0.0
      %518 = vmatprep.subr.mxu0 0.0
      %519 = vmatpush1.msra.mxu0 0.0
      %520 = vmatprep.subr.mxu0 0.0
      %521 = vmatpush1.msra.mxu0 0.0
      %522 = vmatprep.subr.mxu0 0.0
      %523 = vmatpush1.msra.mxu0 0.0
      %524 = vmatprep.subr.mxu0 0.0
      %525 = vmatpush1.msra.mxu0 0.0
      %526 = vmatprep.subr.mxu0 0.0
      %527 = vmatpush1.msra.mxu0 0.0
      %528 = vmatprep.subr.mxu0 0.0
      %529 = vmatpush1.msra.mxu0 0.0
      %530 = vmatprep.subr.mxu0 0.0
      %531 = vmatpush1.msra.mxu0 0.0
      %532 = vmatprep.subr.mxu0 0.0
      %533 = vmatpush1.msra.mxu0 0.0
      %534 = vmatprep.subr.mxu0 0.0
      %535 = vmatpush1.msra.mxu0 0.0
      %536 = vmatprep.subr.mxu0 0.0
      %537 = vmatpush1.msra.mxu0 0.0
      %538 = vmatprep.subr.mxu0 0.0
      %539 = vmatpush1.msra.mxu0 0.0
      %540 = vmatprep.subr.mxu0 0.0
      %541 = vmatpush1.msra.mxu0 0.0
      %542 = vmatprep.subr.mxu0 0.0
      %543 = vmatpush1.msra.mxu0 0.0
      %544 = vmatprep.subr.mxu0 0.0
      %545 = vmatpush1.msra.mxu0 0.0
      %546 = vmatprep.subr.mxu0 0.0
      %547 = vmatpush1.msra.mxu0 0.0
      %548 = vmatprep.subr.mxu0 0.0
      %549 = vmatpush1.msra.mxu0 0.0
      %550 = vmatprep.subr.mxu0 0.0
      %551 = vmatpush1.msra.mxu0 0.0
      %552 = vmatprep.subr.mxu0 0.0
      %553 = vmatpush1.msra.mxu0 0.0
      %554 = vmatprep.subr.mxu0 0.0
      %555 = vmatpush1.msra.mxu0 0.0
      %556 = vmatprep.subr.mxu0 0.0
      %557 = vmatpush1.msra.mxu0 0.0
      %558 = vmatprep.subr.mxu0 0.0
      %559 = vmatpush1.msra.mxu0 0.0
      %560 = vmatprep.subr.mxu0 0.0
      %561 = vmatpush1.msra.mxu0 0.0
      %562 = vmatprep.subr.mxu0 0.0
      %563 = vmatpush1.msra.mxu0 0.0
      %564 = vmatprep.subr.mxu0 0.0
      %565 = vmatpush1.msra.mxu0 0.0
      %566 = vmatprep.mubr.f32.mxu0 0.0
      %567 = vmatmul.mubr.f32.gmra.mrb[0].mxu0 %v487
      %v568 = vpop.f32.mrb[0].mxu0
      %v569 = vadd.f32 %v483, %v568
      %v570 = vpop.f32.mrb[0].mxu0
      %571 = vmatprep.mubr.f32.mxu0 0.0
      %572 = vmatmul.mubr.f32.gmra.mrb[0].mxu0 %v490
      %v573 = vpop.f32.mrb[0].mxu0
      %v574 = vadd.f32 %v483, %v573
      %v575 = vpop.f32.mrb[0].mxu0
      %576 = vmatprep.mubr.f32.mxu0 0.0
      %577 = vmatmul.mubr.f32.gmra.mrb[0].mxu0 %v493
      %v578 = vpop.f32.mrb[0].mxu0
      %v579 = vadd.f32 %v483, %v578
      %v580 = vpop.f32.mrb[0].mxu0
      %581 = vmatprep.mubr.f32.mxu0 0.0
      %582 = vmatmul.mubr.f32.gmra.mrb[0].mxu0 %v496
      %v583 = vpop.f32.mrb[0].mxu0
      %v584 = vadd.f32 %v483, %v583
      %v585 = vpop.f32.mrb[0].mxu0
      %586 = vdwg.mxu0
      %v587 = vlaneseq
      %v588 = vand.u32 %v587, 127
      %vm589 = vcmask 64512
      %590 = vst.msk [vmem:[#allocation2] sm:$0xff] %vm589, 0.0
      %591 = vst.msk [vmem:[#allocation2 + $0x8] sm:$0xff] %vm589, 0.0
      %592 = vst.msk [vmem:[#allocation2 + $0x10] sm:$0xff] %vm589, 0.0
      %593 = vst.msk [vmem:[#allocation2 + $0x18] sm:$0xff] %vm589, 0.0
      %v594 = vld [vmem:[#allocation2] sm:$0xff]
      %v595 = vld [vmem:[#allocation2 + $0x8] sm:$0xff]
      %v596 = vld [vmem:[#allocation2 + $0x10] sm:$0xff]
      %v597 = vld [vmem:[#allocation2 + $0x18] sm:$0xff]
      %v599 = vsel %vm589, %v594, 0
      %v602 = vsel %vm589, %v595, 0
      %v605 = vsel %vm589, %v596, 0
      %v608 = vsel %vm589, %v597, 0
      %610 = vmatprep.subr.mxu0 0.0
      %611 = vmatpush1.msra.mxu0 %v457
      %612 = vmatprep.subr.mxu0 0.0
      %613 = vmatpush1.msra.mxu0 0.0
      %614 = vmatprep.subr.mxu0 0.0
      %615 = vmatpush1.msra.mxu0 0.0
      %616 = vmatprep.subr.mxu0 0.0
      %617 = vmatpush1.msra.mxu0 0.0
      %618 = vmatprep.subr.mxu0 0.0
      %619 = vmatpush1.msra.mxu0 0.0
      %620 = vmatprep.subr.mxu0 0.0
      %621 = vmatpush1.msra.mxu0 0.0
      %622 = vmatprep.subr.mxu0 0.0
      %623 = vmatpush1.msra.mxu0 0.0
      %624 = vmatprep.subr.mxu0 0.0
      %625 = vmatpush1.msra.mxu0 0.0
      %626 = vmatprep.subr.mxu0 0.0
      %627 = vmatpush1.msra.mxu0 0.0
      %628 = vmatprep.subr.mxu0 0.0
      %629 = vmatpush1.msra.mxu0 0.0
      %630 = vmatprep.subr.mxu0 0.0
      %631 = vmatpush1.msra.mxu0 0.0
      %632 = vmatprep.subr.mxu0 0.0
      %633 = vmatpush1.msra.mxu0 0.0
      %634 = vmatprep.subr.mxu0 0.0
      %635 = vmatpush1.msra.mxu0 0.0
      %636 = vmatprep.subr.mxu0 0.0
      %637 = vmatpush1.msra.mxu0 0.0
      %638 = vmatprep.subr.mxu0 0.0
      %639 = vmatpush1.msra.mxu0 0.0
      %640 = vmatprep.subr.mxu0 0.0
      %641 = vmatpush1.msra.mxu0 0.0
      %642 = vmatprep.subr.mxu0 0.0
      %643 = vmatpush1.msra.mxu0 0.0
      %644 = vmatprep.subr.mxu0 0.0
      %645 = vmatpush1.msra.mxu0 0.0
      %646 = vmatprep.subr.mxu0 0.0
      %647 = vmatpush1.msra.mxu0 0.0
      %648 = vmatprep.subr.mxu0 0.0
      %649 = vmatpush1.msra.mxu0 0.0
      %650 = vmatprep.subr.mxu0 0.0
      %651 = vmatpush1.msra.mxu0 0.0
      %652 = vmatprep.subr.mxu0 0.0
      %653 = vmatpush1.msra.mxu0 0.0
      %654 = vmatprep.subr.mxu0 0.0
      %655 = vmatpush1.msra.mxu0 0.0
      %656 = vmatprep.subr.mxu0 0.0
      %657 = vmatpush1.msra.mxu0 0.0
      %658 = vmatprep.subr.mxu0 0.0
      %659 = vmatpush1.msra.mxu0 0.0
      %660 = vmatprep.subr.mxu0 0.0
      %661 = vmatpush1.msra.mxu0 0.0
      %662 = vmatprep.subr.mxu0 0.0
      %663 = vmatpush1.msra.mxu0 0.0
      %664 = vmatprep.subr.mxu0 0.0
      %665 = vmatpush1.msra.mxu0 0.0
      %666 = vmatprep.subr.mxu0 0.0
      %667 = vmatpush1.msra.mxu0 0.0
      %668 = vmatprep.subr.mxu0 0.0
      %669 = vmatpush1.msra.mxu0 0.0
      %670 = vmatprep.subr.mxu0 0.0
      %671 = vmatpush1.msra.mxu0 0.0
      %672 = vmatprep.subr.mxu0 0.0
      %673 = vmatpush1.msra.mxu0 0.0
      %674 = vmatprep.mubr.f32.mxu0 0.0
      %675 = vmatmul.mubr.f32.gmra.mrb[0].mxu0 %v599
      %v676 = vpop.f32.mrb[0].mxu0
      %v677 = vadd.f32 %v569, %v676
      %v678 = vpop.f32.mrb[0].mxu0
      %679 = vmatprep.mubr.f32.mxu0 0.0
      %680 = vmatmul.mubr.f32.gmra.mrb[0].mxu0 %v602
      %v681 = vpop.f32.mrb[0].mxu0
      %v682 = vadd.f32 %v574, %v681
      %v683 = vpop.f32.mrb[0].mxu0
      %684 = vmatprep.mubr.f32.mxu0 0.0
      %685 = vmatmul.mubr.f32.gmra.mrb[0].mxu0 %v605
      %v686 = vpop.f32.mrb[0].mxu0
      %v687 = vadd.f32 %v579, %v686
      %v688 = vpop.f32.mrb[0].mxu0
      %689 = vmatprep.mubr.f32.mxu0 0.0
      %690 = vmatmul.mubr.f32.gmra.mrb[0].mxu0 %v608
      %v691 = vpop.f32.mrb[0].mxu0
      %v692 = vadd.f32 %v584, %v691
      %v693 = vpop.f32.mrb[0].mxu0
      %694 = vdwg.mxu0
      %v695 = vmax.f32 %v677, 0.0
      %v696 = vmax.f32 %v682, 0.0
      %v697 = vmax.f32 %v687, 0.0
      %v698 = vmax.f32 %v692, 0.0
      %v700 = vlaneseq
      %v701 = vshrl.u32 %v700, 7
      %v702 = vsub.s32 0, %v701
      %v703 = vrot.slane %v462, %v702
      %vm705 = vcmask 261120
      %v707 = vsel %vm705, %v695, 0
      %v710 = vsel %vm705, %v696, 0
      %v713 = vsel %vm705, %v697, 0
      %v716 = vsel %vm705, %v698, 0
      %718 = vmatprep.subr.mxu0 0.0
      %719 = vmatpush1.msra.mxu0 %v458
      %720 = vmatprep.subr.mxu0 0.0
      %721 = vmatpush1.msra.mxu0 %v459
      %722 = vmatprep.subr.mxu0 0.0
      %723 = vmatpush1.msra.mxu0 %v460
      %724 = vmatprep.subr.mxu0 0.0
      %725 = vmatpush1.msra.mxu0 %v461
      %726 = vmatprep.subr.mxu0 0.0
      %727 = vmatpush1.msra.mxu0 0.0
      %728 = vmatprep.subr.mxu0 0.0
      %729 = vmatpush1.msra.mxu0 0.0
      %730 = vmatprep.subr.mxu0 0.0
      %731 = vmatpush1.msra.mxu0 0.0
      %732 = vmatprep.subr.mxu0 0.0
      %733 = vmatpush1.msra.mxu0 0.0
      %734 = vmatprep.subr.mxu0 0.0
      %735 = vmatpush1.msra.mxu0 0.0
      %736 = vmatprep.subr.mxu0 0.0
      %737 = vmatpush1.msra.mxu0 0.0
      %738 = vmatprep.subr.mxu0 0.0
      %739 = vmatpush1.msra.mxu0 0.0
      %740 = vmatprep.subr.mxu0 0.0
      %741 = vmatpush1.msra.mxu0 0.0
      %742 = vmatprep.subr.mxu0 0.0
      %743 = vmatpush1.msra.mxu0 0.0
      %744 = vmatprep.subr.mxu0 0.0
      %745 = vmatpush1.msra.mxu0 0.0
      %746 = vmatprep.subr.mxu0 0.0
      %747 = vmatpush1.msra.mxu0 0.0
      %748 = vmatprep.subr.mxu0 0.0
      %749 = vmatpush1.msra.mxu0 0.0
      %750 = vmatprep.subr.mxu0 0.0
      %751 = vmatpush1.msra.mxu0 0.0
      %752 = vmatprep.subr.mxu0 0.0
      %753 = vmatpush1.msra.mxu0 0.0
      %754 = vmatprep.subr.mxu0 0.0
      %755 = vmatpush1.msra.mxu0 0.0
      %756 = vmatprep.subr.mxu0 0.0
      %757 = vmatpush1.msra.mxu0 0.0
      %758 = vmatprep.subr.mxu0 0.0
      %759 = vmatpush1.msra.mxu0 0.0
      %760 = vmatprep.subr.mxu0 0.0
      %761 = vmatpush1.msra.mxu0 0.0
      %762 = vmatprep.subr.mxu0 0.0
      %763 = vmatpush1.msra.mxu0 0.0
      %764 = vmatprep.subr.mxu0 0.0
      %765 = vmatpush1.msra.mxu0 0.0
      %766 = vmatprep.subr.mxu0 0.0
      %767 = vmatpush1.msra.mxu0 0.0
      %768 = vmatprep.subr.mxu0 0.0
      %769 = vmatpush1.msra.mxu0 0.0
      %770 = vmatprep.subr.mxu0 0.0
      %771 = vmatpush1.msra.mxu0 0.0
      %772 = vmatprep.subr.mxu0 0.0
      %773 = vmatpush1.msra.mxu0 0.0
      %774 = vmatprep.subr.mxu0 0.0
      %775 = vmatpush1.msra.mxu0 0.0
      %776 = vmatprep.subr.mxu0 0.0
      %777 = vmatpush1.msra.mxu0 0.0
      %778 = vmatprep.subr.mxu0 0.0
      %779 = vmatpush1.msra.mxu0 0.0
      %780 = vmatprep.subr.mxu0 0.0
      %781 = vmatpush1.msra.mxu0 0.0
      %782 = vmatprep.mubr.f32.mxu0 0.0
      %783 = vmatmul.mubr.f32.gmra.mrb[0].mxu0 %v707
      %v784 = vpop.f32.mrb[0].mxu0
      %v785 = vadd.f32 %v703, %v784
      %v786 = vpop.f32.mrb[0].mxu0
      %787 = vmatprep.mubr.f32.mxu0 0.0
      %788 = vmatmul.mubr.f32.gmra.mrb[0].mxu0 %v710
      %v789 = vpop.f32.mrb[0].mxu0
      %v790 = vadd.f32 %v703, %v789
      %v791 = vpop.f32.mrb[0].mxu0
      %792 = vmatprep.mubr.f32.mxu0 0.0
      %793 = vmatmul.mubr.f32.gmra.mrb[0].mxu0 %v713
      %v794 = vpop.f32.mrb[0].mxu0
      %v795 = vadd.f32 %v703, %v794
      %v796 = vpop.f32.mrb[0].mxu0
      %797 = vmatprep.mubr.f32.mxu0 0.0
      %798 = vmatmul.mubr.f32.gmra.mrb[0].mxu0 %v716
      %v799 = vpop.f32.mrb[0].mxu0
      %v800 = vadd.f32 %v703, %v799
      %v801 = vpop.f32.mrb[0].mxu0
      %802 = vdwg.mxu0
      %v803 = vmax.f32 %v785, 0.0
      %v804 = vmax.f32 %v790, 0.0
      %v805 = vmax.f32 %v795, 0.0
      %v806 = vmax.f32 %v800, 0.0
      %v808 = vlaneseq
      %v809 = vshrl.u32 %v808, 7
      %v810 = vsub.s32 0, %v809
      %v811 = vrot.slane %v467, %v810
      %v814 = vsel %vm705, %v803, 0
      %v817 = vsel %vm705, %v804, 0
      %v820 = vsel %vm705, %v805, 0
      %v823 = vsel %vm705, %v806, 0
      %825 = vmatprep.subr.mxu0 0.0
      %826 = vmatpush1.msra.mxu0 %v463
      %827 = vmatprep.subr.mxu0 0.0
      %828 = vmatpush1.msra.mxu0 %v464
      %829 = vmatprep.subr.mxu0 0.0
      %830 = vmatpush1.msra.mxu0 %v465
      %831 = vmatprep.subr.mxu0 0.0
      %832 = vmatpush1.msra.mxu0 %v466
      %833 = vmatprep.subr.mxu0 0.0
      %834 = vmatpush1.msra.mxu0 0.0
      %835 = vmatprep.subr.mxu0 0.0
      %836 = vmatpush1.msra.mxu0 0.0
      %837 = vmatprep.subr.mxu0 0.0
      %838 = vmatpush1.msra.mxu0 0.0
      %839 = vmatprep.subr.mxu0 0.0
      %840 = vmatpush1.msra.mxu0 0.0
      %841 = vmatprep.subr.mxu0 0.0
      %842 = vmatpush1.msra.mxu0 0.0
      %843 = vmatprep.subr.mxu0 0.0
      %844 = vmatpush1.msra.mxu0 0.0
      %845 = vmatprep.subr.mxu0 0.0
      %846 = vmatpush1.msra.mxu0 0.0
      %847 = vmatprep.subr.mxu0 0.0
      %848 = vmatpush1.msra.mxu0 0.0
      %849 = vmatprep.subr.mxu0 0.0
      %850 = vmatpush1.msra.mxu0 0.0
      %851 = vmatprep.subr.mxu0 0.0
      %852 = vmatpush1.msra.mxu0 0.0
      %853 = vmatprep.subr.mxu0 0.0
      %854 = vmatpush1.msra.mxu0 0.0
      %855 = vmatprep.subr.mxu0 0.0
      %856 = vmatpush1.msra.mxu0 0.0
      %857 = vmatprep.subr.mxu0 0.0
      %858 = vmatpush1.msra.mxu0 0.0
      %859 = vmatprep.subr.mxu0 0.0
      %860 = vmatpush1.msra.mxu0 0.0
      %861 = vmatprep.subr.mxu0 0.0
      %862 = vmatpush1.msra.mxu0 0.0
      %863 = vmatprep.subr.mxu0 0.0
      %864 = vmatpush1.msra.mxu0 0.0
      %865 = vmatprep.subr.mxu0 0.0
      %866 = vmatpush1.msra.mxu0 0.0
      %867 = vmatprep.subr.mxu0 0.0
      %868 = vmatpush1.msra.mxu0 0.0
      %869 = vmatprep.subr.mxu0 0.0
      %870 = vmatpush1.msra.mxu0 0.0
      %871 = vmatprep.subr.mxu0 0.0
      %872 = vmatpush1.msra.mxu0 0.0
      %873 = vmatprep.subr.mxu0 0.0
      %874 = vmatpush1.msra.mxu0 0.0
      %875 = vmatprep.subr.mxu0 0.0
      %876 = vmatpush1.msra.mxu0 0.0
      %877 = vmatprep.subr.mxu0 0.0
      %878 = vmatpush1.msra.mxu0 0.0
      %879 = vmatprep.subr.mxu0 0.0
      %880 = vmatpush1.msra.mxu0 0.0
      %881 = vmatprep.subr.mxu0 0.0
      %882 = vmatpush1.msra.mxu0 0.0
      %883 = vmatprep.subr.mxu0 0.0
      %884 = vmatpush1.msra.mxu0 0.0
      %885 = vmatprep.subr.mxu0 0.0
      %886 = vmatpush1.msra.mxu0 0.0
      %887 = vmatprep.subr.mxu0 0.0
      %888 = vmatpush1.msra.mxu0 0.0
      %889 = vmatprep.mubr.f32.mxu0 0.0
      %890 = vmatmul.mubr.f32.gmra.mrb[0].mxu0 %v814
      %v891 = vpop.f32.mrb[0].mxu0
      %v892 = vadd.f32 %v811, %v891
      %v893 = vpop.f32.mrb[0].mxu0
      %894 = vmatprep.mubr.f32.mxu0 0.0
      %895 = vmatmul.mubr.f32.gmra.mrb[0].mxu0 %v817
      %v896 = vpop.f32.mrb[0].mxu0
      %v897 = vadd.f32 %v811, %v896
      %v898 = vpop.f32.mrb[0].mxu0
      %899 = vmatprep.mubr.f32.mxu0 0.0
      %900 = vmatmul.mubr.f32.gmra.mrb[0].mxu0 %v820
      %v901 = vpop.f32.mrb[0].mxu0
      %v902 = vadd.f32 %v811, %v901
      %v903 = vpop.f32.mrb[0].mxu0
      %904 = vmatprep.mubr.f32.mxu0 0.0
      %905 = vmatmul.mubr.f32.gmra.mrb[0].mxu0 %v823
      %v906 = vpop.f32.mrb[0].mxu0
      %v907 = vadd.f32 %v811, %v906
      %v908 = vpop.f32.mrb[0].mxu0
      %909 = vdwg.mxu0
      %v911 = vlaneseq
      %v912 = vshrl.u32 %v911, 7
      %v913 = vsub.s32 0, %v912
      %v914 = vrot.slane %v472, %v913
      %916 = vmatprep.subr.mxu0 0.0
      %917 = vmatpush1.msra.mxu0 %v468
      %918 = vmatprep.subr.mxu0 0.0
      %919 = vmatpush1.msra.mxu0 %v469
      %920 = vmatprep.subr.mxu0 0.0
      %921 = vmatpush1.msra.mxu0 %v470
      %922 = vmatprep.subr.mxu0 0.0
      %923 = vmatpush1.msra.mxu0 %v471
      %924 = vmatprep.subr.mxu0 0.0
      %925 = vmatpush1.msra.mxu0 0.0
      %926 = vmatprep.subr.mxu0 0.0
      %927 = vmatpush1.msra.mxu0 0.0
      %928 = vmatprep.subr.mxu0 0.0
      %929 = vmatpush1.msra.mxu0 0.0
      %930 = vmatprep.subr.mxu0 0.0
      %931 = vmatpush1.msra.mxu0 0.0
      %932 = vmatprep.subr.mxu0 0.0
      %933 = vmatpush1.msra.mxu0 0.0
      %934 = vmatprep.subr.mxu0 0.0
      %935 = vmatpush1.msra.mxu0 0.0
      %936 = vmatprep.subr.mxu0 0.0
      %937 = vmatpush1.msra.mxu0 0.0
      %938 = vmatprep.subr.mxu0 0.0
      %939 = vmatpush1.msra.mxu0 0.0
      %940 = vmatprep.subr.mxu0 0.0
      %941 = vmatpush1.msra.mxu0 0.0
      %942 = vmatprep.subr.mxu0 0.0
      %943 = vmatpush1.msra.mxu0 0.0
      %944 = vmatprep.subr.mxu0 0.0
      %945 = vmatpush1.msra.mxu0 0.0
      %946 = vmatprep.subr.mxu0 0.0
      %947 = vmatpush1.msra.mxu0 0.0
      %948 = vmatprep.subr.mxu0 0.0
      %949 = vmatpush1.msra.mxu0 0.0
      %950 = vmatprep.subr.mxu0 0.0
      %951 = vmatpush1.msra.mxu0 0.0
      %952 = vmatprep.subr.mxu0 0.0
      %953 = vmatpush1.msra.mxu0 0.0
      %954 = vmatprep.subr.mxu0 0.0
      %955 = vmatpush1.msra.mxu0 0.0
      %956 = vmatprep.subr.mxu0 0.0
      %957 = vmatpush1.msra.mxu0 0.0
      %958 = vmatprep.subr.mxu0 0.0
      %959 = vmatpush1.msra.mxu0 0.0
      %960 = vmatprep.subr.mxu0 0.0
      %961 = vmatpush1.msra.mxu0 0.0
      %962 = vmatprep.subr.mxu0 0.0
      %963 = vmatpush1.msra.mxu0 0.0
      %964 = vmatprep.subr.mxu0 0.0
      %965 = vmatpush1.msra.mxu0 0.0
      %966 = vmatprep.subr.mxu0 0.0
      %967 = vmatpush1.msra.mxu0 0.0
      %968 = vmatprep.subr.mxu0 0.0
      %969 = vmatpush1.msra.mxu0 0.0
      %970 = vmatprep.subr.mxu0 0.0
      %971 = vmatpush1.msra.mxu0 0.0
      %972 = vmatprep.subr.mxu0 0.0
      %973 = vmatpush1.msra.mxu0 0.0
      %974 = vmatprep.subr.mxu0 0.0
      %975 = vmatpush1.msra.mxu0 0.0
      %976 = vmatprep.subr.mxu0 0.0
      %977 = vmatpush1.msra.mxu0 0.0
      %978 = vmatprep.subr.mxu0 0.0
      %979 = vmatpush1.msra.mxu0 0.0
      %980 = vmatprep.mubr.f32.mxu0 0.0
      %981 = vmatmul.mubr.f32.gmra.mrb[0].mxu0 %v814
      %v982 = vpop.f32.mrb[0].mxu0
      %v983 = vadd.f32 %v914, %v982
      %v984 = vpop.f32.mrb[0].mxu0
      %985 = vmatprep.mubr.f32.mxu0 0.0
      %986 = vmatmul.mubr.f32.gmra.mrb[0].mxu0 %v817
      %v987 = vpop.f32.mrb[0].mxu0
      %v988 = vadd.f32 %v914, %v987
      %v989 = vpop.f32.mrb[0].mxu0
      %990 = vmatprep.mubr.f32.mxu0 0.0
      %991 = vmatmul.mubr.f32.gmra.mrb[0].mxu0 %v820
      %v992 = vpop.f32.mrb[0].mxu0
      %v993 = vadd.f32 %v914, %v992
      %v994 = vpop.f32.mrb[0].mxu0
      %995 = vmatprep.mubr.f32.mxu0 0.0
      %996 = vmatmul.mubr.f32.gmra.mrb[0].mxu0 %v823
      %v997 = vpop.f32.mrb[0].mxu0
      %v998 = vadd.f32 %v914, %v997
      %v999 = vpop.f32.mrb[0].mxu0
      %1000 = vdwg.mxu0
      %vm1001 = vcmp.eq.s32.totalorder %v588, 0
      %v1002 = vmul.f32 %v983, 1.442695
      %v1003 = vpow.pop %v1002
      %v1004 = vmul.f32 %v988, 1.442695
      %v1005 = vpow.pop %v1004
      %v1006 = vmul.f32 %v993, 1.442695
      %v1007 = vpow.pop %v1006
      %v1008 = vmul.f32 %v998, 1.442695
      %v1009 = vpow.pop %v1008
      %v1010 = vmul.f32 %v453, %v1003
      %v1011 = vmul.f32 %v454, %v1005
      %v1012 = vmul.f32 %v455, %v1007
      %v1013 = vmul.f32 %v456, %v1009
      %v1014 = vadd.f32 %v1010, %v892
      %v1015 = vadd.f32 %v1011, %v897
      %v1016 = vadd.f32 %v1012, %v902
      %v1017 = vadd.f32 %v1013, %v907
      %v1018 = vsel %vm1001, %v1014, %v594
      %v1019 = vsel %vm1001, %v1015, %v595
      %v1020 = vsel %vm1001, %v1016, %v596
      %v1021 = vsel %vm1001, %v1017, %v597
      %1022 = vst.msk [vmem:[#allocation2] sm:$0xff] %vm589, %v1018
      %1023 = vst.msk [vmem:[#allocation2 + $0x8] sm:$0xff] %vm589, %v1019
      %1024 = vst.msk [vmem:[#allocation2 + $0x10] sm:$0xff] %vm589, %v1020
      %1025 = vst.msk [vmem:[#allocation2 + $0x18] sm:$0xff] %vm589, %v1021
      %v1026 = vld [vmem:[#allocation2] sm:$0xff]
      %v1027 = vld [vmem:[#allocation2 + $0x8] sm:$0xff]
      %v1028 = vld [vmem:[#allocation2 + $0x10] sm:$0xff]
      %v1029 = vld [vmem:[#allocation2 + $0x18] sm:$0xff]
      %v1031 = vsel %vm589, %v1026, 0
      %v1034 = vsel %vm589, %v1027, 0
      %v1037 = vsel %vm589, %v1028, 0
      %v1040 = vsel %vm589, %v1029, 0
      %1042 = vmatprep.subr.mxu0 0.0
      %1043 = vmatpush1.msra.mxu0 %v457
      %1044 = vmatprep.subr.mxu0 0.0
      %1045 = vmatpush1.msra.mxu0 0.0
      %1046 = vmatprep.subr.mxu0 0.0
      %1047 = vmatpush1.msra.mxu0 0.0
      %1048 = vmatprep.subr.mxu0 0.0
      %1049 = vmatpush1.msra.mxu0 0.0
      %1050 = vmatprep.subr.mxu0 0.0
      %1051 = vmatpush1.msra.mxu0 0.0
      %1052 = vmatprep.subr.mxu0 0.0
      %1053 = vmatpush1.msra.mxu0 0.0
      %1054 = vmatprep.subr.mxu0 0.0
      %1055 = vmatpush1.msra.mxu0 0.0
      %1056 = vmatprep.subr.mxu0 0.0
      %1057 = vmatpush1.msra.mxu0 0.0
      %1058 = vmatprep.subr.mxu0 0.0
      %1059 = vmatpush1.msra.mxu0 0.0
      %1060 = vmatprep.subr.mxu0 0.0
      %1061 = vmatpush1.msra.mxu0 0.0
      %1062 = vmatprep.subr.mxu0 0.0
      %1063 = vmatpush1.msra.mxu0 0.0
      %1064 = vmatprep.subr.mxu0 0.0
      %1065 = vmatpush1.msra.mxu0 0.0
      %1066 = vmatprep.subr.mxu0 0.0
      %1067 = vmatpush1.msra.mxu0 0.0
      %1068 = vmatprep.subr.mxu0 0.0
      %1069 = vmatpush1.msra.mxu0 0.0
      %1070 = vmatprep.subr.mxu0 0.0
      %1071 = vmatpush1.msra.mxu0 0.0
      %1072 = vmatprep.subr.mxu0 0.0
      %1073 = vmatpush1.msra.mxu0 0.0
      %1074 = vmatprep.subr.mxu0 0.0
      %1075 = vmatpush1.msra.mxu0 0.0
      %1076 = vmatprep.subr.mxu0 0.0
      %1077 = vmatpush1.msra.mxu0 0.0
      %1078 = vmatprep.subr.mxu0 0.0
      %1079 = vmatpush1.msra.mxu0 0.0
      %1080 = vmatprep.subr.mxu0 0.0
      %1081 = vmatpush1.msra.mxu0 0.0
      %1082 = vmatprep.subr.mxu0 0.0
      %1083 = vmatpush1.msra.mxu0 0.0
      %1084 = vmatprep.subr.mxu0 0.0
      %1085 = vmatpush1.msra.mxu0 0.0
      %1086 = vmatprep.subr.mxu0 0.0
      %1087 = vmatpush1.msra.mxu0 0.0
      %1088 = vmatprep.subr.mxu0 0.0
      %1089 = vmatpush1.msra.mxu0 0.0
      %1090 = vmatprep.subr.mxu0 0.0
      %1091 = vmatpush1.msra.mxu0 0.0
      %1092 = vmatprep.subr.mxu0 0.0
      %1093 = vmatpush1.msra.mxu0 0.0
      %1094 = vmatprep.subr.mxu0 0.0
      %1095 = vmatpush1.msra.mxu0 0.0
      %1096 = vmatprep.subr.mxu0 0.0
      %1097 = vmatpush1.msra.mxu0 0.0
      %1098 = vmatprep.subr.mxu0 0.0
      %1099 = vmatpush1.msra.mxu0 0.0
      %1100 = vmatprep.subr.mxu0 0.0
      %1101 = vmatpush1.msra.mxu0 0.0
      %1102 = vmatprep.subr.mxu0 0.0
      %1103 = vmatpush1.msra.mxu0 0.0
      %1104 = vmatprep.subr.mxu0 0.0
      %1105 = vmatpush1.msra.mxu0 0.0
      %1106 = vmatprep.mubr.f32.mxu0 0.0
      %1107 = vmatmul.mubr.f32.gmra.mrb[0].mxu0 %v1031
      %v1108 = vpop.f32.mrb[0].mxu0
      %v1109 = vadd.f32 %v569, %v1108
      %v1110 = vpop.f32.mrb[0].mxu0
      %1111 = vmatprep.mubr.f32.mxu0 0.0
      %1112 = vmatmul.mubr.f32.gmra.mrb[0].mxu0 %v1034
      %v1113 = vpop.f32.mrb[0].mxu0
      %v1114 = vadd.f32 %v574, %v1113
      %v1115 = vpop.f32.mrb[0].mxu0
      %1116 = vmatprep.mubr.f32.mxu0 0.0
      %1117 = vmatmul.mubr.f32.gmra.mrb[0].mxu0 %v1037
      %v1118 = vpop.f32.mrb[0].mxu0
      %v1119 = vadd.f32 %v579, %v1118
      %v1120 = vpop.f32.mrb[0].mxu0
      %1121 = vmatprep.mubr.f32.mxu0 0.0
      %1122 = vmatmul.mubr.f32.gmra.mrb[0].mxu0 %v1040
      %v1123 = vpop.f32.mrb[0].mxu0
      %v1124 = vadd.f32 %v584, %v1123
      %v1125 = vpop.f32.mrb[0].mxu0
      %1126 = vdwg.mxu0
      %v1127 = vmax.f32 %v1109, 0.0
      %v1128 = vmax.f32 %v1114, 0.0
      %v1129 = vmax.f32 %v1119, 0.0
      %v1130 = vmax.f32 %v1124, 0.0
      %v1132 = vsel %vm705, %v1127, 0
      %v1135 = vsel %vm705, %v1128, 0
      %v1138 = vsel %vm705, %v1129, 0
      %v1141 = vsel %vm705, %v1130, 0
      %1143 = vmatprep.subr.mxu0 0.0
      %1144 = vmatpush1.msra.mxu0 %v458
      %1145 = vmatprep.subr.mxu0 0.0
      %1146 = vmatpush1.msra.mxu0 %v459
      %1147 = vmatprep.subr.mxu0 0.0
      %1148 = vmatpush1.msra.mxu0 %v460
      %1149 = vmatprep.subr.mxu0 0.0
      %1150 = vmatpush1.msra.mxu0 %v461
      %1151 = vmatprep.subr.mxu0 0.0
      %1152 = vmatpush1.msra.mxu0 0.0
      %1153 = vmatprep.subr.mxu0 0.0
      %1154 = vmatpush1.msra.mxu0 0.0
      %1155 = vmatprep.subr.mxu0 0.0
      %1156 = vmatpush1.msra.mxu0 0.0
      %1157 = vmatprep.subr.mxu0 0.0
      %1158 = vmatpush1.msra.mxu0 0.0
      %1159 = vmatprep.subr.mxu0 0.0
      %1160 = vmatpush1.msra.mxu0 0.0
      %1161 = vmatprep.subr.mxu0 0.0
      %1162 = vmatpush1.msra.mxu0 0.0
      %1163 = vmatprep.subr.mxu0 0.0
      %1164 = vmatpush1.msra.mxu0 0.0
      %1165 = vmatprep.subr.mxu0 0.0
      %1166 = vmatpush1.msra.mxu0 0.0
      %1167 = vmatprep.subr.mxu0 0.0
      %1168 = vmatpush1.msra.mxu0 0.0
      %1169 = vmatprep.subr.mxu0 0.0
      %1170 = vmatpush1.msra.mxu0 0.0
      %1171 = vmatprep.subr.mxu0 0.0
      %1172 = vmatpush1.msra.mxu0 0.0
      %1173 = vmatprep.subr.mxu0 0.0
      %1174 = vmatpush1.msra.mxu0 0.0
      %1175 = vmatprep.subr.mxu0 0.0
      %1176 = vmatpush1.msra.mxu0 0.0
      %1177 = vmatprep.subr.mxu0 0.0
      %1178 = vmatpush1.msra.mxu0 0.0
      %1179 = vmatprep.subr.mxu0 0.0
      %1180 = vmatpush1.msra.mxu0 0.0
      %1181 = vmatprep.subr.mxu0 0.0
      %1182 = vmatpush1.msra.mxu0 0.0
      %1183 = vmatprep.subr.mxu0 0.0
      %1184 = vmatpush1.msra.mxu0 0.0
      %1185 = vmatprep.subr.mxu0 0.0
      %1186 = vmatpush1.msra.mxu0 0.0
      %1187 = vmatprep.subr.mxu0 0.0
      %1188 = vmatpush1.msra.mxu0 0.0
      %1189 = vmatprep.subr.mxu0 0.0
      %1190 = vmatpush1.msra.mxu0 0.0
      %1191 = vmatprep.subr.mxu0 0.0
      %1192 = vmatpush1.msra.mxu0 0.0
      %1193 = vmatprep.subr.mxu0 0.0
      %1194 = vmatpush1.msra.mxu0 0.0
      %1195 = vmatprep.subr.mxu0 0.0
      %1196 = vmatpush1.msra.mxu0 0.0
      %1197 = vmatprep.subr.mxu0 0.0
      %1198 = vmatpush1.msra.mxu0 0.0
      %1199 = vmatprep.subr.mxu0 0.0
      %1200 = vmatpush1.msra.mxu0 0.0
      %1201 = vmatprep.subr.mxu0 0.0
      %1202 = vmatpush1.msra.mxu0 0.0
      %1203 = vmatprep.subr.mxu0 0.0
      %1204 = vmatpush1.msra.mxu0 0.0
      %1205 = vmatprep.subr.mxu0 0.0
      %1206 = vmatpush1.msra.mxu0 0.0
      %1207 = vmatprep.mubr.f32.mxu0 0.0
      %1208 = vmatmul.mubr.f32.gmra.mrb[0].mxu0 %v1132
      %v1209 = vpop.f32.mrb[0].mxu0
      %v1210 = vadd.f32 %v703, %v1209
      %v1211 = vpop.f32.mrb[0].mxu0
      %1212 = vmatprep.mubr.f32.mxu0 0.0
      %1213 = vmatmul.mubr.f32.gmra.mrb[0].mxu0 %v1135
      %v1214 = vpop.f32.mrb[0].mxu0
      %v1215 = vadd.f32 %v703, %v1214
      %v1216 = vpop.f32.mrb[0].mxu0
      %1217 = vmatprep.mubr.f32.mxu0 0.0
      %1218 = vmatmul.mubr.f32.gmra.mrb[0].mxu0 %v1138
      %v1219 = vpop.f32.mrb[0].mxu0
      %v1220 = vadd.f32 %v703, %v1219
      %v1221 = vpop.f32.mrb[0].mxu0
      %1222 = vmatprep.mubr.f32.mxu0 0.0
      %1223 = vmatmul.mubr.f32.gmra.mrb[0].mxu0 %v1141
      %v1224 = vpop.f32.mrb[0].mxu0
      %v1225 = vadd.f32 %v703, %v1224
      %v1226 = vpop.f32.mrb[0].mxu0
      %1227 = vdwg.mxu0
      %v1228 = vmax.f32 %v1210, 0.0
      %v1229 = vmax.f32 %v1215, 0.0
      %v1230 = vmax.f32 %v1220, 0.0
      %v1231 = vmax.f32 %v1225, 0.0
      %v1233 = vsel %vm705, %v1228, 0
      %v1236 = vsel %vm705, %v1229, 0
      %v1239 = vsel %vm705, %v1230, 0
      %v1242 = vsel %vm705, %v1231, 0
      %1244 = vmatprep.subr.mxu0 0.0
      %1245 = vmatpush1.msra.mxu0 %v463
      %1246 = vmatprep.subr.mxu0 0.0
      %1247 = vmatpush1.msra.mxu0 %v464
      %1248 = vmatprep.subr.mxu0 0.0
      %1249 = vmatpush1.msra.mxu0 %v465
      %1250 = vmatprep.subr.mxu0 0.0
      %1251 = vmatpush1.msra.mxu0 %v466
      %1252 = vmatprep.subr.mxu0 0.0
      %1253 = vmatpush1.msra.mxu0 0.0
      %1254 = vmatprep.subr.mxu0 0.0
      %1255 = vmatpush1.msra.mxu0 0.0
      %1256 = vmatprep.subr.mxu0 0.0
      %1257 = vmatpush1.msra.mxu0 0.0
      %1258 = vmatprep.subr.mxu0 0.0
      %1259 = vmatpush1.msra.mxu0 0.0
      %1260 = vmatprep.subr.mxu0 0.0
      %1261 = vmatpush1.msra.mxu0 0.0
      %1262 = vmatprep.subr.mxu0 0.0
      %1263 = vmatpush1.msra.mxu0 0.0
      %1264 = vmatprep.subr.mxu0 0.0
      %1265 = vmatpush1.msra.mxu0 0.0
      %1266 = vmatprep.subr.mxu0 0.0
      %1267 = vmatpush1.msra.mxu0 0.0
      %1268 = vmatprep.subr.mxu0 0.0
      %1269 = vmatpush1.msra.mxu0 0.0
      %1270 = vmatprep.subr.mxu0 0.0
      %1271 = vmatpush1.msra.mxu0 0.0
      %1272 = vmatprep.subr.mxu0 0.0
      %1273 = vmatpush1.msra.mxu0 0.0
      %1274 = vmatprep.subr.mxu0 0.0
      %1275 = vmatpush1.msra.mxu0 0.0
      %1276 = vmatprep.subr.mxu0 0.0
      %1277 = vmatpush1.msra.mxu0 0.0
      %1278 = vmatprep.subr.mxu0 0.0
      %1279 = vmatpush1.msra.mxu0 0.0
      %1280 = vmatprep.subr.mxu0 0.0
      %1281 = vmatpush1.msra.mxu0 0.0
      %1282 = vmatprep.subr.mxu0 0.0
      %1283 = vmatpush1.msra.mxu0 0.0
      %1284 = vmatprep.subr.mxu0 0.0
      %1285 = vmatpush1.msra.mxu0 0.0
      %1286 = vmatprep.subr.mxu0 0.0
      %1287 = vmatpush1.msra.mxu0 0.0
      %1288 = vmatprep.subr.mxu0 0.0
      %1289 = vmatpush1.msra.mxu0 0.0
      %1290 = vmatprep.subr.mxu0 0.0
      %1291 = vmatpush1.msra.mxu0 0.0
      %1292 = vmatprep.subr.mxu0 0.0
      %1293 = vmatpush1.msra.mxu0 0.0
      %1294 = vmatprep.subr.mxu0 0.0
      %1295 = vmatpush1.msra.mxu0 0.0
      %1296 = vmatprep.subr.mxu0 0.0
      %1297 = vmatpush1.msra.mxu0 0.0
      %1298 = vmatprep.subr.mxu0 0.0
      %1299 = vmatpush1.msra.mxu0 0.0
      %1300 = vmatprep.subr.mxu0 0.0
      %1301 = vmatpush1.msra.mxu0 0.0
      %1302 = vmatprep.subr.mxu0 0.0
      %1303 = vmatpush1.msra.mxu0 0.0
      %1304 = vmatprep.subr.mxu0 0.0
      %1305 = vmatpush1.msra.mxu0 0.0
      %1306 = vmatprep.subr.mxu0 0.0
      %1307 = vmatpush1.msra.mxu0 0.0
      %1308 = vmatprep.mubr.f32.mxu0 0.0
      %1309 = vmatmul.mubr.f32.gmra.mrb[0].mxu0 %v1233
      %v1310 = vpop.f32.mrb[0].mxu0
      %v1311 = vadd.f32 %v811, %v1310
      %v1312 = vpop.f32.mrb[0].mxu0
      %1313 = vmatprep.mubr.f32.mxu0 0.0
      %1314 = vmatmul.mubr.f32.gmra.mrb[0].mxu0 %v1236
      %v1315 = vpop.f32.mrb[0].mxu0
      %v1316 = vadd.f32 %v811, %v1315
      %v1317 = vpop.f32.mrb[0].mxu0
      %1318 = vmatprep.mubr.f32.mxu0 0.0
      %1319 = vmatmul.mubr.f32.gmra.mrb[0].mxu0 %v1239
      %v1320 = vpop.f32.mrb[0].mxu0
      %v1321 = vadd.f32 %v811, %v1320
      %v1322 = vpop.f32.mrb[0].mxu0
      %1323 = vmatprep.mubr.f32.mxu0 0.0
      %1324 = vmatmul.mubr.f32.gmra.mrb[0].mxu0 %v1242
      %v1325 = vpop.f32.mrb[0].mxu0
      %v1326 = vadd.f32 %v811, %v1325
      %v1327 = vpop.f32.mrb[0].mxu0
      %1328 = vdwg.mxu0
      %1329 = vmatprep.subr.mxu0 0.0
      %1330 = vmatpush1.msra.mxu0 %v468
      %1331 = vmatprep.subr.mxu0 0.0
      %1332 = vmatpush1.msra.mxu0 %v469
      %1333 = vmatprep.subr.mxu0 0.0
      %1334 = vmatpush1.msra.mxu0 %v470
      %1335 = vmatprep.subr.mxu0 0.0
      %1336 = vmatpush1.msra.mxu0 %v471
      %1337 = vmatprep.subr.mxu0 0.0
      %1338 = vmatpush1.msra.mxu0 0.0
      %1339 = vmatprep.subr.mxu0 0.0
      %1340 = vmatpush1.msra.mxu0 0.0
      %1341 = vmatprep.subr.mxu0 0.0
      %1342 = vmatpush1.msra.mxu0 0.0
      %1343 = vmatprep.subr.mxu0 0.0
      %1344 = vmatpush1.msra.mxu0 0.0
      %1345 = vmatprep.subr.mxu0 0.0
      %1346 = vmatpush1.msra.mxu0 0.0
      %1347 = vmatprep.subr.mxu0 0.0
      %1348 = vmatpush1.msra.mxu0 0.0
      %1349 = vmatprep.subr.mxu0 0.0
      %1350 = vmatpush1.msra.mxu0 0.0
      %1351 = vmatprep.subr.mxu0 0.0
      %1352 = vmatpush1.msra.mxu0 0.0
      %1353 = vmatprep.subr.mxu0 0.0
      %1354 = vmatpush1.msra.mxu0 0.0
      %1355 = vmatprep.subr.mxu0 0.0
      %1356 = vmatpush1.msra.mxu0 0.0
      %1357 = vmatprep.subr.mxu0 0.0
      %1358 = vmatpush1.msra.mxu0 0.0
      %1359 = vmatprep.subr.mxu0 0.0
      %1360 = vmatpush1.msra.mxu0 0.0
      %1361 = vmatprep.subr.mxu0 0.0
      %1362 = vmatpush1.msra.mxu0 0.0
      %1363 = vmatprep.subr.mxu0 0.0
      %1364 = vmatpush1.msra.mxu0 0.0
      %1365 = vmatprep.subr.mxu0 0.0
      %1366 = vmatpush1.msra.mxu0 0.0
      %1367 = vmatprep.subr.mxu0 0.0
      %1368 = vmatpush1.msra.mxu0 0.0
      %1369 = vmatprep.subr.mxu0 0.0
      %1370 = vmatpush1.msra.mxu0 0.0
      %1371 = vmatprep.subr.mxu0 0.0
      %1372 = vmatpush1.msra.mxu0 0.0
      %1373 = vmatprep.subr.mxu0 0.0
      %1374 = vmatpush1.msra.mxu0 0.0
      %1375 = vmatprep.subr.mxu0 0.0
      %1376 = vmatpush1.msra.mxu0 0.0
      %1377 = vmatprep.subr.mxu0 0.0
      %1378 = vmatpush1.msra.mxu0 0.0
      %1379 = vmatprep.subr.mxu0 0.0
      %1380 = vmatpush1.msra.mxu0 0.0
      %1381 = vmatprep.subr.mxu0 0.0
      %1382 = vmatpush1.msra.mxu0 0.0
      %1383 = vmatprep.subr.mxu0 0.0
      %1384 = vmatpush1.msra.mxu0 0.0
      %1385 = vmatprep.subr.mxu0 0.0
      %1386 = vmatpush1.msra.mxu0 0.0
      %1387 = vmatprep.subr.mxu0 0.0
      %1388 = vmatpush1.msra.mxu0 0.0
      %1389 = vmatprep.subr.mxu0 0.0
      %1390 = vmatpush1.msra.mxu0 0.0
      %1391 = vmatprep.subr.mxu0 0.0
      %1392 = vmatpush1.msra.mxu0 0.0
      %1393 = vmatprep.mubr.f32.mxu0 0.0
      %1394 = vmatmul.mubr.f32.gmra.mrb[0].mxu0 %v1233
      %v1395 = vpop.f32.mrb[0].mxu0
      %v1396 = vadd.f32 %v914, %v1395
      %v1397 = vpop.f32.mrb[0].mxu0
      %1398 = vmatprep.mubr.f32.mxu0 0.0
      %1399 = vmatmul.mubr.f32.gmra.mrb[0].mxu0 %v1236
      %v1400 = vpop.f32.mrb[0].mxu0
      %v1401 = vadd.f32 %v914, %v1400
      %v1402 = vpop.f32.mrb[0].mxu0
      %1403 = vmatprep.mubr.f32.mxu0 0.0
      %1404 = vmatmul.mubr.f32.gmra.mrb[0].mxu0 %v1239
      %v1405 = vpop.f32.mrb[0].mxu0
      %v1406 = vadd.f32 %v914, %v1405
      %v1407 = vpop.f32.mrb[0].mxu0
      %1408 = vmatprep.mubr.f32.mxu0 0.0
      %1409 = vmatmul.mubr.f32.gmra.mrb[0].mxu0 %v1242
      %v1410 = vpop.f32.mrb[0].mxu0
      %v1411 = vadd.f32 %v914, %v1410
      %v1412 = vpop.f32.mrb[0].mxu0
      %1413 = vdwg.mxu0
      %vm1414 = vcmp.eq.s32.totalorder %v588, 1
      %v1415 = vmul.f32 %v1396, 1.442695
      %v1416 = vpow.pop %v1415
      %v1417 = vmul.f32 %v1401, 1.442695
      %v1418 = vpow.pop %v1417
      %v1419 = vmul.f32 %v1406, 1.442695
      %v1420 = vpow.pop %v1419
      %v1421 = vmul.f32 %v1411, 1.442695
      %v1422 = vpow.pop %v1421
      %v1423 = vmul.f32 %v453, %v1416
      %v1424 = vmul.f32 %v454, %v1418
      %v1425 = vmul.f32 %v455, %v1420
      %v1426 = vmul.f32 %v456, %v1422
      %v1427 = vadd.f32 %v1423, %v1311
      %v1428 = vadd.f32 %v1424, %v1316
      %v1429 = vadd.f32 %v1425, %v1321
      %v1430 = vadd.f32 %v1426, %v1326
      %v1431 = vsel %vm1414, %v1427, %v1026
      %v1432 = vsel %vm1414, %v1428, %v1027
      %v1433 = vsel %vm1414, %v1429, %v1028
      %v1434 = vsel %vm1414, %v1430, %v1029
      %1435 = vst.msk [vmem:[#allocation2] sm:$0xff] %vm589, %v1431
      %1436 = vst.msk [vmem:[#allocation2 + $0x8] sm:$0xff] %vm589, %v1432
      %1437 = vst.msk [vmem:[#allocation2 + $0x10] sm:$0xff] %vm589, %v1433
      %1438 = vst.msk [vmem:[#allocation2 + $0x18] sm:$0xff] %vm589, %v1434
      %v1439 = vld [vmem:[#allocation2] sm:$0xff]
      %v1440 = vld [vmem:[#allocation2 + $0x8] sm:$0xff]
      %v1441 = vld [vmem:[#allocation2 + $0x10] sm:$0xff]
      %v1442 = vld [vmem:[#allocation2 + $0x18] sm:$0xff]
      %v1444 = vsel %vm589, %v1439, 0
      %v1447 = vsel %vm589, %v1440, 0
      %v1450 = vsel %vm589, %v1441, 0
      %v1453 = vsel %vm589, %v1442, 0
      %1455 = vmatprep.subr.mxu0 0.0
      %1456 = vmatpush1.msra.mxu0 %v457
      %1457 = vmatprep.subr.mxu0 0.0
      %1458 = vmatpush1.msra.mxu0 0.0
      %1459 = vmatprep.subr.mxu0 0.0
      %1460 = vmatpush1.msra.mxu0 0.0
      %1461 = vmatprep.subr.mxu0 0.0
      %1462 = vmatpush1.msra.mxu0 0.0
      %1463 = vmatprep.subr.mxu0 0.0
      %1464 = vmatpush1.msra.mxu0 0.0
      %1465 = vmatprep.subr.mxu0 0.0
      %1466 = vmatpush1.msra.mxu0 0.0
      %1467 = vmatprep.subr.mxu0 0.0
      %1468 = vmatpush1.msra.mxu0 0.0
      %1469 = vmatprep.subr.mxu0 0.0
      %1470 = vmatpush1.msra.mxu0 0.0
      %1471 = vmatprep.subr.mxu0 0.0
      %1472 = vmatpush1.msra.mxu0 0.0
      %1473 = vmatprep.subr.mxu0 0.0
      %1474 = vmatpush1.msra.mxu0 0.0
      %1475 = vmatprep.subr.mxu0 0.0
      %1476 = vmatpush1.msra.mxu0 0.0
      %1477 = vmatprep.subr.mxu0 0.0
      %1478 = vmatpush1.msra.mxu0 0.0
      %1479 = vmatprep.subr.mxu0 0.0
      %1480 = vmatpush1.msra.mxu0 0.0
      %1481 = vmatprep.subr.mxu0 0.0
      %1482 = vmatpush1.msra.mxu0 0.0
      %1483 = vmatprep.subr.mxu0 0.0
      %1484 = vmatpush1.msra.mxu0 0.0
      %1485 = vmatprep.subr.mxu0 0.0
      %1486 = vmatpush1.msra.mxu0 0.0
      %1487 = vmatprep.subr.mxu0 0.0
      %1488 = vmatpush1.msra.mxu0 0.0
      %1489 = vmatprep.subr.mxu0 0.0
      %1490 = vmatpush1.msra.mxu0 0.0
      %1491 = vmatprep.subr.mxu0 0.0
      %1492 = vmatpush1.msra.mxu0 0.0
      %1493 = vmatprep.subr.mxu0 0.0
      %1494 = vmatpush1.msra.mxu0 0.0
      %1495 = vmatprep.subr.mxu0 0.0
      %1496 = vmatpush1.msra.mxu0 0.0
      %1497 = vmatprep.subr.mxu0 0.0
      %1498 = vmatpush1.msra.mxu0 0.0
      %1499 = vmatprep.subr.mxu0 0.0
      %1500 = vmatpush1.msra.mxu0 0.0
      %1501 = vmatprep.subr.mxu0 0.0
      %1502 = vmatpush1.msra.mxu0 0.0
      %1503 = vmatprep.subr.mxu0 0.0
      %1504 = vmatpush1.msra.mxu0 0.0
      %1505 = vmatprep.subr.mxu0 0.0
      %1506 = vmatpush1.msra.mxu0 0.0
      %1507 = vmatprep.subr.mxu0 0.0
      %1508 = vmatpush1.msra.mxu0 0.0
      %1509 = vmatprep.subr.mxu0 0.0
      %1510 = vmatpush1.msra.mxu0 0.0
      %1511 = vmatprep.subr.mxu0 0.0
      %1512 = vmatpush1.msra.mxu0 0.0
      %1513 = vmatprep.subr.mxu0 0.0
      %1514 = vmatpush1.msra.mxu0 0.0
      %1515 = vmatprep.subr.mxu0 0.0
      %1516 = vmatpush1.msra.mxu0 0.0
      %1517 = vmatprep.subr.mxu0 0.0
      %1518 = vmatpush1.msra.mxu0 0.0
      %1519 = vmatprep.mubr.f32.mxu0 0.0
      %1520 = vmatmul.mubr.f32.gmra.mrb[0].mxu0 %v1444
      %v1521 = vpop.f32.mrb[0].mxu0
      %v1522 = vadd.f32 %v569, %v1521
      %v1523 = vpop.f32.mrb[0].mxu0
      %1524 = vmatprep.mubr.f32.mxu0 0.0
      %1525 = vmatmul.mubr.f32.gmra.mrb[0].mxu0 %v1447
      %v1526 = vpop.f32.mrb[0].mxu0
      %v1527 = vadd.f32 %v574, %v1526
      %v1528 = vpop.f32.mrb[0].mxu0
      %1529 = vmatprep.mubr.f32.mxu0 0.0
      %1530 = vmatmul.mubr.f32.gmra.mrb[0].mxu0 %v1450
      %v1531 = vpop.f32.mrb[0].mxu0
      %v1532 = vadd.f32 %v579, %v1531
      %v1533 = vpop.f32.mrb[0].mxu0
      %1534 = vmatprep.mubr.f32.mxu0 0.0
      %1535 = vmatmul.mubr.f32.gmra.mrb[0].mxu0 %v1453
      %v1536 = vpop.f32.mrb[0].mxu0
      %v1537 = vadd.f32 %v584, %v1536
      %v1538 = vpop.f32.mrb[0].mxu0
      %1539 = vdwg.mxu0
      %v1540 = vmax.f32 %v1522, 0.0
      %v1541 = vmax.f32 %v1527, 0.0
      %v1542 = vmax.f32 %v1532, 0.0
      %v1543 = vmax.f32 %v1537, 0.0
      %v1545 = vsel %vm705, %v1540, 0
      %v1548 = vsel %vm705, %v1541, 0
      %v1551 = vsel %vm705, %v1542, 0
      %v1554 = vsel %vm705, %v1543, 0
      %1556 = vmatprep.subr.mxu0 0.0
      %1557 = vmatpush1.msra.mxu0 %v458
      %1558 = vmatprep.subr.mxu0 0.0
      %1559 = vmatpush1.msra.mxu0 %v459
      %1560 = vmatprep.subr.mxu0 0.0
      %1561 = vmatpush1.msra.mxu0 %v460
      %1562 = vmatprep.subr.mxu0 0.0
      %1563 = vmatpush1.msra.mxu0 %v461
      %1564 = vmatprep.subr.mxu0 0.0
      %1565 = vmatpush1.msra.mxu0 0.0
      %1566 = vmatprep.subr.mxu0 0.0
      %1567 = vmatpush1.msra.mxu0 0.0
      %1568 = vmatprep.subr.mxu0 0.0
      %1569 = vmatpush1.msra.mxu0 0.0
      %1570 = vmatprep.subr.mxu0 0.0
      %1571 = vmatpush1.msra.mxu0 0.0
      %1572 = vmatprep.subr.mxu0 0.0
      %1573 = vmatpush1.msra.mxu0 0.0
      %1574 = vmatprep.subr.mxu0 0.0
      %1575 = vmatpush1.msra.mxu0 0.0
      %1576 = vmatprep.subr.mxu0 0.0
      %1577 = vmatpush1.msra.mxu0 0.0
      %1578 = vmatprep.subr.mxu0 0.0
      %1579 = vmatpush1.msra.mxu0 0.0
      %1580 = vmatprep.subr.mxu0 0.0
      %1581 = vmatpush1.msra.mxu0 0.0
      %1582 = vmatprep.subr.mxu0 0.0
      %1583 = vmatpush1.msra.mxu0 0.0
      %1584 = vmatprep.subr.mxu0 0.0
      %1585 = vmatpush1.msra.mxu0 0.0
      %1586 = vmatprep.subr.mxu0 0.0
      %1587 = vmatpush1.msra.mxu0 0.0
      %1588 = vmatprep.subr.mxu0 0.0
      %1589 = vmatpush1.msra.mxu0 0.0
      %1590 = vmatprep.subr.mxu0 0.0
      %1591 = vmatpush1.msra.mxu0 0.0
      %1592 = vmatprep.subr.mxu0 0.0
      %1593 = vmatpush1.msra.mxu0 0.0
      %1594 = vmatprep.subr.mxu0 0.0
      %1595 = vmatpush1.msra.mxu0 0.0
      %1596 = vmatprep.subr.mxu0 0.0
      %1597 = vmatpush1.msra.mxu0 0.0
      %1598 = vmatprep.subr.mxu0 0.0
      %1599 = vmatpush1.msra.mxu0 0.0
      %1600 = vmatprep.subr.mxu0 0.0
      %1601 = vmatpush1.msra.mxu0 0.0
      %1602 = vmatprep.subr.mxu0 0.0
      %1603 = vmatpush1.msra.mxu0 0.0
      %1604 = vmatprep.subr.mxu0 0.0
      %1605 = vmatpush1.msra.mxu0 0.0
      %1606 = vmatprep.subr.mxu0 0.0
      %1607 = vmatpush1.msra.mxu0 0.0
      %1608 = vmatprep.subr.mxu0 0.0
      %1609 = vmatpush1.msra.mxu0 0.0
      %1610 = vmatprep.subr.mxu0 0.0
      %1611 = vmatpush1.msra.mxu0 0.0
      %1612 = vmatprep.subr.mxu0 0.0
      %1613 = vmatpush1.msra.mxu0 0.0
      %1614 = vmatprep.subr.mxu0 0.0
      %1615 = vmatpush1.msra.mxu0 0.0
      %1616 = vmatprep.subr.mxu0 0.0
      %1617 = vmatpush1.msra.mxu0 0.0
      %1618 = vmatprep.subr.mxu0 0.0
      %1619 = vmatpush1.msra.mxu0 0.0
      %1620 = vmatprep.mubr.f32.mxu0 0.0
      %1621 = vmatmul.mubr.f32.gmra.mrb[0].mxu0 %v1545
      %v1622 = vpop.f32.mrb[0].mxu0
      %v1623 = vadd.f32 %v703, %v1622
      %v1624 = vpop.f32.mrb[0].mxu0
      %1625 = vmatprep.mubr.f32.mxu0 0.0
      %1626 = vmatmul.mubr.f32.gmra.mrb[0].mxu0 %v1548
      %v1627 = vpop.f32.mrb[0].mxu0
      %v1628 = vadd.f32 %v703, %v1627
      %v1629 = vpop.f32.mrb[0].mxu0
      %1630 = vmatprep.mubr.f32.mxu0 0.0
      %1631 = vmatmul.mubr.f32.gmra.mrb[0].mxu0 %v1551
      %v1632 = vpop.f32.mrb[0].mxu0
      %v1633 = vadd.f32 %v703, %v1632
      %v1634 = vpop.f32.mrb[0].mxu0
      %1635 = vmatprep.mubr.f32.mxu0 0.0
      %1636 = vmatmul.mubr.f32.gmra.mrb[0].mxu0 %v1554
      %v1637 = vpop.f32.mrb[0].mxu0
      %v1638 = vadd.f32 %v703, %v1637
      %v1639 = vpop.f32.mrb[0].mxu0
      %1640 = vdwg.mxu0
      %v1641 = vmax.f32 %v1623, 0.0
      %v1642 = vmax.f32 %v1628, 0.0
      %v1643 = vmax.f32 %v1633, 0.0
      %v1644 = vmax.f32 %v1638, 0.0
      %v1646 = vsel %vm705, %v1641, 0
      %v1649 = vsel %vm705, %v1642, 0
      %v1652 = vsel %vm705, %v1643, 0
      %v1655 = vsel %vm705, %v1644, 0
      %1657 = vmatprep.subr.mxu0 0.0
      %1658 = vmatpush1.msra.mxu0 %v463
      %1659 = vmatprep.subr.mxu0 0.0
      %1660 = vmatpush1.msra.mxu0 %v464
      %1661 = vmatprep.subr.mxu0 0.0
      %1662 = vmatpush1.msra.mxu0 %v465
      %1663 = vmatprep.subr.mxu0 0.0
      %1664 = vmatpush1.msra.mxu0 %v466
      %1665 = vmatprep.subr.mxu0 0.0
      %1666 = vmatpush1.msra.mxu0 0.0
      %1667 = vmatprep.subr.mxu0 0.0
      %1668 = vmatpush1.msra.mxu0 0.0
      %1669 = vmatprep.subr.mxu0 0.0
      %1670 = vmatpush1.msra.mxu0 0.0
      %1671 = vmatprep.subr.mxu0 0.0
      %1672 = vmatpush1.msra.mxu0 0.0
      %1673 = vmatprep.subr.mxu0 0.0
      %1674 = vmatpush1.msra.mxu0 0.0
      %1675 = vmatprep.subr.mxu0 0.0
      %1676 = vmatpush1.msra.mxu0 0.0
      %1677 = vmatprep.subr.mxu0 0.0
      %1678 = vmatpush1.msra.mxu0 0.0
      %1679 = vmatprep.subr.mxu0 0.0
      %1680 = vmatpush1.msra.mxu0 0.0
      %1681 = vmatprep.subr.mxu0 0.0
      %1682 = vmatpush1.msra.mxu0 0.0
      %1683 = vmatprep.subr.mxu0 0.0
      %1684 = vmatpush1.msra.mxu0 0.0
      %1685 = vmatprep.subr.mxu0 0.0
      %1686 = vmatpush1.msra.mxu0 0.0
      %1687 = vmatprep.subr.mxu0 0.0
      %1688 = vmatpush1.msra.mxu0 0.0
      %1689 = vmatprep.subr.mxu0 0.0
      %1690 = vmatpush1.msra.mxu0 0.0
      %1691 = vmatprep.subr.mxu0 0.0
      %1692 = vmatpush1.msra.mxu0 0.0
      %1693 = vmatprep.subr.mxu0 0.0
      %1694 = vmatpush1.msra.mxu0 0.0
      %1695 = vmatprep.subr.mxu0 0.0
      %1696 = vmatpush1.msra.mxu0 0.0
      %1697 = vmatprep.subr.mxu0 0.0
      %1698 = vmatpush1.msra.mxu0 0.0
      %1699 = vmatprep.subr.mxu0 0.0
      %1700 = vmatpush1.msra.mxu0 0.0
      %1701 = vmatprep.subr.mxu0 0.0
      %1702 = vmatpush1.msra.mxu0 0.0
      %1703 = vmatprep.subr.mxu0 0.0
      %1704 = vmatpush1.msra.mxu0 0.0
      %1705 = vmatprep.subr.mxu0 0.0
      %1706 = vmatpush1.msra.mxu0 0.0
      %1707 = vmatprep.subr.mxu0 0.0
      %1708 = vmatpush1.msra.mxu0 0.0
      %1709 = vmatprep.subr.mxu0 0.0
      %1710 = vmatpush1.msra.mxu0 0.0
      %1711 = vmatprep.subr.mxu0 0.0
      %1712 = vmatpush1.msra.mxu0 0.0
      %1713 = vmatprep.subr.mxu0 0.0
      %1714 = vmatpush1.msra.mxu0 0.0
      %1715 = vmatprep.subr.mxu0 0.0
      %1716 = vmatpush1.msra.mxu0 0.0
      %1717 = vmatprep.subr.mxu0 0.0
      %1718 = vmatpush1.msra.mxu0 0.0
      %1719 = vmatprep.subr.mxu0 0.0
      %1720 = vmatpush1.msra.mxu0 0.0
      %1721 = vmatprep.mubr.f32.mxu0 0.0
      %1722 = vmatmul.mubr.f32.gmra.mrb[0].mxu0 %v1646
      %v1723 = vpop.f32.mrb[0].mxu0
      %v1724 = vadd.f32 %v811, %v1723
      %v1725 = vpop.f32.mrb[0].mxu0
      %1726 = vmatprep.mubr.f32.mxu0 0.0
      %1727 = vmatmul.mubr.f32.gmra.mrb[0].mxu0 %v1649
      %v1728 = vpop.f32.mrb[0].mxu0
      %v1729 = vadd.f32 %v811, %v1728
      %v1730 = vpop.f32.mrb[0].mxu0
      %1731 = vmatprep.mubr.f32.mxu0 0.0
      %1732 = vmatmul.mubr.f32.gmra.mrb[0].mxu0 %v1652
      %v1733 = vpop.f32.mrb[0].mxu0
      %v1734 = vadd.f32 %v811, %v1733
      %v1735 = vpop.f32.mrb[0].mxu0
      %1736 = vmatprep.mubr.f32.mxu0 0.0
      %1737 = vmatmul.mubr.f32.gmra.mrb[0].mxu0 %v1655
      %v1738 = vpop.f32.mrb[0].mxu0
      %v1739 = vadd.f32 %v811, %v1738
      %v1740 = vpop.f32.mrb[0].mxu0
      %1741 = vdwg.mxu0
      %1742 = vmatprep.subr.mxu0 0.0
      %1743 = vmatpush1.msra.mxu0 %v468
      %1744 = vmatprep.subr.mxu0 0.0
      %1745 = vmatpush1.msra.mxu0 %v469
      %1746 = vmatprep.subr.mxu0 0.0
      %1747 = vmatpush1.msra.mxu0 %v470
      %1748 = vmatprep.subr.mxu0 0.0
      %1749 = vmatpush1.msra.mxu0 %v471
      %1750 = vmatprep.subr.mxu0 0.0
      %1751 = vmatpush1.msra.mxu0 0.0
      %1752 = vmatprep.subr.mxu0 0.0
      %1753 = vmatpush1.msra.mxu0 0.0
      %1754 = vmatprep.subr.mxu0 0.0
      %1755 = vmatpush1.msra.mxu0 0.0
      %1756 = vmatprep.subr.mxu0 0.0
      %1757 = vmatpush1.msra.mxu0 0.0
      %1758 = vmatprep.subr.mxu0 0.0
      %1759 = vmatpush1.msra.mxu0 0.0
      %1760 = vmatprep.subr.mxu0 0.0
      %1761 = vmatpush1.msra.mxu0 0.0
      %1762 = vmatprep.subr.mxu0 0.0
      %1763 = vmatpush1.msra.mxu0 0.0
      %1764 = vmatprep.subr.mxu0 0.0
      %1765 = vmatpush1.msra.mxu0 0.0
      %1766 = vmatprep.subr.mxu0 0.0
      %1767 = vmatpush1.msra.mxu0 0.0
      %1768 = vmatprep.subr.mxu0 0.0
      %1769 = vmatpush1.msra.mxu0 0.0
      %1770 = vmatprep.subr.mxu0 0.0
      %1771 = vmatpush1.msra.mxu0 0.0
      %1772 = vmatprep.subr.mxu0 0.0
      %1773 = vmatpush1.msra.mxu0 0.0
      %1774 = vmatprep.subr.mxu0 0.0
      %1775 = vmatpush1.msra.mxu0 0.0
      %1776 = vmatprep.subr.mxu0 0.0
      %1777 = vmatpush1.msra.mxu0 0.0
      %1778 = vmatprep.subr.mxu0 0.0
      %1779 = vmatpush1.msra.mxu0 0.0
      %1780 = vmatprep.subr.mxu0 0.0
      %1781 = vmatpush1.msra.mxu0 0.0
      %1782 = vmatprep.subr.mxu0 0.0
      %1783 = vmatpush1.msra.mxu0 0.0
      %1784 = vmatprep.subr.mxu0 0.0
      %1785 = vmatpush1.msra.mxu0 0.0
      %1786 = vmatprep.subr.mxu0 0.0
      %1787 = vmatpush1.msra.mxu0 0.0
      %1788 = vmatprep.subr.mxu0 0.0
      %1789 = vmatpush1.msra.mxu0 0.0
      %1790 = vmatprep.subr.mxu0 0.0
      %1791 = vmatpush1.msra.mxu0 0.0
      %1792 = vmatprep.subr.mxu0 0.0
      %1793 = vmatpush1.msra.mxu0 0.0
      %1794 = vmatprep.subr.mxu0 0.0
      %1795 = vmatpush1.msra.mxu0 0.0
      %1796 = vmatprep.subr.mxu0 0.0
      %1797 = vmatpush1.msra.mxu0 0.0
      %1798 = vmatprep.subr.mxu0 0.0
      %1799 = vmatpush1.msra.mxu0 0.0
      %1800 = vmatprep.subr.mxu0 0.0
      %1801 = vmatpush1.msra.mxu0 0.0
      %1802 = vmatprep.subr.mxu0 0.0
      %1803 = vmatpush1.msra.mxu0 0.0
      %1804 = vmatprep.subr.mxu0 0.0
      %1805 = vmatpush1.msra.mxu0 0.0
      %1806 = vmatprep.mubr.f32.mxu0 0.0
      %1807 = vmatmul.mubr.f32.gmra.mrb[0].mxu0 %v1646
      %v1808 = vpop.f32.mrb[0].mxu0
      %v1809 = vadd.f32 %v914, %v1808
      %v1810 = vpop.f32.mrb[0].mxu0
      %1811 = vmatprep.mubr.f32.mxu0 0.0
      %1812 = vmatmul.mubr.f32.gmra.mrb[0].mxu0 %v1649
      %v1813 = vpop.f32.mrb[0].mxu0
      %v1814 = vadd.f32 %v914, %v1813
      %v1815 = vpop.f32.mrb[0].mxu0
      %1816 = vmatprep.mubr.f32.mxu0 0.0
      %1817 = vmatmul.mubr.f32.gmra.mrb[0].mxu0 %v1652
      %v1818 = vpop.f32.mrb[0].mxu0
      %v1819 = vadd.f32 %v914, %v1818
      %v1820 = vpop.f32.mrb[0].mxu0
      %1821 = vmatprep.mubr.f32.mxu0 0.0
      %1822 = vmatmul.mubr.f32.gmra.mrb[0].mxu0 %v1655
      %v1823 = vpop.f32.mrb[0].mxu0
      %v1824 = vadd.f32 %v914, %v1823
      %v1825 = vpop.f32.mrb[0].mxu0
      %1826 = vdwg.mxu0
      %vm1827 = vcmp.eq.s32.totalorder %v588, 2
      %v1828 = vmul.f32 %v1809, 1.442695
      %v1829 = vpow.pop %v1828
      %v1830 = vmul.f32 %v1814, 1.442695
      %v1831 = vpow.pop %v1830
      %v1832 = vmul.f32 %v1819, 1.442695
      %v1833 = vpow.pop %v1832
      %v1834 = vmul.f32 %v1824, 1.442695
      %v1835 = vpow.pop %v1834
      %v1836 = vmul.f32 %v453, %v1829
      %v1837 = vmul.f32 %v454, %v1831
      %v1838 = vmul.f32 %v455, %v1833
      %v1839 = vmul.f32 %v456, %v1835
      %v1840 = vadd.f32 %v1836, %v1724
      %v1841 = vadd.f32 %v1837, %v1729
      %v1842 = vadd.f32 %v1838, %v1734
      %v1843 = vadd.f32 %v1839, %v1739
      %v1844 = vsel %vm1827, %v1840, %v1439
      %v1845 = vsel %vm1827, %v1841, %v1440
      %v1846 = vsel %vm1827, %v1842, %v1441
      %v1847 = vsel %vm1827, %v1843, %v1442
      %1848 = vst.msk [vmem:[#allocation2] sm:$0xff] %vm589, %v1844
      %1849 = vst.msk [vmem:[#allocation2 + $0x8] sm:$0xff] %vm589, %v1845
      %1850 = vst.msk [vmem:[#allocation2 + $0x10] sm:$0xff] %vm589, %v1846
      %1851 = vst.msk [vmem:[#allocation2 + $0x18] sm:$0xff] %vm589, %v1847
      %v1852 = vld [vmem:[#allocation2] sm:$0xff]
      %v1853 = vld [vmem:[#allocation2 + $0x8] sm:$0xff]
      %v1854 = vld [vmem:[#allocation2 + $0x10] sm:$0xff]
      %v1855 = vld [vmem:[#allocation2 + $0x18] sm:$0xff]
      %v1857 = vsel %vm589, %v1852, 0
      %v1860 = vsel %vm589, %v1853, 0
      %v1863 = vsel %vm589, %v1854, 0
      %v1866 = vsel %vm589, %v1855, 0
      %1868 = vmatprep.subr.mxu0 0.0
      %1869 = vmatpush1.msra.mxu0 %v457
      %1870 = vmatprep.subr.mxu0 0.0
      %1871 = vmatpush1.msra.mxu0 0.0
      %1872 = vmatprep.subr.mxu0 0.0
      %1873 = vmatpush1.msra.mxu0 0.0
      %1874 = vmatprep.subr.mxu0 0.0
      %1875 = vmatpush1.msra.mxu0 0.0
      %1876 = vmatprep.subr.mxu0 0.0
      %1877 = vmatpush1.msra.mxu0 0.0
      %1878 = vmatprep.subr.mxu0 0.0
      %1879 = vmatpush1.msra.mxu0 0.0
      %1880 = vmatprep.subr.mxu0 0.0
      %1881 = vmatpush1.msra.mxu0 0.0
      %1882 = vmatprep.subr.mxu0 0.0
      %1883 = vmatpush1.msra.mxu0 0.0
      %1884 = vmatprep.subr.mxu0 0.0
      %1885 = vmatpush1.msra.mxu0 0.0
      %1886 = vmatprep.subr.mxu0 0.0
      %1887 = vmatpush1.msra.mxu0 0.0
      %1888 = vmatprep.subr.mxu0 0.0
      %1889 = vmatpush1.msra.mxu0 0.0
      %1890 = vmatprep.subr.mxu0 0.0
      %1891 = vmatpush1.msra.mxu0 0.0
      %1892 = vmatprep.subr.mxu0 0.0
      %1893 = vmatpush1.msra.mxu0 0.0
      %1894 = vmatprep.subr.mxu0 0.0
      %1895 = vmatpush1.msra.mxu0 0.0
      %1896 = vmatprep.subr.mxu0 0.0
      %1897 = vmatpush1.msra.mxu0 0.0
      %1898 = vmatprep.subr.mxu0 0.0
      %1899 = vmatpush1.msra.mxu0 0.0
      %1900 = vmatprep.subr.mxu0 0.0
      %1901 = vmatpush1.msra.mxu0 0.0
      %1902 = vmatprep.subr.mxu0 0.0
      %1903 = vmatpush1.msra.mxu0 0.0
      %1904 = vmatprep.subr.mxu0 0.0
      %1905 = vmatpush1.msra.mxu0 0.0
      %1906 = vmatprep.subr.mxu0 0.0
      %1907 = vmatpush1.msra.mxu0 0.0
      %1908 = vmatprep.subr.mxu0 0.0
      %1909 = vmatpush1.msra.mxu0 0.0
      %1910 = vmatprep.subr.mxu0 0.0
      %1911 = vmatpush1.msra.mxu0 0.0
      %1912 = vmatprep.subr.mxu0 0.0
      %1913 = vmatpush1.msra.mxu0 0.0
      %1914 = vmatprep.subr.mxu0 0.0
      %1915 = vmatpush1.msra.mxu0 0.0
      %1916 = vmatprep.subr.mxu0 0.0
      %1917 = vmatpush1.msra.mxu0 0.0
      %1918 = vmatprep.subr.mxu0 0.0
      %1919 = vmatpush1.msra.mxu0 0.0
      %1920 = vmatprep.subr.mxu0 0.0
      %1921 = vmatpush1.msra.mxu0 0.0
      %1922 = vmatprep.subr.mxu0 0.0
      %1923 = vmatpush1.msra.mxu0 0.0
      %1924 = vmatprep.subr.mxu0 0.0
      %1925 = vmatpush1.msra.mxu0 0.0
      %1926 = vmatprep.subr.mxu0 0.0
      %1927 = vmatpush1.msra.mxu0 0.0
      %1928 = vmatprep.subr.mxu0 0.0
      %1929 = vmatpush1.msra.mxu0 0.0
      %1930 = vmatprep.subr.mxu0 0.0
      %1931 = vmatpush1.msra.mxu0 0.0
      %1932 = vmatprep.mubr.f32.mxu0 0.0
      %1933 = vmatmul.mubr.f32.gmra.mrb[0].mxu0 %v1857
      %v1934 = vpop.f32.mrb[0].mxu0
      %v1935 = vadd.f32 %v569, %v1934
      %v1936 = vpop.f32.mrb[0].mxu0
      %1937 = vmatprep.mubr.f32.mxu0 0.0
      %1938 = vmatmul.mubr.f32.gmra.mrb[0].mxu0 %v1860
      %v1939 = vpop.f32.mrb[0].mxu0
      %v1940 = vadd.f32 %v574, %v1939
      %v1941 = vpop.f32.mrb[0].mxu0
      %1942 = vmatprep.mubr.f32.mxu0 0.0
      %1943 = vmatmul.mubr.f32.gmra.mrb[0].mxu0 %v1863
      %v1944 = vpop.f32.mrb[0].mxu0
      %v1945 = vadd.f32 %v579, %v1944
      %v1946 = vpop.f32.mrb[0].mxu0
      %1947 = vmatprep.mubr.f32.mxu0 0.0
      %1948 = vmatmul.mubr.f32.gmra.mrb[0].mxu0 %v1866
      %v1949 = vpop.f32.mrb[0].mxu0
      %v1950 = vadd.f32 %v584, %v1949
      %v1951 = vpop.f32.mrb[0].mxu0
      %1952 = vdwg.mxu0
      %v1953 = vmax.f32 %v1935, 0.0
      %v1954 = vmax.f32 %v1940, 0.0
      %v1955 = vmax.f32 %v1945, 0.0
      %v1956 = vmax.f32 %v1950, 0.0
      %v1958 = vsel %vm705, %v1953, 0
      %v1961 = vsel %vm705, %v1954, 0
      %v1964 = vsel %vm705, %v1955, 0
      %v1967 = vsel %vm705, %v1956, 0
      %1969 = vmatprep.subr.mxu0 0.0
      %1970 = vmatpush1.msra.mxu0 %v458
      %1971 = vmatprep.subr.mxu0 0.0
      %1972 = vmatpush1.msra.mxu0 %v459
      %1973 = vmatprep.subr.mxu0 0.0
      %1974 = vmatpush1.msra.mxu0 %v460
      %1975 = vmatprep.subr.mxu0 0.0
      %1976 = vmatpush1.msra.mxu0 %v461
      %1977 = vmatprep.subr.mxu0 0.0
      %1978 = vmatpush1.msra.mxu0 0.0
      %1979 = vmatprep.subr.mxu0 0.0
      %1980 = vmatpush1.msra.mxu0 0.0
      %1981 = vmatprep.subr.mxu0 0.0
      %1982 = vmatpush1.msra.mxu0 0.0
      %1983 = vmatprep.subr.mxu0 0.0
      %1984 = vmatpush1.msra.mxu0 0.0
      %1985 = vmatprep.subr.mxu0 0.0
      %1986 = vmatpush1.msra.mxu0 0.0
      %1987 = vmatprep.subr.mxu0 0.0
      %1988 = vmatpush1.msra.mxu0 0.0
      %1989 = vmatprep.subr.mxu0 0.0
      %1990 = vmatpush1.msra.mxu0 0.0
      %1991 = vmatprep.subr.mxu0 0.0
      %1992 = vmatpush1.msra.mxu0 0.0
      %1993 = vmatprep.subr.mxu0 0.0
      %1994 = vmatpush1.msra.mxu0 0.0
      %1995 = vmatprep.subr.mxu0 0.0
      %1996 = vmatpush1.msra.mxu0 0.0
      %1997 = vmatprep.subr.mxu0 0.0
      %1998 = vmatpush1.msra.mxu0 0.0
      %1999 = vmatprep.subr.mxu0 0.0
      %2000 = vmatpush1.msra.mxu0 0.0
      %2001 = vmatprep.subr.mxu0 0.0
      %2002 = vmatpush1.msra.mxu0 0.0
      %2003 = vmatprep.subr.mxu0 0.0
      %2004 = vmatpush1.msra.mxu0 0.0
      %2005 = vmatprep.subr.mxu0 0.0
      %2006 = vmatpush1.msra.mxu0 0.0
      %2007 = vmatprep.subr.mxu0 0.0
      %2008 = vmatpush1.msra.mxu0 0.0
      %2009 = vmatprep.subr.mxu0 0.0
      %2010 = vmatpush1.msra.mxu0 0.0
      %2011 = vmatprep.subr.mxu0 0.0
      %2012 = vmatpush1.msra.mxu0 0.0
      %2013 = vmatprep.subr.mxu0 0.0
      %2014 = vmatpush1.msra.mxu0 0.0
      %2015 = vmatprep.subr.mxu0 0.0
      %2016 = vmatpush1.msra.mxu0 0.0
      %2017 = vmatprep.subr.mxu0 0.0
      %2018 = vmatpush1.msra.mxu0 0.0
      %2019 = vmatprep.subr.mxu0 0.0
      %2020 = vmatpush1.msra.mxu0 0.0
      %2021 = vmatprep.subr.mxu0 0.0
      %2022 = vmatpush1.msra.mxu0 0.0
      %2023 = vmatprep.subr.mxu0 0.0
      %2024 = vmatpush1.msra.mxu0 0.0
      %2025 = vmatprep.subr.mxu0 0.0
      %2026 = vmatpush1.msra.mxu0 0.0
      %2027 = vmatprep.subr.mxu0 0.0
      %2028 = vmatpush1.msra.mxu0 0.0
      %2029 = vmatprep.subr.mxu0 0.0
      %2030 = vmatpush1.msra.mxu0 0.0
      %2031 = vmatprep.subr.mxu0 0.0
      %2032 = vmatpush1.msra.mxu0 0.0
      %2033 = vmatprep.mubr.f32.mxu0 0.0
      %2034 = vmatmul.mubr.f32.gmra.mrb[0].mxu0 %v1958
      %v2035 = vpop.f32.mrb[0].mxu0
      %v2036 = vadd.f32 %v703, %v2035
      %v2037 = vpop.f32.mrb[0].mxu0
      %2038 = vmatprep.mubr.f32.mxu0 0.0
      %2039 = vmatmul.mubr.f32.gmra.mrb[0].mxu0 %v1961
      %v2040 = vpop.f32.mrb[0].mxu0
      %v2041 = vadd.f32 %v703, %v2040
      %v2042 = vpop.f32.mrb[0].mxu0
      %2043 = vmatprep.mubr.f32.mxu0 0.0
      %2044 = vmatmul.mubr.f32.gmra.mrb[0].mxu0 %v1964
      %v2045 = vpop.f32.mrb[0].mxu0
      %v2046 = vadd.f32 %v703, %v2045
      %v2047 = vpop.f32.mrb[0].mxu0
      %2048 = vmatprep.mubr.f32.mxu0 0.0
      %2049 = vmatmul.mubr.f32.gmra.mrb[0].mxu0 %v1967
      %v2050 = vpop.f32.mrb[0].mxu0
      %v2051 = vadd.f32 %v703, %v2050
      %v2052 = vpop.f32.mrb[0].mxu0
      %2053 = vdwg.mxu0
      %v2054 = vmax.f32 %v2036, 0.0
      %v2055 = vmax.f32 %v2041, 0.0
      %v2056 = vmax.f32 %v2046, 0.0
      %v2057 = vmax.f32 %v2051, 0.0
      %v2059 = vsel %vm705, %v2054, 0
      %v2062 = vsel %vm705, %v2055, 0
      %v2065 = vsel %vm705, %v2056, 0
      %v2068 = vsel %vm705, %v2057, 0
      %2070 = vmatprep.subr.mxu0 0.0
      %2071 = vmatpush1.msra.mxu0 %v463
      %2072 = vmatprep.subr.mxu0 0.0
      %2073 = vmatpush1.msra.mxu0 %v464
      %2074 = vmatprep.subr.mxu0 0.0
      %2075 = vmatpush1.msra.mxu0 %v465
      %2076 = vmatprep.subr.mxu0 0.0
      %2077 = vmatpush1.msra.mxu0 %v466
      %2078 = vmatprep.subr.mxu0 0.0
      %2079 = vmatpush1.msra.mxu0 0.0
      %2080 = vmatprep.subr.mxu0 0.0
      %2081 = vmatpush1.msra.mxu0 0.0
      %2082 = vmatprep.subr.mxu0 0.0
      %2083 = vmatpush1.msra.mxu0 0.0
      %2084 = vmatprep.subr.mxu0 0.0
      %2085 = vmatpush1.msra.mxu0 0.0
      %2086 = vmatprep.subr.mxu0 0.0
      %2087 = vmatpush1.msra.mxu0 0.0
      %2088 = vmatprep.subr.mxu0 0.0
      %2089 = vmatpush1.msra.mxu0 0.0
      %2090 = vmatprep.subr.mxu0 0.0
      %2091 = vmatpush1.msra.mxu0 0.0
      %2092 = vmatprep.subr.mxu0 0.0
      %2093 = vmatpush1.msra.mxu0 0.0
      %2094 = vmatprep.subr.mxu0 0.0
      %2095 = vmatpush1.msra.mxu0 0.0
      %2096 = vmatprep.subr.mxu0 0.0
      %2097 = vmatpush1.msra.mxu0 0.0
      %2098 = vmatprep.subr.mxu0 0.0
      %2099 = vmatpush1.msra.mxu0 0.0
      %2100 = vmatprep.subr.mxu0 0.0
      %2101 = vmatpush1.msra.mxu0 0.0
      %2102 = vmatprep.subr.mxu0 0.0
      %2103 = vmatpush1.msra.mxu0 0.0
      %2104 = vmatprep.subr.mxu0 0.0
      %2105 = vmatpush1.msra.mxu0 0.0
      %2106 = vmatprep.subr.mxu0 0.0
      %2107 = vmatpush1.msra.mxu0 0.0
      %2108 = vmatprep.subr.mxu0 0.0
      %2109 = vmatpush1.msra.mxu0 0.0
      %2110 = vmatprep.subr.mxu0 0.0
      %2111 = vmatpush1.msra.mxu0 0.0
      %2112 = vmatprep.subr.mxu0 0.0
      %2113 = vmatpush1.msra.mxu0 0.0
      %2114 = vmatprep.subr.mxu0 0.0
      %2115 = vmatpush1.msra.mxu0 0.0
      %2116 = vmatprep.subr.mxu0 0.0
      %2117 = vmatpush1.msra.mxu0 0.0
      %2118 = vmatprep.subr.mxu0 0.0
      %2119 = vmatpush1.msra.mxu0 0.0
      %2120 = vmatprep.subr.mxu0 0.0
      %2121 = vmatpush1.msra.mxu0 0.0
      %2122 = vmatprep.subr.mxu0 0.0
      %2123 = vmatpush1.msra.mxu0 0.0
      %2124 = vmatprep.subr.mxu0 0.0
      %2125 = vmatpush1.msra.mxu0 0.0
      %2126 = vmatprep.subr.mxu0 0.0
      %2127 = vmatpush1.msra.mxu0 0.0
      %2128 = vmatprep.subr.mxu0 0.0
      %2129 = vmatpush1.msra.mxu0 0.0
      %2130 = vmatprep.subr.mxu0 0.0
      %2131 = vmatpush1.msra.mxu0 0.0
      %2132 = vmatprep.subr.mxu0 0.0
      %2133 = vmatpush1.msra.mxu0 0.0
      %2134 = vmatprep.mubr.f32.mxu0 0.0
      %2135 = vmatmul.mubr.f32.gmra.mrb[0].mxu0 %v2059
      %v2136 = vpop.f32.mrb[0].mxu0
      %v2137 = vadd.f32 %v811, %v2136
      %v2138 = vpop.f32.mrb[0].mxu0
      %2139 = vmatprep.mubr.f32.mxu0 0.0
      %2140 = vmatmul.mubr.f32.gmra.mrb[0].mxu0 %v2062
      %v2141 = vpop.f32.mrb[0].mxu0
      %v2142 = vadd.f32 %v811, %v2141
      %v2143 = vpop.f32.mrb[0].mxu0
      %2144 = vmatprep.mubr.f32.mxu0 0.0
      %2145 = vmatmul.mubr.f32.gmra.mrb[0].mxu0 %v2065
      %v2146 = vpop.f32.mrb[0].mxu0
      %v2147 = vadd.f32 %v811, %v2146
      %v2148 = vpop.f32.mrb[0].mxu0
      %2149 = vmatprep.mubr.f32.mxu0 0.0
      %2150 = vmatmul.mubr.f32.gmra.mrb[0].mxu0 %v2068
      %v2151 = vpop.f32.mrb[0].mxu0
      %v2152 = vadd.f32 %v811, %v2151
      %v2153 = vpop.f32.mrb[0].mxu0
      %2154 = vdwg.mxu0
      %2155 = vmatprep.subr.mxu0 0.0
      %2156 = vmatpush1.msra.mxu0 %v468
      %2157 = vmatprep.subr.mxu0 0.0
      %2158 = vmatpush1.msra.mxu0 %v469
      %2159 = vmatprep.subr.mxu0 0.0
      %2160 = vmatpush1.msra.mxu0 %v470
      %2161 = vmatprep.subr.mxu0 0.0
      %2162 = vmatpush1.msra.mxu0 %v471
      %2163 = vmatprep.subr.mxu0 0.0
      %2164 = vmatpush1.msra.mxu0 0.0
      %2165 = vmatprep.subr.mxu0 0.0
      %2166 = vmatpush1.msra.mxu0 0.0
      %2167 = vmatprep.subr.mxu0 0.0
      %2168 = vmatpush1.msra.mxu0 0.0
      %2169 = vmatprep.subr.mxu0 0.0
      %2170 = vmatpush1.msra.mxu0 0.0
      %2171 = vmatprep.subr.mxu0 0.0
      %2172 = vmatpush1.msra.mxu0 0.0
      %2173 = vmatprep.subr.mxu0 0.0
      %2174 = vmatpush1.msra.mxu0 0.0
      %2175 = vmatprep.subr.mxu0 0.0
      %2176 = vmatpush1.msra.mxu0 0.0
      %2177 = vmatprep.subr.mxu0 0.0
      %2178 = vmatpush1.msra.mxu0 0.0
      %2179 = vmatprep.subr.mxu0 0.0
      %2180 = vmatpush1.msra.mxu0 0.0
      %2181 = vmatprep.subr.mxu0 0.0
      %2182 = vmatpush1.msra.mxu0 0.0
      %2183 = vmatprep.subr.mxu0 0.0
      %2184 = vmatpush1.msra.mxu0 0.0
      %2185 = vmatprep.subr.mxu0 0.0
      %2186 = vmatpush1.msra.mxu0 0.0
      %2187 = vmatprep.subr.mxu0 0.0
      %2188 = vmatpush1.msra.mxu0 0.0
      %2189 = vmatprep.subr.mxu0 0.0
      %2190 = vmatpush1.msra.mxu0 0.0
      %2191 = vmatprep.subr.mxu0 0.0
      %2192 = vmatpush1.msra.mxu0 0.0
      %2193 = vmatprep.subr.mxu0 0.0
      %2194 = vmatpush1.msra.mxu0 0.0
      %2195 = vmatprep.subr.mxu0 0.0
      %2196 = vmatpush1.msra.mxu0 0.0
      %2197 = vmatprep.subr.mxu0 0.0
      %2198 = vmatpush1.msra.mxu0 0.0
      %2199 = vmatprep.subr.mxu0 0.0
      %2200 = vmatpush1.msra.mxu0 0.0
      %2201 = vmatprep.subr.mxu0 0.0
      %2202 = vmatpush1.msra.mxu0 0.0
      %2203 = vmatprep.subr.mxu0 0.0
      %2204 = vmatpush1.msra.mxu0 0.0
      %2205 = vmatprep.subr.mxu0 0.0
      %2206 = vmatpush1.msra.mxu0 0.0
      %2207 = vmatprep.subr.mxu0 0.0
      %2208 = vmatpush1.msra.mxu0 0.0
      %2209 = vmatprep.subr.mxu0 0.0
      %2210 = vmatpush1.msra.mxu0 0.0
      %2211 = vmatprep.subr.mxu0 0.0
      %2212 = vmatpush1.msra.mxu0 0.0
      %2213 = vmatprep.subr.mxu0 0.0
      %2214 = vmatpush1.msra.mxu0 0.0
      %2215 = vmatprep.subr.mxu0 0.0
      %2216 = vmatpush1.msra.mxu0 0.0
      %2217 = vmatprep.subr.mxu0 0.0
      %2218 = vmatpush1.msra.mxu0 0.0
      %2219 = vmatprep.mubr.f32.mxu0 0.0
      %2220 = vmatmul.mubr.f32.gmra.mrb[0].mxu0 %v2059
      %v2221 = vpop.f32.mrb[0].mxu0
      %v2222 = vadd.f32 %v914, %v2221
      %v2223 = vpop.f32.mrb[0].mxu0
      %2224 = vmatprep.mubr.f32.mxu0 0.0
      %2225 = vmatmul.mubr.f32.gmra.mrb[0].mxu0 %v2062
      %v2226 = vpop.f32.mrb[0].mxu0
      %v2227 = vadd.f32 %v914, %v2226
      %v2228 = vpop.f32.mrb[0].mxu0
      %2229 = vmatprep.mubr.f32.mxu0 0.0
      %2230 = vmatmul.mubr.f32.gmra.mrb[0].mxu0 %v2065
      %v2231 = vpop.f32.mrb[0].mxu0
      %v2232 = vadd.f32 %v914, %v2231
      %v2233 = vpop.f32.mrb[0].mxu0
      %2234 = vmatprep.mubr.f32.mxu0 0.0
      %2235 = vmatmul.mubr.f32.gmra.mrb[0].mxu0 %v2068
      %v2236 = vpop.f32.mrb[0].mxu0
      %v2237 = vadd.f32 %v914, %v2236
      %v2238 = vpop.f32.mrb[0].mxu0
      %2239 = vdwg.mxu0
      %vm2240 = vcmp.eq.s32.totalorder %v588, 3
      %v2241 = vmul.f32 %v2222, 1.442695
      %v2242 = vpow.pop %v2241
      %v2243 = vmul.f32 %v2227, 1.442695
      %v2244 = vpow.pop %v2243
      %v2245 = vmul.f32 %v2232, 1.442695
      %v2246 = vpow.pop %v2245
      %v2247 = vmul.f32 %v2237, 1.442695
      %v2248 = vpow.pop %v2247
      %v2249 = vmul.f32 %v453, %v2242
      %v2250 = vmul.f32 %v454, %v2244
      %v2251 = vmul.f32 %v455, %v2246
      %v2252 = vmul.f32 %v456, %v2248
      %v2253 = vadd.f32 %v2249, %v2137
      %v2254 = vadd.f32 %v2250, %v2142
      %v2255 = vadd.f32 %v2251, %v2147
      %v2256 = vadd.f32 %v2252, %v2152
      %v2257 = vsel %vm2240, %v2253, %v1852
      %v2258 = vsel %vm2240, %v2254, %v1853
      %v2259 = vsel %vm2240, %v2255, %v1854
      %v2260 = vsel %vm2240, %v2256, %v1855
      %2261 = vst.msk [vmem:[#allocation2] sm:$0xff] %vm589, %v2257
      %2262 = vst.msk [vmem:[#allocation2 + $0x8] sm:$0xff] %vm589, %v2258
      %2263 = vst.msk [vmem:[#allocation2 + $0x10] sm:$0xff] %vm589, %v2259
      %2264 = vst.msk [vmem:[#allocation2 + $0x18] sm:$0xff] %vm589, %v2260
      %v2265 = vld [vmem:[#allocation2] sm:$0xff]
      %v2266 = vld [vmem:[#allocation2 + $0x8] sm:$0xff]
      %v2267 = vld [vmem:[#allocation2 + $0x10] sm:$0xff]
      %v2268 = vld [vmem:[#allocation2 + $0x18] sm:$0xff]
      %v2270 = vsel %vm589, %v2265, 0
      %v2273 = vsel %vm589, %v2266, 0
      %v2276 = vsel %vm589, %v2267, 0
      %v2279 = vsel %vm589, %v2268, 0
      %2281 = vmatprep.subr.mxu0 0.0
      %2282 = vmatpush1.msra.mxu0 %v457
      %2283 = vmatprep.subr.mxu0 0.0
      %2284 = vmatpush1.msra.mxu0 0.0
      %2285 = vmatprep.subr.mxu0 0.0
      %2286 = vmatpush1.msra.mxu0 0.0
      %2287 = vmatprep.subr.mxu0 0.0
      %2288 = vmatpush1.msra.mxu0 0.0
      %2289 = vmatprep.subr.mxu0 0.0
      %2290 = vmatpush1.msra.mxu0 0.0
      %2291 = vmatprep.subr.mxu0 0.0
      %2292 = vmatpush1.msra.mxu0 0.0
      %2293 = vmatprep.subr.mxu0 0.0
      %2294 = vmatpush1.msra.mxu0 0.0
      %2295 = vmatprep.subr.mxu0 0.0
      %2296 = vmatpush1.msra.mxu0 0.0
      %2297 = vmatprep.subr.mxu0 0.0
      %2298 = vmatpush1.msra.mxu0 0.0
      %2299 = vmatprep.subr.mxu0 0.0
      %2300 = vmatpush1.msra.mxu0 0.0
      %2301 = vmatprep.subr.mxu0 0.0
      %2302 = vmatpush1.msra.mxu0 0.0
      %2303 = vmatprep.subr.mxu0 0.0
      %2304 = vmatpush1.msra.mxu0 0.0
      %2305 = vmatprep.subr.mxu0 0.0
      %2306 = vmatpush1.msra.mxu0 0.0
      %2307 = vmatprep.subr.mxu0 0.0
      %2308 = vmatpush1.msra.mxu0 0.0
      %2309 = vmatprep.subr.mxu0 0.0
      %2310 = vmatpush1.msra.mxu0 0.0
      %2311 = vmatprep.subr.mxu0 0.0
      %2312 = vmatpush1.msra.mxu0 0.0
      %2313 = vmatprep.subr.mxu0 0.0
      %2314 = vmatpush1.msra.mxu0 0.0
      %2315 = vmatprep.subr.mxu0 0.0
      %2316 = vmatpush1.msra.mxu0 0.0
      %2317 = vmatprep.subr.mxu0 0.0
      %2318 = vmatpush1.msra.mxu0 0.0
      %2319 = vmatprep.subr.mxu0 0.0
      %2320 = vmatpush1.msra.mxu0 0.0
      %2321 = vmatprep.subr.mxu0 0.0
      %2322 = vmatpush1.msra.mxu0 0.0
      %2323 = vmatprep.subr.mxu0 0.0
      %2324 = vmatpush1.msra.mxu0 0.0
      %2325 = vmatprep.subr.mxu0 0.0
      %2326 = vmatpush1.msra.mxu0 0.0
      %2327 = vmatprep.subr.mxu0 0.0
      %2328 = vmatpush1.msra.mxu0 0.0
      %2329 = vmatprep.subr.mxu0 0.0
      %2330 = vmatpush1.msra.mxu0 0.0
      %2331 = vmatprep.subr.mxu0 0.0
      %2332 = vmatpush1.msra.mxu0 0.0
      %2333 = vmatprep.subr.mxu0 0.0
      %2334 = vmatpush1.msra.mxu0 0.0
      %2335 = vmatprep.subr.mxu0 0.0
      %2336 = vmatpush1.msra.mxu0 0.0
      %2337 = vmatprep.subr.mxu0 0.0
      %2338 = vmatpush1.msra.mxu0 0.0
      %2339 = vmatprep.subr.mxu0 0.0
      %2340 = vmatpush1.msra.mxu0 0.0
      %2341 = vmatprep.subr.mxu0 0.0
      %2342 = vmatpush1.msra.mxu0 0.0
      %2343 = vmatprep.subr.mxu0 0.0
      %2344 = vmatpush1.msra.mxu0 0.0
      %2345 = vmatprep.mubr.f32.mxu0 0.0
      %2346 = vmatmul.mubr.f32.gmra.mrb[0].mxu0 %v2270
      %v2347 = vpop.f32.mrb[0].mxu0
      %v2348 = vadd.f32 %v569, %v2347
      %v2349 = vpop.f32.mrb[0].mxu0
      %2350 = vmatprep.mubr.f32.mxu0 0.0
      %2351 = vmatmul.mubr.f32.gmra.mrb[0].mxu0 %v2273
      %v2352 = vpop.f32.mrb[0].mxu0
      %v2353 = vadd.f32 %v574, %v2352
      %v2354 = vpop.f32.mrb[0].mxu0
      %2355 = vmatprep.mubr.f32.mxu0 0.0
      %2356 = vmatmul.mubr.f32.gmra.mrb[0].mxu0 %v2276
      %v2357 = vpop.f32.mrb[0].mxu0
      %v2358 = vadd.f32 %v579, %v2357
      %v2359 = vpop.f32.mrb[0].mxu0
      %2360 = vmatprep.mubr.f32.mxu0 0.0
      %2361 = vmatmul.mubr.f32.gmra.mrb[0].mxu0 %v2279
      %v2362 = vpop.f32.mrb[0].mxu0
      %v2363 = vadd.f32 %v584, %v2362
      %v2364 = vpop.f32.mrb[0].mxu0
      %2365 = vdwg.mxu0
      %v2366 = vmax.f32 %v2348, 0.0
      %v2367 = vmax.f32 %v2353, 0.0
      %v2368 = vmax.f32 %v2358, 0.0
      %v2369 = vmax.f32 %v2363, 0.0
      %v2371 = vsel %vm705, %v2366, 0
      %v2374 = vsel %vm705, %v2367, 0
      %v2377 = vsel %vm705, %v2368, 0
      %v2380 = vsel %vm705, %v2369, 0
      %2382 = vmatprep.subr.mxu0 0.0
      %2383 = vmatpush1.msra.mxu0 %v458
      %2384 = vmatprep.subr.mxu0 0.0
      %2385 = vmatpush1.msra.mxu0 %v459
      %2386 = vmatprep.subr.mxu0 0.0
      %2387 = vmatpush1.msra.mxu0 %v460
      %2388 = vmatprep.subr.mxu0 0.0
      %2389 = vmatpush1.msra.mxu0 %v461
      %2390 = vmatprep.subr.mxu0 0.0
      %2391 = vmatpush1.msra.mxu0 0.0
      %2392 = vmatprep.subr.mxu0 0.0
      %2393 = vmatpush1.msra.mxu0 0.0
      %2394 = vmatprep.subr.mxu0 0.0
      %2395 = vmatpush1.msra.mxu0 0.0
      %2396 = vmatprep.subr.mxu0 0.0
      %2397 = vmatpush1.msra.mxu0 0.0
      %2398 = vmatprep.subr.mxu0 0.0
      %2399 = vmatpush1.msra.mxu0 0.0
      %2400 = vmatprep.subr.mxu0 0.0
      %2401 = vmatpush1.msra.mxu0 0.0
      %2402 = vmatprep.subr.mxu0 0.0
      %2403 = vmatpush1.msra.mxu0 0.0
      %2404 = vmatprep.subr.mxu0 0.0
      %2405 = vmatpush1.msra.mxu0 0.0
      %2406 = vmatprep.subr.mxu0 0.0
      %2407 = vmatpush1.msra.mxu0 0.0
      %2408 = vmatprep.subr.mxu0 0.0
      %2409 = vmatpush1.msra.mxu0 0.0
      %2410 = vmatprep.subr.mxu0 0.0
      %2411 = vmatpush1.msra.mxu0 0.0
      %2412 = vmatprep.subr.mxu0 0.0
      %2413 = vmatpush1.msra.mxu0 0.0
      %2414 = vmatprep.subr.mxu0 0.0
      %2415 = vmatpush1.msra.mxu0 0.0
      %2416 = vmatprep.subr.mxu0 0.0
      %2417 = vmatpush1.msra.mxu0 0.0
      %2418 = vmatprep.subr.mxu0 0.0
      %2419 = vmatpush1.msra.mxu0 0.0
      %2420 = vmatprep.subr.mxu0 0.0
      %2421 = vmatpush1.msra.mxu0 0.0
      %2422 = vmatprep.subr.mxu0 0.0
      %2423 = vmatpush1.msra.mxu0 0.0
      %2424 = vmatprep.subr.mxu0 0.0
      %2425 = vmatpush1.msra.mxu0 0.0
      %2426 = vmatprep.subr.mxu0 0.0
      %2427 = vmatpush1.msra.mxu0 0.0
      %2428 = vmatprep.subr.mxu0 0.0
      %2429 = vmatpush1.msra.mxu0 0.0
      %2430 = vmatprep.subr.mxu0 0.0
      %2431 = vmatpush1.msra.mxu0 0.0
      %2432 = vmatprep.subr.mxu0 0.0
      %2433 = vmatpush1.msra.mxu0 0.0
      %2434 = vmatprep.subr.mxu0 0.0
      %2435 = vmatpush1.msra.mxu0 0.0
      %2436 = vmatprep.subr.mxu0 0.0
      %2437 = vmatpush1.msra.mxu0 0.0
      %2438 = vmatprep.subr.mxu0 0.0
      %2439 = vmatpush1.msra.mxu0 0.0
      %2440 = vmatprep.subr.mxu0 0.0
      %2441 = vmatpush1.msra.mxu0 0.0
      %2442 = vmatprep.subr.mxu0 0.0
      %2443 = vmatpush1.msra.mxu0 0.0
      %2444 = vmatprep.subr.mxu0 0.0
      %2445 = vmatpush1.msra.mxu0 0.0
      %2446 = vmatprep.mubr.f32.mxu0 0.0
      %2447 = vmatmul.mubr.f32.gmra.mrb[0].mxu0 %v2371
      %v2448 = vpop.f32.mrb[0].mxu0
      %v2449 = vadd.f32 %v703, %v2448
      %v2450 = vpop.f32.mrb[0].mxu0
      %2451 = vmatprep.mubr.f32.mxu0 0.0
      %2452 = vmatmul.mubr.f32.gmra.mrb[0].mxu0 %v2374
      %v2453 = vpop.f32.mrb[0].mxu0
      %v2454 = vadd.f32 %v703, %v2453
      %v2455 = vpop.f32.mrb[0].mxu0
      %2456 = vmatprep.mubr.f32.mxu0 0.0
      %2457 = vmatmul.mubr.f32.gmra.mrb[0].mxu0 %v2377
      %v2458 = vpop.f32.mrb[0].mxu0
      %v2459 = vadd.f32 %v703, %v2458
      %v2460 = vpop.f32.mrb[0].mxu0
      %2461 = vmatprep.mubr.f32.mxu0 0.0
      %2462 = vmatmul.mubr.f32.gmra.mrb[0].mxu0 %v2380
      %v2463 = vpop.f32.mrb[0].mxu0
      %v2464 = vadd.f32 %v703, %v2463
      %v2465 = vpop.f32.mrb[0].mxu0
      %2466 = vdwg.mxu0
      %v2467 = vmax.f32 %v2449, 0.0
      %v2468 = vmax.f32 %v2454, 0.0
      %v2469 = vmax.f32 %v2459, 0.0
      %v2470 = vmax.f32 %v2464, 0.0
      %v2472 = vsel %vm705, %v2467, 0
      %v2475 = vsel %vm705, %v2468, 0
      %v2478 = vsel %vm705, %v2469, 0
      %v2481 = vsel %vm705, %v2470, 0
      %2483 = vmatprep.subr.mxu0 0.0
      %2484 = vmatpush1.msra.mxu0 %v463
      %2485 = vmatprep.subr.mxu0 0.0
      %2486 = vmatpush1.msra.mxu0 %v464
      %2487 = vmatprep.subr.mxu0 0.0
      %2488 = vmatpush1.msra.mxu0 %v465
      %2489 = vmatprep.subr.mxu0 0.0
      %2490 = vmatpush1.msra.mxu0 %v466
      %2491 = vmatprep.subr.mxu0 0.0
      %2492 = vmatpush1.msra.mxu0 0.0
      %2493 = vmatprep.subr.mxu0 0.0
      %2494 = vmatpush1.msra.mxu0 0.0
      %2495 = vmatprep.subr.mxu0 0.0
      %2496 = vmatpush1.msra.mxu0 0.0
      %2497 = vmatprep.subr.mxu0 0.0
      %2498 = vmatpush1.msra.mxu0 0.0
      %2499 = vmatprep.subr.mxu0 0.0
      %2500 = vmatpush1.msra.mxu0 0.0
      %2501 = vmatprep.subr.mxu0 0.0
      %2502 = vmatpush1.msra.mxu0 0.0
      %2503 = vmatprep.subr.mxu0 0.0
      %2504 = vmatpush1.msra.mxu0 0.0
      %2505 = vmatprep.subr.mxu0 0.0
      %2506 = vmatpush1.msra.mxu0 0.0
      %2507 = vmatprep.subr.mxu0 0.0
      %2508 = vmatpush1.msra.mxu0 0.0
      %2509 = vmatprep.subr.mxu0 0.0
      %2510 = vmatpush1.msra.mxu0 0.0
      %2511 = vmatprep.subr.mxu0 0.0
      %2512 = vmatpush1.msra.mxu0 0.0
      %2513 = vmatprep.subr.mxu0 0.0
      %2514 = vmatpush1.msra.mxu0 0.0
      %2515 = vmatprep.subr.mxu0 0.0
      %2516 = vmatpush1.msra.mxu0 0.0
      %2517 = vmatprep.subr.mxu0 0.0
      %2518 = vmatpush1.msra.mxu0 0.0
      %2519 = vmatprep.subr.mxu0 0.0
      %2520 = vmatpush1.msra.mxu0 0.0
      %2521 = vmatprep.subr.mxu0 0.0
      %2522 = vmatpush1.msra.mxu0 0.0
      %2523 = vmatprep.subr.mxu0 0.0
      %2524 = vmatpush1.msra.mxu0 0.0
      %2525 = vmatprep.subr.mxu0 0.0
      %2526 = vmatpush1.msra.mxu0 0.0
      %2527 = vmatprep.subr.mxu0 0.0
      %2528 = vmatpush1.msra.mxu0 0.0
      %2529 = vmatprep.subr.mxu0 0.0
      %2530 = vmatpush1.msra.mxu0 0.0
      %2531 = vmatprep.subr.mxu0 0.0
      %2532 = vmatpush1.msra.mxu0 0.0
      %2533 = vmatprep.subr.mxu0 0.0
      %2534 = vmatpush1.msra.mxu0 0.0
      %2535 = vmatprep.subr.mxu0 0.0
      %2536 = vmatpush1.msra.mxu0 0.0
      %2537 = vmatprep.subr.mxu0 0.0
      %2538 = vmatpush1.msra.mxu0 0.0
      %2539 = vmatprep.subr.mxu0 0.0
      %2540 = vmatpush1.msra.mxu0 0.0
      %2541 = vmatprep.subr.mxu0 0.0
      %2542 = vmatpush1.msra.mxu0 0.0
      %2543 = vmatprep.subr.mxu0 0.0
      %2544 = vmatpush1.msra.mxu0 0.0
      %2545 = vmatprep.subr.mxu0 0.0
      %2546 = vmatpush1.msra.mxu0 0.0
      %2547 = vmatprep.mubr.f32.mxu0 0.0
      %2548 = vmatmul.mubr.f32.gmra.mrb[0].mxu0 %v2472
      %v2549 = vpop.f32.mrb[0].mxu0
      %v2550 = vadd.f32 %v811, %v2549
      %v2551 = vpop.f32.mrb[0].mxu0
      %2552 = vmatprep.mubr.f32.mxu0 0.0
      %2553 = vmatmul.mubr.f32.gmra.mrb[0].mxu0 %v2475
      %v2554 = vpop.f32.mrb[0].mxu0
      %v2555 = vadd.f32 %v811, %v2554
      %v2556 = vpop.f32.mrb[0].mxu0
      %2557 = vmatprep.mubr.f32.mxu0 0.0
      %2558 = vmatmul.mubr.f32.gmra.mrb[0].mxu0 %v2478
      %v2559 = vpop.f32.mrb[0].mxu0
      %v2560 = vadd.f32 %v811, %v2559
      %v2561 = vpop.f32.mrb[0].mxu0
      %2562 = vmatprep.mubr.f32.mxu0 0.0
      %2563 = vmatmul.mubr.f32.gmra.mrb[0].mxu0 %v2481
      %v2564 = vpop.f32.mrb[0].mxu0
      %v2565 = vadd.f32 %v811, %v2564
      %v2566 = vpop.f32.mrb[0].mxu0
      %2567 = vdwg.mxu0
      %2568 = vmatprep.subr.mxu0 0.0
      %2569 = vmatpush1.msra.mxu0 %v468
      %2570 = vmatprep.subr.mxu0 0.0
      %2571 = vmatpush1.msra.mxu0 %v469
      %2572 = vmatprep.subr.mxu0 0.0
      %2573 = vmatpush1.msra.mxu0 %v470
      %2574 = vmatprep.subr.mxu0 0.0
      %2575 = vmatpush1.msra.mxu0 %v471
      %2576 = vmatprep.subr.mxu0 0.0
      %2577 = vmatpush1.msra.mxu0 0.0
      %2578 = vmatprep.subr.mxu0 0.0
      %2579 = vmatpush1.msra.mxu0 0.0
      %2580 = vmatprep.subr.mxu0 0.0
      %2581 = vmatpush1.msra.mxu0 0.0
      %2582 = vmatprep.subr.mxu0 0.0
      %2583 = vmatpush1.msra.mxu0 0.0
      %2584 = vmatprep.subr.mxu0 0.0
      %2585 = vmatpush1.msra.mxu0 0.0
      %2586 = vmatprep.subr.mxu0 0.0
      %2587 = vmatpush1.msra.mxu0 0.0
      %2588 = vmatprep.subr.mxu0 0.0
      %2589 = vmatpush1.msra.mxu0 0.0
      %2590 = vmatprep.subr.mxu0 0.0
      %2591 = vmatpush1.msra.mxu0 0.0
      %2592 = vmatprep.subr.mxu0 0.0
      %2593 = vmatpush1.msra.mxu0 0.0
      %2594 = vmatprep.subr.mxu0 0.0
      %2595 = vmatpush1.msra.mxu0 0.0
      %2596 = vmatprep.subr.mxu0 0.0
      %2597 = vmatpush1.msra.mxu0 0.0
      %2598 = vmatprep.subr.mxu0 0.0
      %2599 = vmatpush1.msra.mxu0 0.0
      %2600 = vmatprep.subr.mxu0 0.0
      %2601 = vmatpush1.msra.mxu0 0.0
      %2602 = vmatprep.subr.mxu0 0.0
      %2603 = vmatpush1.msra.mxu0 0.0
      %2604 = vmatprep.subr.mxu0 0.0
      %2605 = vmatpush1.msra.mxu0 0.0
      %2606 = vmatprep.subr.mxu0 0.0
      %2607 = vmatpush1.msra.mxu0 0.0
      %2608 = vmatprep.subr.mxu0 0.0
      %2609 = vmatpush1.msra.mxu0 0.0
      %2610 = vmatprep.subr.mxu0 0.0
      %2611 = vmatpush1.msra.mxu0 0.0
      %2612 = vmatprep.subr.mxu0 0.0
      %2613 = vmatpush1.msra.mxu0 0.0
      %2614 = vmatprep.subr.mxu0 0.0
      %2615 = vmatpush1.msra.mxu0 0.0
      %2616 = vmatprep.subr.mxu0 0.0
      %2617 = vmatpush1.msra.mxu0 0.0
      %2618 = vmatprep.subr.mxu0 0.0
      %2619 = vmatpush1.msra.mxu0 0.0
      %2620 = vmatprep.subr.mxu0 0.0
      %2621 = vmatpush1.msra.mxu0 0.0
      %2622 = vmatprep.subr.mxu0 0.0
      %2623 = vmatpush1.msra.mxu0 0.0
      %2624 = vmatprep.subr.mxu0 0.0
      %2625 = vmatpush1.msra.mxu0 0.0
      %2626 = vmatprep.subr.mxu0 0.0
      %2627 = vmatpush1.msra.mxu0 0.0
      %2628 = vmatprep.subr.mxu0 0.0
      %2629 = vmatpush1.msra.mxu0 0.0
      %2630 = vmatprep.subr.mxu0 0.0
      %2631 = vmatpush1.msra.mxu0 0.0
      %2632 = vmatprep.mubr.f32.mxu0 0.0
      %2633 = vmatmul.mubr.f32.gmra.mrb[0].mxu0 %v2472
      %v2634 = vpop.f32.mrb[0].mxu0
      %v2635 = vadd.f32 %v914, %v2634
      %v2636 = vpop.f32.mrb[0].mxu0
      %2637 = vmatprep.mubr.f32.mxu0 0.0
      %2638 = vmatmul.mubr.f32.gmra.mrb[0].mxu0 %v2475
      %v2639 = vpop.f32.mrb[0].mxu0
      %v2640 = vadd.f32 %v914, %v2639
      %v2641 = vpop.f32.mrb[0].mxu0
      %2642 = vmatprep.mubr.f32.mxu0 0.0
      %2643 = vmatmul.mubr.f32.gmra.mrb[0].mxu0 %v2478
      %v2644 = vpop.f32.mrb[0].mxu0
      %v2645 = vadd.f32 %v914, %v2644
      %v2646 = vpop.f32.mrb[0].mxu0
      %2647 = vmatprep.mubr.f32.mxu0 0.0
      %2648 = vmatmul.mubr.f32.gmra.mrb[0].mxu0 %v2481
      %v2649 = vpop.f32.mrb[0].mxu0
      %v2650 = vadd.f32 %v914, %v2649
      %v2651 = vpop.f32.mrb[0].mxu0
      %2652 = vdwg.mxu0
      %vm2653 = vcmp.eq.s32.totalorder %v588, 4
      %v2654 = vmul.f32 %v2635, 1.442695
      %v2655 = vpow.pop %v2654
      %v2656 = vmul.f32 %v2640, 1.442695
      %v2657 = vpow.pop %v2656
      %v2658 = vmul.f32 %v2645, 1.442695
      %v2659 = vpow.pop %v2658
      %v2660 = vmul.f32 %v2650, 1.442695
      %v2661 = vpow.pop %v2660
      %v2662 = vmul.f32 %v453, %v2655
      %v2663 = vmul.f32 %v454, %v2657
      %v2664 = vmul.f32 %v455, %v2659
      %v2665 = vmul.f32 %v456, %v2661
      %v2666 = vadd.f32 %v2662, %v2550
      %v2667 = vadd.f32 %v2663, %v2555
      %v2668 = vadd.f32 %v2664, %v2560
      %v2669 = vadd.f32 %v2665, %v2565
      %v2670 = vsel %vm2653, %v2666, %v2265
      %v2671 = vsel %vm2653, %v2667, %v2266
      %v2672 = vsel %vm2653, %v2668, %v2267
      %v2673 = vsel %vm2653, %v2669, %v2268
      %2674 = vst.msk [vmem:[#allocation2] sm:$0xff] %vm589, %v2670
      %2675 = vst.msk [vmem:[#allocation2 + $0x8] sm:$0xff] %vm589, %v2671
      %2676 = vst.msk [vmem:[#allocation2 + $0x10] sm:$0xff] %vm589, %v2672
      %2677 = vst.msk [vmem:[#allocation2 + $0x18] sm:$0xff] %vm589, %v2673
      %v2678 = vld [vmem:[#allocation2] sm:$0xff]
      %v2679 = vld [vmem:[#allocation2 + $0x8] sm:$0xff]
      %v2680 = vld [vmem:[#allocation2 + $0x10] sm:$0xff]
      %v2681 = vld [vmem:[#allocation2 + $0x18] sm:$0xff]
      %v2683 = vsel %vm589, %v2678, 0
      %v2686 = vsel %vm589, %v2679, 0
      %v2689 = vsel %vm589, %v2680, 0
      %v2692 = vsel %vm589, %v2681, 0
      %2694 = vmatprep.subr.mxu0 0.0
      %2695 = vmatpush1.msra.mxu0 %v457
      %2696 = vmatprep.subr.mxu0 0.0
      %2697 = vmatpush1.msra.mxu0 0.0
      %2698 = vmatprep.subr.mxu0 0.0
      %2699 = vmatpush1.msra.mxu0 0.0
      %2700 = vmatprep.subr.mxu0 0.0
      %2701 = vmatpush1.msra.mxu0 0.0
      %2702 = vmatprep.subr.mxu0 0.0
      %2703 = vmatpush1.msra.mxu0 0.0
      %2704 = vmatprep.subr.mxu0 0.0
      %2705 = vmatpush1.msra.mxu0 0.0
      %2706 = vmatprep.subr.mxu0 0.0
      %2707 = vmatpush1.msra.mxu0 0.0
      %2708 = vmatprep.subr.mxu0 0.0
      %2709 = vmatpush1.msra.mxu0 0.0
      %2710 = vmatprep.subr.mxu0 0.0
      %2711 = vmatpush1.msra.mxu0 0.0
      %2712 = vmatprep.subr.mxu0 0.0
      %2713 = vmatpush1.msra.mxu0 0.0
      %2714 = vmatprep.subr.mxu0 0.0
      %2715 = vmatpush1.msra.mxu0 0.0
      %2716 = vmatprep.subr.mxu0 0.0
      %2717 = vmatpush1.msra.mxu0 0.0
      %2718 = vmatprep.subr.mxu0 0.0
      %2719 = vmatpush1.msra.mxu0 0.0
      %2720 = vmatprep.subr.mxu0 0.0
      %2721 = vmatpush1.msra.mxu0 0.0
      %2722 = vmatprep.subr.mxu0 0.0
      %2723 = vmatpush1.msra.mxu0 0.0
      %2724 = vmatprep.subr.mxu0 0.0
      %2725 = vmatpush1.msra.mxu0 0.0
      %2726 = vmatprep.subr.mxu0 0.0
      %2727 = vmatpush1.msra.mxu0 0.0
      %2728 = vmatprep.subr.mxu0 0.0
      %2729 = vmatpush1.msra.mxu0 0.0
      %2730 = vmatprep.subr.mxu0 0.0
      %2731 = vmatpush1.msra.mxu0 0.0
      %2732 = vmatprep.subr.mxu0 0.0
      %2733 = vmatpush1.msra.mxu0 0.0
      %2734 = vmatprep.subr.mxu0 0.0
      %2735 = vmatpush1.msra.mxu0 0.0
      %2736 = vmatprep.subr.mxu0 0.0
      %2737 = vmatpush1.msra.mxu0 0.0
      %2738 = vmatprep.subr.mxu0 0.0
      %2739 = vmatpush1.msra.mxu0 0.0
      %2740 = vmatprep.subr.mxu0 0.0
      %2741 = vmatpush1.msra.mxu0 0.0
      %2742 = vmatprep.subr.mxu0 0.0
      %2743 = vmatpush1.msra.mxu0 0.0
      %2744 = vmatprep.subr.mxu0 0.0
      %2745 = vmatpush1.msra.mxu0 0.0
      %2746 = vmatprep.subr.mxu0 0.0
      %2747 = vmatpush1.msra.mxu0 0.0
      %2748 = vmatprep.subr.mxu0 0.0
      %2749 = vmatpush1.msra.mxu0 0.0
      %2750 = vmatprep.subr.mxu0 0.0
      %2751 = vmatpush1.msra.mxu0 0.0
      %2752 = vmatprep.subr.mxu0 0.0
      %2753 = vmatpush1.msra.mxu0 0.0
      %2754 = vmatprep.subr.mxu0 0.0
      %2755 = vmatpush1.msra.mxu0 0.0
      %2756 = vmatprep.subr.mxu0 0.0
      %2757 = vmatpush1.msra.mxu0 0.0
      %2758 = vmatprep.mubr.f32.mxu0 0.0
      %2759 = vmatmul.mubr.f32.gmra.mrb[0].mxu0 %v2683
      %v2760 = vpop.f32.mrb[0].mxu0
      %v2761 = vadd.f32 %v569, %v2760
      %v2762 = vpop.f32.mrb[0].mxu0
      %2763 = vmatprep.mubr.f32.mxu0 0.0
      %2764 = vmatmul.mubr.f32.gmra.mrb[0].mxu0 %v2686
      %v2765 = vpop.f32.mrb[0].mxu0
      %v2766 = vadd.f32 %v574, %v2765
      %v2767 = vpop.f32.mrb[0].mxu0
      %2768 = vmatprep.mubr.f32.mxu0 0.0
      %2769 = vmatmul.mubr.f32.gmra.mrb[0].mxu0 %v2689
      %v2770 = vpop.f32.mrb[0].mxu0
      %v2771 = vadd.f32 %v579, %v2770
      %v2772 = vpop.f32.mrb[0].mxu0
      %2773 = vmatprep.mubr.f32.mxu0 0.0
      %2774 = vmatmul.mubr.f32.gmra.mrb[0].mxu0 %v2692
      %v2775 = vpop.f32.mrb[0].mxu0
      %v2776 = vadd.f32 %v584, %v2775
      %v2777 = vpop.f32.mrb[0].mxu0
      %2778 = vdwg.mxu0
      %v2779 = vmax.f32 %v2761, 0.0
      %v2780 = vmax.f32 %v2766, 0.0
      %v2781 = vmax.f32 %v2771, 0.0
      %v2782 = vmax.f32 %v2776, 0.0
      %v2784 = vsel %vm705, %v2779, 0
      %v2787 = vsel %vm705, %v2780, 0
      %v2790 = vsel %vm705, %v2781, 0
      %v2793 = vsel %vm705, %v2782, 0
      %2795 = vmatprep.subr.mxu0 0.0
      %2796 = vmatpush1.msra.mxu0 %v458
      %2797 = vmatprep.subr.mxu0 0.0
      %2798 = vmatpush1.msra.mxu0 %v459
      %2799 = vmatprep.subr.mxu0 0.0
      %2800 = vmatpush1.msra.mxu0 %v460
      %2801 = vmatprep.subr.mxu0 0.0
      %2802 = vmatpush1.msra.mxu0 %v461
      %2803 = vmatprep.subr.mxu0 0.0
      %2804 = vmatpush1.msra.mxu0 0.0
      %2805 = vmatprep.subr.mxu0 0.0
      %2806 = vmatpush1.msra.mxu0 0.0
      %2807 = vmatprep.subr.mxu0 0.0
      %2808 = vmatpush1.msra.mxu0 0.0
      %2809 = vmatprep.subr.mxu0 0.0
      %2810 = vmatpush1.msra.mxu0 0.0
      %2811 = vmatprep.subr.mxu0 0.0
      %2812 = vmatpush1.msra.mxu0 0.0
      %2813 = vmatprep.subr.mxu0 0.0
      %2814 = vmatpush1.msra.mxu0 0.0
      %2815 = vmatprep.subr.mxu0 0.0
      %2816 = vmatpush1.msra.mxu0 0.0
      %2817 = vmatprep.subr.mxu0 0.0
      %2818 = vmatpush1.msra.mxu0 0.0
      %2819 = vmatprep.subr.mxu0 0.0
      %2820 = vmatpush1.msra.mxu0 0.0
      %2821 = vmatprep.subr.mxu0 0.0
      %2822 = vmatpush1.msra.mxu0 0.0
      %2823 = vmatprep.subr.mxu0 0.0
      %2824 = vmatpush1.msra.mxu0 0.0
      %2825 = vmatprep.subr.mxu0 0.0
      %2826 = vmatpush1.msra.mxu0 0.0
      %2827 = vmatprep.subr.mxu0 0.0
      %2828 = vmatpush1.msra.mxu0 0.0
      %2829 = vmatprep.subr.mxu0 0.0
      %2830 = vmatpush1.msra.mxu0 0.0
      %2831 = vmatprep.subr.mxu0 0.0
      %2832 = vmatpush1.msra.mxu0 0.0
      %2833 = vmatprep.subr.mxu0 0.0
      %2834 = vmatpush1.msra.mxu0 0.0
      %2835 = vmatprep.subr.mxu0 0.0
      %2836 = vmatpush1.msra.mxu0 0.0
      %2837 = vmatprep.subr.mxu0 0.0
      %2838 = vmatpush1.msra.mxu0 0.0
      %2839 = vmatprep.subr.mxu0 0.0
      %2840 = vmatpush1.msra.mxu0 0.0
      %2841 = vmatprep.subr.mxu0 0.0
      %2842 = vmatpush1.msra.mxu0 0.0
      %2843 = vmatprep.subr.mxu0 0.0
      %2844 = vmatpush1.msra.mxu0 0.0
      %2845 = vmatprep.subr.mxu0 0.0
      %2846 = vmatpush1.msra.mxu0 0.0
      %2847 = vmatprep.subr.mxu0 0.0
      %2848 = vmatpush1.msra.mxu0 0.0
      %2849 = vmatprep.subr.mxu0 0.0
      %2850 = vmatpush1.msra.mxu0 0.0
      %2851 = vmatprep.subr.mxu0 0.0
      %2852 = vmatpush1.msra.mxu0 0.0
      %2853 = vmatprep.subr.mxu0 0.0
      %2854 = vmatpush1.msra.mxu0 0.0
      %2855 = vmatprep.subr.mxu0 0.0
      %2856 = vmatpush1.msra.mxu0 0.0
      %2857 = vmatprep.subr.mxu0 0.0
      %2858 = vmatpush1.msra.mxu0 0.0
      %2859 = vmatprep.mubr.f32.mxu0 0.0
      %2860 = vmatmul.mubr.f32.gmra.mrb[0].mxu0 %v2784
      %v2861 = vpop.f32.mrb[0].mxu0
      %v2862 = vadd.f32 %v703, %v2861
      %v2863 = vpop.f32.mrb[0].mxu0
      %2864 = vmatprep.mubr.f32.mxu0 0.0
      %2865 = vmatmul.mubr.f32.gmra.mrb[0].mxu0 %v2787
      %v2866 = vpop.f32.mrb[0].mxu0
      %v2867 = vadd.f32 %v703, %v2866
      %v2868 = vpop.f32.mrb[0].mxu0
      %2869 = vmatprep.mubr.f32.mxu0 0.0
      %2870 = vmatmul.mubr.f32.gmra.mrb[0].mxu0 %v2790
      %v2871 = vpop.f32.mrb[0].mxu0
      %v2872 = vadd.f32 %v703, %v2871
      %v2873 = vpop.f32.mrb[0].mxu0
      %2874 = vmatprep.mubr.f32.mxu0 0.0
      %2875 = vmatmul.mubr.f32.gmra.mrb[0].mxu0 %v2793
      %v2876 = vpop.f32.mrb[0].mxu0
      %v2877 = vadd.f32 %v703, %v2876
      %v2878 = vpop.f32.mrb[0].mxu0
      %2879 = vdwg.mxu0
      %v2880 = vmax.f32 %v2862, 0.0
      %v2881 = vmax.f32 %v2867, 0.0
      %v2882 = vmax.f32 %v2872, 0.0
      %v2883 = vmax.f32 %v2877, 0.0
      %v2885 = vsel %vm705, %v2880, 0
      %v2888 = vsel %vm705, %v2881, 0
      %v2891 = vsel %vm705, %v2882, 0
      %v2894 = vsel %vm705, %v2883, 0
      %2896 = vmatprep.subr.mxu0 0.0
      %2897 = vmatpush1.msra.mxu0 %v463
      %2898 = vmatprep.subr.mxu0 0.0
      %2899 = vmatpush1.msra.mxu0 %v464
      %2900 = vmatprep.subr.mxu0 0.0
      %2901 = vmatpush1.msra.mxu0 %v465
      %2902 = vmatprep.subr.mxu0 0.0
      %2903 = vmatpush1.msra.mxu0 %v466
      %2904 = vmatprep.subr.mxu0 0.0
      %2905 = vmatpush1.msra.mxu0 0.0
      %2906 = vmatprep.subr.mxu0 0.0
      %2907 = vmatpush1.msra.mxu0 0.0
      %2908 = vmatprep.subr.mxu0 0.0
      %2909 = vmatpush1.msra.mxu0 0.0
      %2910 = vmatprep.subr.mxu0 0.0
      %2911 = vmatpush1.msra.mxu0 0.0
      %2912 = vmatprep.subr.mxu0 0.0
      %2913 = vmatpush1.msra.mxu0 0.0
      %2914 = vmatprep.subr.mxu0 0.0
      %2915 = vmatpush1.msra.mxu0 0.0
      %2916 = vmatprep.subr.mxu0 0.0
      %2917 = vmatpush1.msra.mxu0 0.0
      %2918 = vmatprep.subr.mxu0 0.0
      %2919 = vmatpush1.msra.mxu0 0.0
      %2920 = vmatprep.subr.mxu0 0.0
      %2921 = vmatpush1.msra.mxu0 0.0
      %2922 = vmatprep.subr.mxu0 0.0
      %2923 = vmatpush1.msra.mxu0 0.0
      %2924 = vmatprep.subr.mxu0 0.0
      %2925 = vmatpush1.msra.mxu0 0.0
      %2926 = vmatprep.subr.mxu0 0.0
      %2927 = vmatpush1.msra.mxu0 0.0
      %2928 = vmatprep.subr.mxu0 0.0
      %2929 = vmatpush1.msra.mxu0 0.0
      %2930 = vmatprep.subr.mxu0 0.0
      %2931 = vmatpush1.msra.mxu0 0.0
      %2932 = vmatprep.subr.mxu0 0.0
      %2933 = vmatpush1.msra.mxu0 0.0
      %2934 = vmatprep.subr.mxu0 0.0
      %2935 = vmatpush1.msra.mxu0 0.0
      %2936 = vmatprep.subr.mxu0 0.0
      %2937 = vmatpush1.msra.mxu0 0.0
      %2938 = vmatprep.subr.mxu0 0.0
      %2939 = vmatpush1.msra.mxu0 0.0
      %2940 = vmatprep.subr.mxu0 0.0
      %2941 = vmatpush1.msra.mxu0 0.0
      %2942 = vmatprep.subr.mxu0 0.0
      %2943 = vmatpush1.msra.mxu0 0.0
      %2944 = vmatprep.subr.mxu0 0.0
      %2945 = vmatpush1.msra.mxu0 0.0
      %2946 = vmatprep.subr.mxu0 0.0
      %2947 = vmatpush1.msra.mxu0 0.0
      %2948 = vmatprep.subr.mxu0 0.0
      %2949 = vmatpush1.msra.mxu0 0.0
      %2950 = vmatprep.subr.mxu0 0.0
      %2951 = vmatpush1.msra.mxu0 0.0
      %2952 = vmatprep.subr.mxu0 0.0
      %2953 = vmatpush1.msra.mxu0 0.0
      %2954 = vmatprep.subr.mxu0 0.0
      %2955 = vmatpush1.msra.mxu0 0.0
      %2956 = vmatprep.subr.mxu0 0.0
      %2957 = vmatpush1.msra.mxu0 0.0
      %2958 = vmatprep.subr.mxu0 0.0
      %2959 = vmatpush1.msra.mxu0 0.0
      %2960 = vmatprep.mubr.f32.mxu0 0.0
      %2961 = vmatmul.mubr.f32.gmra.mrb[0].mxu0 %v2885
      %v2962 = vpop.f32.mrb[0].mxu0
      %v2963 = vadd.f32 %v811, %v2962
      %v2964 = vpop.f32.mrb[0].mxu0
      %2965 = vmatprep.mubr.f32.mxu0 0.0
      %2966 = vmatmul.mubr.f32.gmra.mrb[0].mxu0 %v2888
      %v2967 = vpop.f32.mrb[0].mxu0
      %v2968 = vadd.f32 %v811, %v2967
      %v2969 = vpop.f32.mrb[0].mxu0
      %2970 = vmatprep.mubr.f32.mxu0 0.0
      %2971 = vmatmul.mubr.f32.gmra.mrb[0].mxu0 %v2891
      %v2972 = vpop.f32.mrb[0].mxu0
      %v2973 = vadd.f32 %v811, %v2972
      %v2974 = vpop.f32.mrb[0].mxu0
      %2975 = vmatprep.mubr.f32.mxu0 0.0
      %2976 = vmatmul.mubr.f32.gmra.mrb[0].mxu0 %v2894
      %v2977 = vpop.f32.mrb[0].mxu0
      %v2978 = vadd.f32 %v811, %v2977
      %v2979 = vpop.f32.mrb[0].mxu0
      %2980 = vdwg.mxu0
      %2981 = vmatprep.subr.mxu0 0.0
      %2982 = vmatpush1.msra.mxu0 %v468
      %2983 = vmatprep.subr.mxu0 0.0
      %2984 = vmatpush1.msra.mxu0 %v469
      %2985 = vmatprep.subr.mxu0 0.0
      %2986 = vmatpush1.msra.mxu0 %v470
      %2987 = vmatprep.subr.mxu0 0.0
      %2988 = vmatpush1.msra.mxu0 %v471
      %2989 = vmatprep.subr.mxu0 0.0
      %2990 = vmatpush1.msra.mxu0 0.0
      %2991 = vmatprep.subr.mxu0 0.0
      %2992 = vmatpush1.msra.mxu0 0.0
      %2993 = vmatprep.subr.mxu0 0.0
      %2994 = vmatpush1.msra.mxu0 0.0
      %2995 = vmatprep.subr.mxu0 0.0
      %2996 = vmatpush1.msra.mxu0 0.0
      %2997 = vmatprep.subr.mxu0 0.0
      %2998 = vmatpush1.msra.mxu0 0.0
      %2999 = vmatprep.subr.mxu0 0.0
      %3000 = vmatpush1.msra.mxu0 0.0
      %3001 = vmatprep.subr.mxu0 0.0
      %3002 = vmatpush1.msra.mxu0 0.0
      %3003 = vmatprep.subr.mxu0 0.0
      %3004 = vmatpush1.msra.mxu0 0.0
      %3005 = vmatprep.subr.mxu0 0.0
      %3006 = vmatpush1.msra.mxu0 0.0
      %3007 = vmatprep.subr.mxu0 0.0
      %3008 = vmatpush1.msra.mxu0 0.0
      %3009 = vmatprep.subr.mxu0 0.0
      %3010 = vmatpush1.msra.mxu0 0.0
      %3011 = vmatprep.subr.mxu0 0.0
      %3012 = vmatpush1.msra.mxu0 0.0
      %3013 = vmatprep.subr.mxu0 0.0
      %3014 = vmatpush1.msra.mxu0 0.0
      %3015 = vmatprep.subr.mxu0 0.0
      %3016 = vmatpush1.msra.mxu0 0.0
      %3017 = vmatprep.subr.mxu0 0.0
      %3018 = vmatpush1.msra.mxu0 0.0
      %3019 = vmatprep.subr.mxu0 0.0
      %3020 = vmatpush1.msra.mxu0 0.0
      %3021 = vmatprep.subr.mxu0 0.0
      %3022 = vmatpush1.msra.mxu0 0.0
      %3023 = vmatprep.subr.mxu0 0.0
      %3024 = vmatpush1.msra.mxu0 0.0
      %3025 = vmatprep.subr.mxu0 0.0
      %3026 = vmatpush1.msra.mxu0 0.0
      %3027 = vmatprep.subr.mxu0 0.0
      %3028 = vmatpush1.msra.mxu0 0.0
      %3029 = vmatprep.subr.mxu0 0.0
      %3030 = vmatpush1.msra.mxu0 0.0
      %3031 = vmatprep.subr.mxu0 0.0
      %3032 = vmatpush1.msra.mxu0 0.0
      %3033 = vmatprep.subr.mxu0 0.0
      %3034 = vmatpush1.msra.mxu0 0.0
      %3035 = vmatprep.subr.mxu0 0.0
      %3036 = vmatpush1.msra.mxu0 0.0
      %3037 = vmatprep.subr.mxu0 0.0
      %3038 = vmatpush1.msra.mxu0 0.0
      %3039 = vmatprep.subr.mxu0 0.0
      %3040 = vmatpush1.msra.mxu0 0.0
      %3041 = vmatprep.subr.mxu0 0.0
      %3042 = vmatpush1.msra.mxu0 0.0
      %3043 = vmatprep.subr.mxu0 0.0
      %3044 = vmatpush1.msra.mxu0 0.0
      %3045 = vmatprep.mubr.f32.mxu0 0.0
      %3046 = vmatmul.mubr.f32.gmra.mrb[0].mxu0 %v2885
      %v3047 = vpop.f32.mrb[0].mxu0
      %v3048 = vadd.f32 %v914, %v3047
      %v3049 = vpop.f32.mrb[0].mxu0
      %3050 = vmatprep.mubr.f32.mxu0 0.0
      %3051 = vmatmul.mubr.f32.gmra.mrb[0].mxu0 %v2888
      %v3052 = vpop.f32.mrb[0].mxu0
      %v3053 = vadd.f32 %v914, %v3052
      %v3054 = vpop.f32.mrb[0].mxu0
      %3055 = vmatprep.mubr.f32.mxu0 0.0
      %3056 = vmatmul.mubr.f32.gmra.mrb[0].mxu0 %v2891
      %v3057 = vpop.f32.mrb[0].mxu0
      %v3058 = vadd.f32 %v914, %v3057
      %v3059 = vpop.f32.mrb[0].mxu0
      %3060 = vmatprep.mubr.f32.mxu0 0.0
      %3061 = vmatmul.mubr.f32.gmra.mrb[0].mxu0 %v2894
      %v3062 = vpop.f32.mrb[0].mxu0
      %v3063 = vadd.f32 %v914, %v3062
      %v3064 = vpop.f32.mrb[0].mxu0
      %3065 = vdwg.mxu0
      %vm3066 = vcmp.eq.s32.totalorder %v588, 5
      %v3067 = vmul.f32 %v3048, 1.442695
      %v3068 = vpow.pop %v3067
      %v3069 = vmul.f32 %v3053, 1.442695
      %v3070 = vpow.pop %v3069
      %v3071 = vmul.f32 %v3058, 1.442695
      %v3072 = vpow.pop %v3071
      %v3073 = vmul.f32 %v3063, 1.442695
      %v3074 = vpow.pop %v3073
      %v3075 = vmul.f32 %v453, %v3068
      %v3076 = vmul.f32 %v454, %v3070
      %v3077 = vmul.f32 %v455, %v3072
      %v3078 = vmul.f32 %v456, %v3074
      %v3079 = vadd.f32 %v3075, %v2963
      %v3080 = vadd.f32 %v3076, %v2968
      %v3081 = vadd.f32 %v3077, %v2973
      %v3082 = vadd.f32 %v3078, %v2978
      %v3083 = vsel %vm3066, %v3079, %v2678
      %v3084 = vsel %vm3066, %v3080, %v2679
      %v3085 = vsel %vm3066, %v3081, %v2680
      %v3086 = vsel %vm3066, %v3082, %v2681
      %3087 = vst.msk [vmem:[#allocation2] sm:$0xff] %vm589, %v3083
      %3088 = vst.msk [vmem:[#allocation2 + $0x8] sm:$0xff] %vm589, %v3084
      %3089 = vst.msk [vmem:[#allocation2 + $0x10] sm:$0xff] %vm589, %v3085
      %3090 = vst.msk [vmem:[#allocation2 + $0x18] sm:$0xff] %vm589, %v3086
      %v3091 = vld [vmem:[#allocation2] sm:$0xff]
      %v3092 = vld [vmem:[#allocation2 + $0x8] sm:$0xff]
      %v3093 = vld [vmem:[#allocation2 + $0x10] sm:$0xff]
      %v3094 = vld [vmem:[#allocation2 + $0x18] sm:$0xff]
      %v3096 = vsel %vm589, %v3091, 0
      %v3099 = vsel %vm589, %v3092, 0
      %v3102 = vsel %vm589, %v3093, 0
      %v3105 = vsel %vm589, %v3094, 0
      %3107 = vmatprep.subr.mxu0 0.0
      %3108 = vmatpush1.msra.mxu0 %v457
      %3109 = vmatprep.subr.mxu0 0.0
      %3110 = vmatpush1.msra.mxu0 0.0
      %3111 = vmatprep.subr.mxu0 0.0
      %3112 = vmatpush1.msra.mxu0 0.0
      %3113 = vmatprep.subr.mxu0 0.0
      %3114 = vmatpush1.msra.mxu0 0.0
      %3115 = vmatprep.subr.mxu0 0.0
      %3116 = vmatpush1.msra.mxu0 0.0
      %3117 = vmatprep.subr.mxu0 0.0
      %3118 = vmatpush1.msra.mxu0 0.0
      %3119 = vmatprep.subr.mxu0 0.0
      %3120 = vmatpush1.msra.mxu0 0.0
      %3121 = vmatprep.subr.mxu0 0.0
      %3122 = vmatpush1.msra.mxu0 0.0
      %3123 = vmatprep.subr.mxu0 0.0
      %3124 = vmatpush1.msra.mxu0 0.0
      %3125 = vmatprep.subr.mxu0 0.0
      %3126 = vmatpush1.msra.mxu0 0.0
      %3127 = vmatprep.subr.mxu0 0.0
      %3128 = vmatpush1.msra.mxu0 0.0
      %3129 = vmatprep.subr.mxu0 0.0
      %3130 = vmatpush1.msra.mxu0 0.0
      %3131 = vmatprep.subr.mxu0 0.0
      %3132 = vmatpush1.msra.mxu0 0.0
      %3133 = vmatprep.subr.mxu0 0.0
      %3134 = vmatpush1.msra.mxu0 0.0
      %3135 = vmatprep.subr.mxu0 0.0
      %3136 = vmatpush1.msra.mxu0 0.0
      %3137 = vmatprep.subr.mxu0 0.0
      %3138 = vmatpush1.msra.mxu0 0.0
      %3139 = vmatprep.subr.mxu0 0.0
      %3140 = vmatpush1.msra.mxu0 0.0
      %3141 = vmatprep.subr.mxu0 0.0
      %3142 = vmatpush1.msra.mxu0 0.0
      %3143 = vmatprep.subr.mxu0 0.0
      %3144 = vmatpush1.msra.mxu0 0.0
      %3145 = vmatprep.subr.mxu0 0.0
      %3146 = vmatpush1.msra.mxu0 0.0
      %3147 = vmatprep.subr.mxu0 0.0
      %3148 = vmatpush1.msra.mxu0 0.0
      %3149 = vmatprep.subr.mxu0 0.0
      %3150 = vmatpush1.msra.mxu0 0.0
      %3151 = vmatprep.subr.mxu0 0.0
      %3152 = vmatpush1.msra.mxu0 0.0
      %3153 = vmatprep.subr.mxu0 0.0
      %3154 = vmatpush1.msra.mxu0 0.0
      %3155 = vmatprep.subr.mxu0 0.0
      %3156 = vmatpush1.msra.mxu0 0.0
      %3157 = vmatprep.subr.mxu0 0.0
      %3158 = vmatpush1.msra.mxu0 0.0
      %3159 = vmatprep.subr.mxu0 0.0
      %3160 = vmatpush1.msra.mxu0 0.0
      %3161 = vmatprep.subr.mxu0 0.0
      %3162 = vmatpush1.msra.mxu0 0.0
      %3163 = vmatprep.subr.mxu0 0.0
      %3164 = vmatpush1.msra.mxu0 0.0
      %3165 = vmatprep.subr.mxu0 0.0
      %3166 = vmatpush1.msra.mxu0 0.0
      %3167 = vmatprep.subr.mxu0 0.0
      %3168 = vmatpush1.msra.mxu0 0.0
      %3169 = vmatprep.subr.mxu0 0.0
      %3170 = vmatpush1.msra.mxu0 0.0
      %3171 = vmatprep.mubr.f32.mxu0 0.0
      %3172 = vmatmul.mubr.f32.gmra.mrb[0].mxu0 %v3096
      %v3173 = vpop.f32.mrb[0].mxu0
      %v3174 = vadd.f32 %v569, %v3173
      %v3175 = vpop.f32.mrb[0].mxu0
      %3176 = vmatprep.mubr.f32.mxu0 0.0
      %3177 = vmatmul.mubr.f32.gmra.mrb[0].mxu0 %v3099
      %v3178 = vpop.f32.mrb[0].mxu0
      %v3179 = vadd.f32 %v574, %v3178
      %v3180 = vpop.f32.mrb[0].mxu0
      %3181 = vmatprep.mubr.f32.mxu0 0.0
      %3182 = vmatmul.mubr.f32.gmra.mrb[0].mxu0 %v3102
      %v3183 = vpop.f32.mrb[0].mxu0
      %v3184 = vadd.f32 %v579, %v3183
      %v3185 = vpop.f32.mrb[0].mxu0
      %3186 = vmatprep.mubr.f32.mxu0 0.0
      %3187 = vmatmul.mubr.f32.gmra.mrb[0].mxu0 %v3105
      %v3188 = vpop.f32.mrb[0].mxu0
      %v3189 = vadd.f32 %v584, %v3188
      %v3190 = vpop.f32.mrb[0].mxu0
      %3191 = vdwg.mxu0
      %v3192 = vmax.f32 %v3174, 0.0
      %v3193 = vmax.f32 %v3179, 0.0
      %v3194 = vmax.f32 %v3184, 0.0
      %v3195 = vmax.f32 %v3189, 0.0
      %v3197 = vsel %vm705, %v3192, 0
      %v3200 = vsel %vm705, %v3193, 0
      %v3203 = vsel %vm705, %v3194, 0
      %v3206 = vsel %vm705, %v3195, 0
      %3208 = vmatprep.subr.mxu0 0.0
      %3209 = vmatpush1.msra.mxu0 %v458
      %3210 = vmatprep.subr.mxu0 0.0
      %3211 = vmatpush1.msra.mxu0 %v459
      %3212 = vmatprep.subr.mxu0 0.0
      %3213 = vmatpush1.msra.mxu0 %v460
      %3214 = vmatprep.subr.mxu0 0.0
      %3215 = vmatpush1.msra.mxu0 %v461
      %3216 = vmatprep.subr.mxu0 0.0
      %3217 = vmatpush1.msra.mxu0 0.0
      %3218 = vmatprep.subr.mxu0 0.0
      %3219 = vmatpush1.msra.mxu0 0.0
      %3220 = vmatprep.subr.mxu0 0.0
      %3221 = vmatpush1.msra.mxu0 0.0
      %3222 = vmatprep.subr.mxu0 0.0
      %3223 = vmatpush1.msra.mxu0 0.0
      %3224 = vmatprep.subr.mxu0 0.0
      %3225 = vmatpush1.msra.mxu0 0.0
      %3226 = vmatprep.subr.mxu0 0.0
      %3227 = vmatpush1.msra.mxu0 0.0
      %3228 = vmatprep.subr.mxu0 0.0
      %3229 = vmatpush1.msra.mxu0 0.0
      %3230 = vmatprep.subr.mxu0 0.0
      %3231 = vmatpush1.msra.mxu0 0.0
      %3232 = vmatprep.subr.mxu0 0.0
      %3233 = vmatpush1.msra.mxu0 0.0
      %3234 = vmatprep.subr.mxu0 0.0
      %3235 = vmatpush1.msra.mxu0 0.0
      %3236 = vmatprep.subr.mxu0 0.0
      %3237 = vmatpush1.msra.mxu0 0.0
      %3238 = vmatprep.subr.mxu0 0.0
      %3239 = vmatpush1.msra.mxu0 0.0
      %3240 = vmatprep.subr.mxu0 0.0
      %3241 = vmatpush1.msra.mxu0 0.0
      %3242 = vmatprep.subr.mxu0 0.0
      %3243 = vmatpush1.msra.mxu0 0.0
      %3244 = vmatprep.subr.mxu0 0.0
      %3245 = vmatpush1.msra.mxu0 0.0
      %3246 = vmatprep.subr.mxu0 0.0
      %3247 = vmatpush1.msra.mxu0 0.0
      %3248 = vmatprep.subr.mxu0 0.0
      %3249 = vmatpush1.msra.mxu0 0.0
      %3250 = vmatprep.subr.mxu0 0.0
      %3251 = vmatpush1.msra.mxu0 0.0
      %3252 = vmatprep.subr.mxu0 0.0
      %3253 = vmatpush1.msra.mxu0 0.0
      %3254 = vmatprep.subr.mxu0 0.0
      %3255 = vmatpush1.msra.mxu0 0.0
      %3256 = vmatprep.subr.mxu0 0.0
      %3257 = vmatpush1.msra.mxu0 0.0
      %3258 = vmatprep.subr.mxu0 0.0
      %3259 = vmatpush1.msra.mxu0 0.0
      %3260 = vmatprep.subr.mxu0 0.0
      %3261 = vmatpush1.msra.mxu0 0.0
      %3262 = vmatprep.subr.mxu0 0.0
      %3263 = vmatpush1.msra.mxu0 0.0
      %3264 = vmatprep.subr.mxu0 0.0
      %3265 = vmatpush1.msra.mxu0 0.0
      %3266 = vmatprep.subr.mxu0 0.0
      %3267 = vmatpush1.msra.mxu0 0.0
      %3268 = vmatprep.subr.mxu0 0.0
      %3269 = vmatpush1.msra.mxu0 0.0
      %3270 = vmatprep.subr.mxu0 0.0
      %3271 = vmatpush1.msra.mxu0 0.0
      %3272 = vmatprep.mubr.f32.mxu0 0.0
      %3273 = vmatmul.mubr.f32.gmra.mrb[0].mxu0 %v3197
      %v3274 = vpop.f32.mrb[0].mxu0
      %v3275 = vadd.f32 %v703, %v3274
      %v3276 = vpop.f32.mrb[0].mxu0
      %3277 = vmatprep.mubr.f32.mxu0 0.0
      %3278 = vmatmul.mubr.f32.gmra.mrb[0].mxu0 %v3200
      %v3279 = vpop.f32.mrb[0].mxu0
      %v3280 = vadd.f32 %v703, %v3279
      %v3281 = vpop.f32.mrb[0].mxu0
      %3282 = vmatprep.mubr.f32.mxu0 0.0
      %3283 = vmatmul.mubr.f32.gmra.mrb[0].mxu0 %v3203
      %v3284 = vpop.f32.mrb[0].mxu0
      %v3285 = vadd.f32 %v703, %v3284
      %v3286 = vpop.f32.mrb[0].mxu0
      %3287 = vmatprep.mubr.f32.mxu0 0.0
      %3288 = vmatmul.mubr.f32.gmra.mrb[0].mxu0 %v3206
      %v3289 = vpop.f32.mrb[0].mxu0
      %v3290 = vadd.f32 %v703, %v3289
      %v3291 = vpop.f32.mrb[0].mxu0
      %3292 = vdwg.mxu0
      %v3293 = vmax.f32 %v3275, 0.0
      %v3294 = vmax.f32 %v3280, 0.0
      %v3295 = vmax.f32 %v3285, 0.0
      %v3296 = vmax.f32 %v3290, 0.0
      %v3298 = vsel %vm705, %v3293, 0
      %v3301 = vsel %vm705, %v3294, 0
      %v3304 = vsel %vm705, %v3295, 0
      %v3307 = vsel %vm705, %v3296, 0
      %3309 = vmatprep.subr.mxu0 0.0
      %3310 = vmatpush1.msra.mxu0 %v463
      %3311 = vmatprep.subr.mxu0 0.0
      %3312 = vmatpush1.msra.mxu0 %v464
      %3313 = vmatprep.subr.mxu0 0.0
      %3314 = vmatpush1.msra.mxu0 %v465
      %3315 = vmatprep.subr.mxu0 0.0
      %3316 = vmatpush1.msra.mxu0 %v466
      %3317 = vmatprep.subr.mxu0 0.0
      %3318 = vmatpush1.msra.mxu0 0.0
      %3319 = vmatprep.subr.mxu0 0.0
      %3320 = vmatpush1.msra.mxu0 0.0
      %3321 = vmatprep.subr.mxu0 0.0
      %3322 = vmatpush1.msra.mxu0 0.0
      %3323 = vmatprep.subr.mxu0 0.0
      %3324 = vmatpush1.msra.mxu0 0.0
      %3325 = vmatprep.subr.mxu0 0.0
      %3326 = vmatpush1.msra.mxu0 0.0
      %3327 = vmatprep.subr.mxu0 0.0
      %3328 = vmatpush1.msra.mxu0 0.0
      %3329 = vmatprep.subr.mxu0 0.0
      %3330 = vmatpush1.msra.mxu0 0.0
      %3331 = vmatprep.subr.mxu0 0.0
      %3332 = vmatpush1.msra.mxu0 0.0
      %3333 = vmatprep.subr.mxu0 0.0
      %3334 = vmatpush1.msra.mxu0 0.0
      %3335 = vmatprep.subr.mxu0 0.0
      %3336 = vmatpush1.msra.mxu0 0.0
      %3337 = vmatprep.subr.mxu0 0.0
      %3338 = vmatpush1.msra.mxu0 0.0
      %3339 = vmatprep.subr.mxu0 0.0
      %3340 = vmatpush1.msra.mxu0 0.0
      %3341 = vmatprep.subr.mxu0 0.0
      %3342 = vmatpush1.msra.mxu0 0.0
      %3343 = vmatprep.subr.mxu0 0.0
      %3344 = vmatpush1.msra.mxu0 0.0
      %3345 = vmatprep.subr.mxu0 0.0
      %3346 = vmatpush1.msra.mxu0 0.0
      %3347 = vmatprep.subr.mxu0 0.0
      %3348 = vmatpush1.msra.mxu0 0.0
      %3349 = vmatprep.subr.mxu0 0.0
      %3350 = vmatpush1.msra.mxu0 0.0
      %3351 = vmatprep.subr.mxu0 0.0
      %3352 = vmatpush1.msra.mxu0 0.0
      %3353 = vmatprep.subr.mxu0 0.0
      %3354 = vmatpush1.msra.mxu0 0.0
      %3355 = vmatprep.subr.mxu0 0.0
      %3356 = vmatpush1.msra.mxu0 0.0
      %3357 = vmatprep.subr.mxu0 0.0
      %3358 = vmatpush1.msra.mxu0 0.0
      %3359 = vmatprep.subr.mxu0 0.0
      %3360 = vmatpush1.msra.mxu0 0.0
      %3361 = vmatprep.subr.mxu0 0.0
      %3362 = vmatpush1.msra.mxu0 0.0
      %3363 = vmatprep.subr.mxu0 0.0
      %3364 = vmatpush1.msra.mxu0 0.0
      %3365 = vmatprep.subr.mxu0 0.0
      %3366 = vmatpush1.msra.mxu0 0.0
      %3367 = vmatprep.subr.mxu0 0.0
      %3368 = vmatpush1.msra.mxu0 0.0
      %3369 = vmatprep.subr.mxu0 0.0
      %3370 = vmatpush1.msra.mxu0 0.0
      %3371 = vmatprep.subr.mxu0 0.0
      %3372 = vmatpush1.msra.mxu0 0.0
      %3373 = vmatprep.mubr.f32.mxu0 0.0
      %3374 = vmatmul.mubr.f32.gmra.mrb[0].mxu0 %v3298
      %v3375 = vpop.f32.mrb[0].mxu0
      %v3376 = vadd.f32 %v811, %v3375
      %v3377 = vpop.f32.mrb[0].mxu0
      %3378 = vmatprep.mubr.f32.mxu0 0.0
      %3379 = vmatmul.mubr.f32.gmra.mrb[0].mxu0 %v3301
      %v3380 = vpop.f32.mrb[0].mxu0
      %v3381 = vadd.f32 %v811, %v3380
      %v3382 = vpop.f32.mrb[0].mxu0
      %3383 = vmatprep.mubr.f32.mxu0 0.0
      %3384 = vmatmul.mubr.f32.gmra.mrb[0].mxu0 %v3304
      %v3385 = vpop.f32.mrb[0].mxu0
      %v3386 = vadd.f32 %v811, %v3385
      %v3387 = vpop.f32.mrb[0].mxu0
      %3388 = vmatprep.mubr.f32.mxu0 0.0
      %3389 = vmatmul.mubr.f32.gmra.mrb[0].mxu0 %v3307
      %v3390 = vpop.f32.mrb[0].mxu0
      %v3391 = vadd.f32 %v811, %v3390
      %v3392 = vpop.f32.mrb[0].mxu0
      %3393 = vdwg.mxu0
      %3394 = vmatprep.subr.mxu0 0.0
      %3395 = vmatpush1.msra.mxu0 %v468
      %3396 = vmatprep.subr.mxu0 0.0
      %3397 = vmatpush1.msra.mxu0 %v469
      %3398 = vmatprep.subr.mxu0 0.0
      %3399 = vmatpush1.msra.mxu0 %v470
      %3400 = vmatprep.subr.mxu0 0.0
      %3401 = vmatpush1.msra.mxu0 %v471
      %3402 = vmatprep.subr.mxu0 0.0
      %3403 = vmatpush1.msra.mxu0 0.0
      %3404 = vmatprep.subr.mxu0 0.0
      %3405 = vmatpush1.msra.mxu0 0.0
      %3406 = vmatprep.subr.mxu0 0.0
      %3407 = vmatpush1.msra.mxu0 0.0
      %3408 = vmatprep.subr.mxu0 0.0
      %3409 = vmatpush1.msra.mxu0 0.0
      %3410 = vmatprep.subr.mxu0 0.0
      %3411 = vmatpush1.msra.mxu0 0.0
      %3412 = vmatprep.subr.mxu0 0.0
      %3413 = vmatpush1.msra.mxu0 0.0
      %3414 = vmatprep.subr.mxu0 0.0
      %3415 = vmatpush1.msra.mxu0 0.0
      %3416 = vmatprep.subr.mxu0 0.0
      %3417 = vmatpush1.msra.mxu0 0.0
      %3418 = vmatprep.subr.mxu0 0.0
      %3419 = vmatpush1.msra.mxu0 0.0
      %3420 = vmatprep.subr.mxu0 0.0
      %3421 = vmatpush1.msra.mxu0 0.0
      %3422 = vmatprep.subr.mxu0 0.0
      %3423 = vmatpush1.msra.mxu0 0.0
      %3424 = vmatprep.subr.mxu0 0.0
      %3425 = vmatpush1.msra.mxu0 0.0
      %3426 = vmatprep.subr.mxu0 0.0
      %3427 = vmatpush1.msra.mxu0 0.0
      %3428 = vmatprep.subr.mxu0 0.0
      %3429 = vmatpush1.msra.mxu0 0.0
      %3430 = vmatprep.subr.mxu0 0.0
      %3431 = vmatpush1.msra.mxu0 0.0
      %3432 = vmatprep.subr.mxu0 0.0
      %3433 = vmatpush1.msra.mxu0 0.0
      %3434 = vmatprep.subr.mxu0 0.0
      %3435 = vmatpush1.msra.mxu0 0.0
      %3436 = vmatprep.subr.mxu0 0.0
      %3437 = vmatpush1.msra.mxu0 0.0
      %3438 = vmatprep.subr.mxu0 0.0
      %3439 = vmatpush1.msra.mxu0 0.0
      %3440 = vmatprep.subr.mxu0 0.0
      %3441 = vmatpush1.msra.mxu0 0.0
      %3442 = vmatprep.subr.mxu0 0.0
      %3443 = vmatpush1.msra.mxu0 0.0
      %3444 = vmatprep.subr.mxu0 0.0
      %3445 = vmatpush1.msra.mxu0 0.0
      %3446 = vmatprep.subr.mxu0 0.0
      %3447 = vmatpush1.msra.mxu0 0.0
      %3448 = vmatprep.subr.mxu0 0.0
      %3449 = vmatpush1.msra.mxu0 0.0
      %3450 = vmatprep.subr.mxu0 0.0
      %3451 = vmatpush1.msra.mxu0 0.0
      %3452 = vmatprep.subr.mxu0 0.0
      %3453 = vmatpush1.msra.mxu0 0.0
      %3454 = vmatprep.subr.mxu0 0.0
      %3455 = vmatpush1.msra.mxu0 0.0
      %3456 = vmatprep.subr.mxu0 0.0
      %3457 = vmatpush1.msra.mxu0 0.0
      %3458 = vmatprep.mubr.f32.mxu0 0.0
      %3459 = vmatmul.mubr.f32.gmra.mrb[0].mxu0 %v3298
      %v3460 = vpop.f32.mrb[0].mxu0
      %v3461 = vadd.f32 %v914, %v3460
      %v3462 = vpop.f32.mrb[0].mxu0
      %3463 = vmatprep.mubr.f32.mxu0 0.0
      %3464 = vmatmul.mubr.f32.gmra.mrb[0].mxu0 %v3301
      %v3465 = vpop.f32.mrb[0].mxu0
      %v3466 = vadd.f32 %v914, %v3465
      %v3467 = vpop.f32.mrb[0].mxu0
      %3468 = vmatprep.mubr.f32.mxu0 0.0
      %3469 = vmatmul.mubr.f32.gmra.mrb[0].mxu0 %v3304
      %v3470 = vpop.f32.mrb[0].mxu0
      %v3471 = vadd.f32 %v914, %v3470
      %v3472 = vpop.f32.mrb[0].mxu0
      %3473 = vmatprep.mubr.f32.mxu0 0.0
      %3474 = vmatmul.mubr.f32.gmra.mrb[0].mxu0 %v3307
      %v3475 = vpop.f32.mrb[0].mxu0
      %v3476 = vadd.f32 %v914, %v3475
      %v3477 = vpop.f32.mrb[0].mxu0
      %3478 = vdwg.mxu0
      %vm3479 = vcmp.eq.s32.totalorder %v588, 6
      %v3480 = vmul.f32 %v3461, 1.442695
      %v3481 = vpow.pop %v3480
      %v3482 = vmul.f32 %v3466, 1.442695
      %v3483 = vpow.pop %v3482
      %v3484 = vmul.f32 %v3471, 1.442695
      %v3485 = vpow.pop %v3484
      %v3486 = vmul.f32 %v3476, 1.442695
      %v3487 = vpow.pop %v3486
      %v3488 = vmul.f32 %v453, %v3481
      %v3489 = vmul.f32 %v454, %v3483
      %v3490 = vmul.f32 %v455, %v3485
      %v3491 = vmul.f32 %v456, %v3487
      %v3492 = vadd.f32 %v3488, %v3376
      %v3493 = vadd.f32 %v3489, %v3381
      %v3494 = vadd.f32 %v3490, %v3386
      %v3495 = vadd.f32 %v3491, %v3391
      %v3496 = vsel %vm3479, %v3492, %v3091
      %v3497 = vsel %vm3479, %v3493, %v3092
      %v3498 = vsel %vm3479, %v3494, %v3093
      %v3499 = vsel %vm3479, %v3495, %v3094
      %3500 = vst.msk [vmem:[#allocation2] sm:$0xff] %vm589, %v3496
      %3501 = vst.msk [vmem:[#allocation2 + $0x8] sm:$0xff] %vm589, %v3497
      %3502 = vst.msk [vmem:[#allocation2 + $0x10] sm:$0xff] %vm589, %v3498
      %3503 = vst.msk [vmem:[#allocation2 + $0x18] sm:$0xff] %vm589, %v3499
      %v3504 = vld [vmem:[#allocation2] sm:$0xff]
      %v3505 = vld [vmem:[#allocation2 + $0x8] sm:$0xff]
      %v3506 = vld [vmem:[#allocation2 + $0x10] sm:$0xff]
      %v3507 = vld [vmem:[#allocation2 + $0x18] sm:$0xff]
      %v3509 = vsel %vm589, %v3504, 0
      %v3512 = vsel %vm589, %v3505, 0
      %v3515 = vsel %vm589, %v3506, 0
      %v3518 = vsel %vm589, %v3507, 0
      %3520 = vmatprep.subr.mxu0 0.0
      %3521 = vmatpush1.msra.mxu0 %v457
      %3522 = vmatprep.subr.mxu0 0.0
      %3523 = vmatpush1.msra.mxu0 0.0
      %3524 = vmatprep.subr.mxu0 0.0
      %3525 = vmatpush1.msra.mxu0 0.0
      %3526 = vmatprep.subr.mxu0 0.0
      %3527 = vmatpush1.msra.mxu0 0.0
      %3528 = vmatprep.subr.mxu0 0.0
      %3529 = vmatpush1.msra.mxu0 0.0
      %3530 = vmatprep.subr.mxu0 0.0
      %3531 = vmatpush1.msra.mxu0 0.0
      %3532 = vmatprep.subr.mxu0 0.0
      %3533 = vmatpush1.msra.mxu0 0.0
      %3534 = vmatprep.subr.mxu0 0.0
      %3535 = vmatpush1.msra.mxu0 0.0
      %3536 = vmatprep.subr.mxu0 0.0
      %3537 = vmatpush1.msra.mxu0 0.0
      %3538 = vmatprep.subr.mxu0 0.0
      %3539 = vmatpush1.msra.mxu0 0.0
      %3540 = vmatprep.subr.mxu0 0.0
      %3541 = vmatpush1.msra.mxu0 0.0
      %3542 = vmatprep.subr.mxu0 0.0
      %3543 = vmatpush1.msra.mxu0 0.0
      %3544 = vmatprep.subr.mxu0 0.0
      %3545 = vmatpush1.msra.mxu0 0.0
      %3546 = vmatprep.subr.mxu0 0.0
      %3547 = vmatpush1.msra.mxu0 0.0
      %3548 = vmatprep.subr.mxu0 0.0
      %3549 = vmatpush1.msra.mxu0 0.0
      %3550 = vmatprep.subr.mxu0 0.0
      %3551 = vmatpush1.msra.mxu0 0.0
      %3552 = vmatprep.subr.mxu0 0.0
      %3553 = vmatpush1.msra.mxu0 0.0
      %3554 = vmatprep.subr.mxu0 0.0
      %3555 = vmatpush1.msra.mxu0 0.0
      %3556 = vmatprep.subr.mxu0 0.0
      %3557 = vmatpush1.msra.mxu0 0.0
      %3558 = vmatprep.subr.mxu0 0.0
      %3559 = vmatpush1.msra.mxu0 0.0
      %3560 = vmatprep.subr.mxu0 0.0
      %3561 = vmatpush1.msra.mxu0 0.0
      %3562 = vmatprep.subr.mxu0 0.0
      %3563 = vmatpush1.msra.mxu0 0.0
      %3564 = vmatprep.subr.mxu0 0.0
      %3565 = vmatpush1.msra.mxu0 0.0
      %3566 = vmatprep.subr.mxu0 0.0
      %3567 = vmatpush1.msra.mxu0 0.0
      %3568 = vmatprep.subr.mxu0 0.0
      %3569 = vmatpush1.msra.mxu0 0.0
      %3570 = vmatprep.subr.mxu0 0.0
      %3571 = vmatpush1.msra.mxu0 0.0
      %3572 = vmatprep.subr.mxu0 0.0
      %3573 = vmatpush1.msra.mxu0 0.0
      %3574 = vmatprep.subr.mxu0 0.0
      %3575 = vmatpush1.msra.mxu0 0.0
      %3576 = vmatprep.subr.mxu0 0.0
      %3577 = vmatpush1.msra.mxu0 0.0
      %3578 = vmatprep.subr.mxu0 0.0
      %3579 = vmatpush1.msra.mxu0 0.0
      %3580 = vmatprep.subr.mxu0 0.0
      %3581 = vmatpush1.msra.mxu0 0.0
      %3582 = vmatprep.subr.mxu0 0.0
      %3583 = vmatpush1.msra.mxu0 0.0
      %3584 = vmatprep.mubr.f32.mxu0 0.0
      %3585 = vmatmul.mubr.f32.gmra.mrb[0].mxu0 %v3509
      %v3586 = vpop.f32.mrb[0].mxu0
      %v3587 = vadd.f32 %v569, %v3586
      %v3588 = vpop.f32.mrb[0].mxu0
      %3589 = vmatprep.mubr.f32.mxu0 0.0
      %3590 = vmatmul.mubr.f32.gmra.mrb[0].mxu0 %v3512
      %v3591 = vpop.f32.mrb[0].mxu0
      %v3592 = vadd.f32 %v574, %v3591
      %v3593 = vpop.f32.mrb[0].mxu0
      %3594 = vmatprep.mubr.f32.mxu0 0.0
      %3595 = vmatmul.mubr.f32.gmra.mrb[0].mxu0 %v3515
      %v3596 = vpop.f32.mrb[0].mxu0
      %v3597 = vadd.f32 %v579, %v3596
      %v3598 = vpop.f32.mrb[0].mxu0
      %3599 = vmatprep.mubr.f32.mxu0 0.0
      %3600 = vmatmul.mubr.f32.gmra.mrb[0].mxu0 %v3518
      %v3601 = vpop.f32.mrb[0].mxu0
      %v3602 = vadd.f32 %v584, %v3601
      %v3603 = vpop.f32.mrb[0].mxu0
      %3604 = vdwg.mxu0
      %v3605 = vmax.f32 %v3587, 0.0
      %v3606 = vmax.f32 %v3592, 0.0
      %v3607 = vmax.f32 %v3597, 0.0
      %v3608 = vmax.f32 %v3602, 0.0
      %v3610 = vsel %vm705, %v3605, 0
      %v3613 = vsel %vm705, %v3606, 0
      %v3616 = vsel %vm705, %v3607, 0
      %v3619 = vsel %vm705, %v3608, 0
      %3621 = vmatprep.subr.mxu0 0.0
      %3622 = vmatpush1.msra.mxu0 %v458
      %3623 = vmatprep.subr.mxu0 0.0
      %3624 = vmatpush1.msra.mxu0 %v459
      %3625 = vmatprep.subr.mxu0 0.0
      %3626 = vmatpush1.msra.mxu0 %v460
      %3627 = vmatprep.subr.mxu0 0.0
      %3628 = vmatpush1.msra.mxu0 %v461
      %3629 = vmatprep.subr.mxu0 0.0
      %3630 = vmatpush1.msra.mxu0 0.0
      %3631 = vmatprep.subr.mxu0 0.0
      %3632 = vmatpush1.msra.mxu0 0.0
      %3633 = vmatprep.subr.mxu0 0.0
      %3634 = vmatpush1.msra.mxu0 0.0
      %3635 = vmatprep.subr.mxu0 0.0
      %3636 = vmatpush1.msra.mxu0 0.0
      %3637 = vmatprep.subr.mxu0 0.0
      %3638 = vmatpush1.msra.mxu0 0.0
      %3639 = vmatprep.subr.mxu0 0.0
      %3640 = vmatpush1.msra.mxu0 0.0
      %3641 = vmatprep.subr.mxu0 0.0
      %3642 = vmatpush1.msra.mxu0 0.0
      %3643 = vmatprep.subr.mxu0 0.0
      %3644 = vmatpush1.msra.mxu0 0.0
      %3645 = vmatprep.subr.mxu0 0.0
      %3646 = vmatpush1.msra.mxu0 0.0
      %3647 = vmatprep.subr.mxu0 0.0
      %3648 = vmatpush1.msra.mxu0 0.0
      %3649 = vmatprep.subr.mxu0 0.0
      %3650 = vmatpush1.msra.mxu0 0.0
      %3651 = vmatprep.subr.mxu0 0.0
      %3652 = vmatpush1.msra.mxu0 0.0
      %3653 = vmatprep.subr.mxu0 0.0
      %3654 = vmatpush1.msra.mxu0 0.0
      %3655 = vmatprep.subr.mxu0 0.0
      %3656 = vmatpush1.msra.mxu0 0.0
      %3657 = vmatprep.subr.mxu0 0.0
      %3658 = vmatpush1.msra.mxu0 0.0
      %3659 = vmatprep.subr.mxu0 0.0
      %3660 = vmatpush1.msra.mxu0 0.0
      %3661 = vmatprep.subr.mxu0 0.0
      %3662 = vmatpush1.msra.mxu0 0.0
      %3663 = vmatprep.subr.mxu0 0.0
      %3664 = vmatpush1.msra.mxu0 0.0
      %3665 = vmatprep.subr.mxu0 0.0
      %3666 = vmatpush1.msra.mxu0 0.0
      %3667 = vmatprep.subr.mxu0 0.0
      %3668 = vmatpush1.msra.mxu0 0.0
      %3669 = vmatprep.subr.mxu0 0.0
      %3670 = vmatpush1.msra.mxu0 0.0
      %3671 = vmatprep.subr.mxu0 0.0
      %3672 = vmatpush1.msra.mxu0 0.0
      %3673 = vmatprep.subr.mxu0 0.0
      %3674 = vmatpush1.msra.mxu0 0.0
      %3675 = vmatprep.subr.mxu0 0.0
      %3676 = vmatpush1.msra.mxu0 0.0
      %3677 = vmatprep.subr.mxu0 0.0
      %3678 = vmatpush1.msra.mxu0 0.0
      %3679 = vmatprep.subr.mxu0 0.0
      %3680 = vmatpush1.msra.mxu0 0.0
      %3681 = vmatprep.subr.mxu0 0.0
      %3682 = vmatpush1.msra.mxu0 0.0
      %3683 = vmatprep.subr.mxu0 0.0
      %3684 = vmatpush1.msra.mxu0 0.0
      %3685 = vmatprep.mubr.f32.mxu0 0.0
      %3686 = vmatmul.mubr.f32.gmra.mrb[0].mxu0 %v3610
      %v3687 = vpop.f32.mrb[0].mxu0
      %v3688 = vadd.f32 %v703, %v3687
      %v3689 = vpop.f32.mrb[0].mxu0
      %3690 = vmatprep.mubr.f32.mxu0 0.0
      %3691 = vmatmul.mubr.f32.gmra.mrb[0].mxu0 %v3613
      %v3692 = vpop.f32.mrb[0].mxu0
      %v3693 = vadd.f32 %v703, %v3692
      %v3694 = vpop.f32.mrb[0].mxu0
      %3695 = vmatprep.mubr.f32.mxu0 0.0
      %3696 = vmatmul.mubr.f32.gmra.mrb[0].mxu0 %v3616
      %v3697 = vpop.f32.mrb[0].mxu0
      %v3698 = vadd.f32 %v703, %v3697
      %v3699 = vpop.f32.mrb[0].mxu0
      %3700 = vmatprep.mubr.f32.mxu0 0.0
      %3701 = vmatmul.mubr.f32.gmra.mrb[0].mxu0 %v3619
      %v3702 = vpop.f32.mrb[0].mxu0
      %v3703 = vadd.f32 %v703, %v3702
      %v3704 = vpop.f32.mrb[0].mxu0
      %3705 = vdwg.mxu0
      %v3706 = vmax.f32 %v3688, 0.0
      %v3707 = vmax.f32 %v3693, 0.0
      %v3708 = vmax.f32 %v3698, 0.0
      %v3709 = vmax.f32 %v3703, 0.0
      %v3711 = vsel %vm705, %v3706, 0
      %v3714 = vsel %vm705, %v3707, 0
      %v3717 = vsel %vm705, %v3708, 0
      %v3720 = vsel %vm705, %v3709, 0
      %3722 = vmatprep.subr.mxu0 0.0
      %3723 = vmatpush1.msra.mxu0 %v463
      %3724 = vmatprep.subr.mxu0 0.0
      %3725 = vmatpush1.msra.mxu0 %v464
      %3726 = vmatprep.subr.mxu0 0.0
      %3727 = vmatpush1.msra.mxu0 %v465
      %3728 = vmatprep.subr.mxu0 0.0
      %3729 = vmatpush1.msra.mxu0 %v466
      %3730 = vmatprep.subr.mxu0 0.0
      %3731 = vmatpush1.msra.mxu0 0.0
      %3732 = vmatprep.subr.mxu0 0.0
      %3733 = vmatpush1.msra.mxu0 0.0
      %3734 = vmatprep.subr.mxu0 0.0
      %3735 = vmatpush1.msra.mxu0 0.0
      %3736 = vmatprep.subr.mxu0 0.0
      %3737 = vmatpush1.msra.mxu0 0.0
      %3738 = vmatprep.subr.mxu0 0.0
      %3739 = vmatpush1.msra.mxu0 0.0
      %3740 = vmatprep.subr.mxu0 0.0
      %3741 = vmatpush1.msra.mxu0 0.0
      %3742 = vmatprep.subr.mxu0 0.0
      %3743 = vmatpush1.msra.mxu0 0.0
      %3744 = vmatprep.subr.mxu0 0.0
      %3745 = vmatpush1.msra.mxu0 0.0
      %3746 = vmatprep.subr.mxu0 0.0
      %3747 = vmatpush1.msra.mxu0 0.0
      %3748 = vmatprep.subr.mxu0 0.0
      %3749 = vmatpush1.msra.mxu0 0.0
      %3750 = vmatprep.subr.mxu0 0.0
      %3751 = vmatpush1.msra.mxu0 0.0
      %3752 = vmatprep.subr.mxu0 0.0
      %3753 = vmatpush1.msra.mxu0 0.0
      %3754 = vmatprep.subr.mxu0 0.0
      %3755 = vmatpush1.msra.mxu0 0.0
      %3756 = vmatprep.subr.mxu0 0.0
      %3757 = vmatpush1.msra.mxu0 0.0
      %3758 = vmatprep.subr.mxu0 0.0
      %3759 = vmatpush1.msra.mxu0 0.0
      %3760 = vmatprep.subr.mxu0 0.0
      %3761 = vmatpush1.msra.mxu0 0.0
      %3762 = vmatprep.subr.mxu0 0.0
      %3763 = vmatpush1.msra.mxu0 0.0
      %3764 = vmatprep.subr.mxu0 0.0
      %3765 = vmatpush1.msra.mxu0 0.0
      %3766 = vmatprep.subr.mxu0 0.0
      %3767 = vmatpush1.msra.mxu0 0.0
      %3768 = vmatprep.subr.mxu0 0.0
      %3769 = vmatpush1.msra.mxu0 0.0
      %3770 = vmatprep.subr.mxu0 0.0
      %3771 = vmatpush1.msra.mxu0 0.0
      %3772 = vmatprep.subr.mxu0 0.0
      %3773 = vmatpush1.msra.mxu0 0.0
      %3774 = vmatprep.subr.mxu0 0.0
      %3775 = vmatpush1.msra.mxu0 0.0
      %3776 = vmatprep.subr.mxu0 0.0
      %3777 = vmatpush1.msra.mxu0 0.0
      %3778 = vmatprep.subr.mxu0 0.0
      %3779 = vmatpush1.msra.mxu0 0.0
      %3780 = vmatprep.subr.mxu0 0.0
      %3781 = vmatpush1.msra.mxu0 0.0
      %3782 = vmatprep.subr.mxu0 0.0
      %3783 = vmatpush1.msra.mxu0 0.0
      %3784 = vmatprep.subr.mxu0 0.0
      %3785 = vmatpush1.msra.mxu0 0.0
      %3786 = vmatprep.mubr.f32.mxu0 0.0
      %3787 = vmatmul.mubr.f32.gmra.mrb[0].mxu0 %v3711
      %v3788 = vpop.f32.mrb[0].mxu0
      %v3789 = vadd.f32 %v811, %v3788
      %v3790 = vpop.f32.mrb[0].mxu0
      %3791 = vmatprep.mubr.f32.mxu0 0.0
      %3792 = vmatmul.mubr.f32.gmra.mrb[0].mxu0 %v3714
      %v3793 = vpop.f32.mrb[0].mxu0
      %v3794 = vadd.f32 %v811, %v3793
      %v3795 = vpop.f32.mrb[0].mxu0
      %3796 = vmatprep.mubr.f32.mxu0 0.0
      %3797 = vmatmul.mubr.f32.gmra.mrb[0].mxu0 %v3717
      %v3798 = vpop.f32.mrb[0].mxu0
      %v3799 = vadd.f32 %v811, %v3798
      %v3800 = vpop.f32.mrb[0].mxu0
      %3801 = vmatprep.mubr.f32.mxu0 0.0
      %3802 = vmatmul.mubr.f32.gmra.mrb[0].mxu0 %v3720
      %v3803 = vpop.f32.mrb[0].mxu0
      %v3804 = vadd.f32 %v811, %v3803
      %v3805 = vpop.f32.mrb[0].mxu0
      %3806 = vdwg.mxu0
      %3807 = vmatprep.subr.mxu0 0.0
      %3808 = vmatpush1.msra.mxu0 %v468
      %3809 = vmatprep.subr.mxu0 0.0
      %3810 = vmatpush1.msra.mxu0 %v469
      %3811 = vmatprep.subr.mxu0 0.0
      %3812 = vmatpush1.msra.mxu0 %v470
      %3813 = vmatprep.subr.mxu0 0.0
      %3814 = vmatpush1.msra.mxu0 %v471
      %3815 = vmatprep.subr.mxu0 0.0
      %3816 = vmatpush1.msra.mxu0 0.0
      %3817 = vmatprep.subr.mxu0 0.0
      %3818 = vmatpush1.msra.mxu0 0.0
      %3819 = vmatprep.subr.mxu0 0.0
      %3820 = vmatpush1.msra.mxu0 0.0
      %3821 = vmatprep.subr.mxu0 0.0
      %3822 = vmatpush1.msra.mxu0 0.0
      %3823 = vmatprep.subr.mxu0 0.0
      %3824 = vmatpush1.msra.mxu0 0.0
      %3825 = vmatprep.subr.mxu0 0.0
      %3826 = vmatpush1.msra.mxu0 0.0
      %3827 = vmatprep.subr.mxu0 0.0
      %3828 = vmatpush1.msra.mxu0 0.0
      %3829 = vmatprep.subr.mxu0 0.0
      %3830 = vmatpush1.msra.mxu0 0.0
      %3831 = vmatprep.subr.mxu0 0.0
      %3832 = vmatpush1.msra.mxu0 0.0
      %3833 = vmatprep.subr.mxu0 0.0
      %3834 = vmatpush1.msra.mxu0 0.0
      %3835 = vmatprep.subr.mxu0 0.0
      %3836 = vmatpush1.msra.mxu0 0.0
      %3837 = vmatprep.subr.mxu0 0.0
      %3838 = vmatpush1.msra.mxu0 0.0
      %3839 = vmatprep.subr.mxu0 0.0
      %3840 = vmatpush1.msra.mxu0 0.0
      %3841 = vmatprep.subr.mxu0 0.0
      %3842 = vmatpush1.msra.mxu0 0.0
      %3843 = vmatprep.subr.mxu0 0.0
      %3844 = vmatpush1.msra.mxu0 0.0
      %3845 = vmatprep.subr.mxu0 0.0
      %3846 = vmatpush1.msra.mxu0 0.0
      %3847 = vmatprep.subr.mxu0 0.0
      %3848 = vmatpush1.msra.mxu0 0.0
      %3849 = vmatprep.subr.mxu0 0.0
      %3850 = vmatpush1.msra.mxu0 0.0
      %3851 = vmatprep.subr.mxu0 0.0
      %3852 = vmatpush1.msra.mxu0 0.0
      %3853 = vmatprep.subr.mxu0 0.0
      %3854 = vmatpush1.msra.mxu0 0.0
      %3855 = vmatprep.subr.mxu0 0.0
      %3856 = vmatpush1.msra.mxu0 0.0
      %3857 = vmatprep.subr.mxu0 0.0
      %3858 = vmatpush1.msra.mxu0 0.0
      %3859 = vmatprep.subr.mxu0 0.0
      %3860 = vmatpush1.msra.mxu0 0.0
      %3861 = vmatprep.subr.mxu0 0.0
      %3862 = vmatpush1.msra.mxu0 0.0
      %3863 = vmatprep.subr.mxu0 0.0
      %3864 = vmatpush1.msra.mxu0 0.0
      %3865 = vmatprep.subr.mxu0 0.0
      %3866 = vmatpush1.msra.mxu0 0.0
      %3867 = vmatprep.subr.mxu0 0.0
      %3868 = vmatpush1.msra.mxu0 0.0
      %3869 = vmatprep.subr.mxu0 0.0
      %3870 = vmatpush1.msra.mxu0 0.0
      %3871 = vmatprep.mubr.f32.mxu0 0.0
      %3872 = vmatmul.mubr.f32.gmra.mrb[0].mxu0 %v3711
      %v3873 = vpop.f32.mrb[0].mxu0
      %v3874 = vadd.f32 %v914, %v3873
      %v3875 = vpop.f32.mrb[0].mxu0
      %3876 = vmatprep.mubr.f32.mxu0 0.0
      %3877 = vmatmul.mubr.f32.gmra.mrb[0].mxu0 %v3714
      %v3878 = vpop.f32.mrb[0].mxu0
      %v3879 = vadd.f32 %v914, %v3878
      %v3880 = vpop.f32.mrb[0].mxu0
      %3881 = vmatprep.mubr.f32.mxu0 0.0
      %3882 = vmatmul.mubr.f32.gmra.mrb[0].mxu0 %v3717
      %v3883 = vpop.f32.mrb[0].mxu0
      %v3884 = vadd.f32 %v914, %v3883
      %v3885 = vpop.f32.mrb[0].mxu0
      %3886 = vmatprep.mubr.f32.mxu0 0.0
      %3887 = vmatmul.mubr.f32.gmra.mrb[0].mxu0 %v3720
      %v3888 = vpop.f32.mrb[0].mxu0
      %v3889 = vadd.f32 %v914, %v3888
      %v3890 = vpop.f32.mrb[0].mxu0
      %3891 = vdwg.mxu0
      %vm3892 = vcmp.eq.s32.totalorder %v588, 7
      %v3893 = vmul.f32 %v3874, 1.442695
      %v3894 = vpow.pop %v3893
      %v3895 = vmul.f32 %v3879, 1.442695
      %v3896 = vpow.pop %v3895
      %v3897 = vmul.f32 %v3884, 1.442695
      %v3898 = vpow.pop %v3897
      %v3899 = vmul.f32 %v3889, 1.442695
      %v3900 = vpow.pop %v3899
      %v3901 = vmul.f32 %v453, %v3894
      %v3902 = vmul.f32 %v454, %v3896
      %v3903 = vmul.f32 %v455, %v3898
      %v3904 = vmul.f32 %v456, %v3900
      %v3905 = vadd.f32 %v3901, %v3789
      %v3906 = vadd.f32 %v3902, %v3794
      %v3907 = vadd.f32 %v3903, %v3799
      %v3908 = vadd.f32 %v3904, %v3804
      %v3909 = vsel %vm3892, %v3905, %v3504
      %v3910 = vsel %vm3892, %v3906, %v3505
      %v3911 = vsel %vm3892, %v3907, %v3506
      %v3912 = vsel %vm3892, %v3908, %v3507
      %3913 = vst.msk [vmem:[%s445] sm:$0xff] %vm589, %v3909
      %3914 = vst.msk [vmem:[%s445 + $0x8] sm:$0xff] %vm589, %v3910
      %3915 = vst.msk [vmem:[%s445 + $0x10] sm:$0xff] %vm589, %v3911
      %3916 = vst.msk [vmem:[%s445 + $0x18] sm:$0xff] %vm589, %v3912
      %v3917 = vsel %vm589, %v3874, 0.0
      %3918 = vadd.xlane.f32.xlu0 %v3917
      %v3919 = vpop.xlane.xlu0 %3918
      %v3920 = vsel %vm589, %v3879, 0.0
      %3921 = vadd.xlane.f32.xlu0 %v3920
      %v3922 = vpop.xlane.xlu0 %3921
      %v3923 = vsel %vm589, %v3884, 0.0
      %3924 = vadd.xlane.f32.xlu0 %v3923
      %v3925 = vpop.xlane.xlu0 %3924
      %v3926 = vsel %vm589, %v3889, 0.0
      %3927 = vadd.xlane.f32.xlu0 %v3926
      %v3928 = vpop.xlane.xlu0 %3927
      %vm3929 = vcmask 7168
      %3930 = vst.msk [vmem:[%s451] sm:$0xff] %vm3929, %v3919
      %3931 = vst.msk [vmem:[%s451 + $0x8] sm:$0xff] %vm3929, %v3922
      %3932 = vst.msk [vmem:[%s451 + $0x10] sm:$0xff] %vm3929, %v3925
      %3933 = vst.msk [vmem:[%s451 + $0x18] sm:$0xff] %vm3929, %v3928
      %s3934 = smul.u32 4, %s24
      %p3935 = scmp.lt.s32.totalorder %s3934, 7
      %s3936 = scalar_select %p3935, %s3934, 7
      %s3937 = smul.addr %s3936, 8
      %s3938 = scalar_lea.vmem %s11, %s3937
      %s3939 = smul.u32 4, %s24
      %p3940 = scmp.lt.s32.totalorder %s3939, 7
      %s3941 = scalar_select %p3940, %s3939, 7
      %s3942 = smul.addr %s3941, 8
      %s3943 = scalar_lea.vmem %s12, %s3942
      // Predicated region
      $region65: #{tpu_custom_call.1} parent=63 // pred_check
        %p3944 = pneg %p283
      $region66: #{tpu_custom_call.1} parent=63 // pred_check_branch
        %3946 = sbr.rel (%p3944) target = $region68
      $region67: #{tpu_custom_call.1} parent=63 // pred_region
        %s3947 = smul.u32 4, %s24
      $region68: #{tpu_custom_call.1} parent=63 // pred_fallthru
        _
      // Predicated region
      $region69: #{tpu_custom_call.1} parent=63 // pred_check
        %p3948 = pneg %p309
      $region70: #{tpu_custom_call.1} parent=63 // pred_check_branch
        %3950 = sbr.rel (%p3948) target = $region72
      $region71: #{tpu_custom_call.1} parent=63 // pred_region
        %s3951 = smul.u32 4, %s24
      $region72: #{tpu_custom_call.1} parent=63 // pred_fallthru
        _
    $region64: #{tpu_custom_call.1} parent=5 // pred_fallthru
      _
    %p3952 = scmp.le.s32.totalorder 2, %s19
    // Predicated region
    $region73: #{tpu_custom_call.1} parent=5 // pred_check
      %p3953 = pneg %p3952
    $region74: #{tpu_custom_call.1} parent=5 // pred_check_branch
      %3955 = sbr.rel (%p3953) target = $region76
    $region75: #{tpu_custom_call.1} parent=5 // pred_region
      %s3956 = ssub.s32 %s19, 2
      // Predicated region
      $region77: #{tpu_custom_call.1} parent=75 // pred_check
        %p3957 = pneg %p289
      $region78: #{tpu_custom_call.1} parent=75 // pred_check_branch
        %3959 = sbr.rel (%p3957) target = $region80
      $region79: #{tpu_custom_call.1} parent=75 // pred_region
        %s3960 = smul.u32 4, %s25
        %p3961 = scmp.lt.s32.totalorder %s3960, 7
        %s3962 = scalar_select %p3961, %s3960, 7
        %s3963 = smul.addr %s3962, 8
        %s3964 = scalar_lea.vmem %s11, %s3963
      $region80: #{tpu_custom_call.1} parent=75 // pred_fallthru
        _
      // Predicated region
      $region81: #{tpu_custom_call.1} parent=75 // pred_check
        %p3965 = pneg %p315
      $region82: #{tpu_custom_call.1} parent=75 // pred_check_branch
        %3967 = sbr.rel (%p3965) target = $region84
      $region83: #{tpu_custom_call.1} parent=75 // pred_region
        %s3968 = smul.u32 4, %s25
        %p3969 = scmp.lt.s32.totalorder %s3968, 7
        %s3970 = scalar_select %p3969, %s3968, 7
        %s3971 = smul.addr %s3970, 8
        %s3972 = scalar_lea.vmem %s12, %s3971
      $region84: #{tpu_custom_call.1} parent=75 // pred_fallthru
        _
    $region76: #{tpu_custom_call.1} parent=5 // pred_fallthru
      _
  $region6: #{tpu_custom_call.1} parent=0 // loop_footer
    %s23 = sadd.s32 1, %s19
  $region7: #{tpu_custom_call.1} parent=0 // loop_footer_branch
    %18 = sbr.rel target = $region3
  $region8: #{tpu_custom_call.1} parent=0 // loop_exit
    _

</llo_original>
